<compile_context>
chip_gen: v7x
topology: tpu7x:2x2x1
jax: 0.10.0
libtpu: 0.0.40
codegen_flags: <defaults>
</compile_context>

<pallas_src>
import jax
import jax.numpy as jnp
import numpy as np
from jax.experimental import pallas as pl
from jax.experimental.pallas import tpu as pltpu

# ----------------------------- configuration (small, module-consistent) ----------------------
NUM_TASKS = 1
NUM_LAYER = 3          # module requires >= 2
EMB_DIM = 128
ATOM_DIMS = [119, 4, 12, 12, 10, 6, 6, 2, 2]   # OGB AtomEncoder vocab sizes
BOND_DIMS = [5, 6, 2]                          # OGB BondEncoder vocab sizes
BN_EPS = 1e-5

LANE = 128
SUBLANE = 8
T_PAD = 128            # padded output/task lane width (lane-dense stores)


def _round_up(x, m):
    return (x + m - 1) // m * m


def _b16(x):
    return x.astype(jnp.bfloat16)


def _const_spec(shape):
    nd = len(shape)
    return pl.BlockSpec(tuple(shape), lambda l, nd=nd: (0,) * nd)


def _layer_spec(shape):
    # stacked (L, a, b) array -> stream one (1, a, b) slab per grid step (layer)
    return pl.BlockSpec((1,) + tuple(shape[1:]), lambda l: (l, 0, 0))


# ----------------------------- fused Pallas kernel --------------------------------------------
def fused_gnn_kernel(h0_ref, src_ref, dst_ref, bcol_ref, brow_ref, invc_ref, vn0_ref,
                     eemb_ref, eps_ref,
                     gw1_ref, gb1_ref, gw2_ref, gb2_ref,
                     vw1_ref, vb1_ref, vw2_ref, vb2_ref,
                     wp_ref, bp_ref, out_ref, h_scr, vn_scr):
    """One grid step == one GIN layer.  h / vn live in VMEM scratch across steps."""
    f32 = jnp.float32
    bf16 = jnp.bfloat16
    l = pl.program_id(0)
    last = NUM_LAYER - 1

    N_pad, D = h_scr.shape
    E_pad = src_ref.shape[0]
    G_pad = vn_scr.shape[0]

    @pl.when(l == 0)
    def _init():
        h_scr[...] = h0_ref[...]
        vn_scr[...] = vn0_ref[...]

    h = h_scr[...]                      # (N, D)  f32
    vn = vn_scr[...]                    # (G, D)  f32
    bcol = bcol_ref[...]                # (N, 1)  i32
    brow = brow_ref[...]                # (1, N)  i32
    src = src_ref[...]                  # (E, 1)  i32
    dst = dst_ref[...]                  # (1, E)  i32

    # 0/1 gather / scatter / pool matrices rebuilt on-chip from indices (exact in bf16).
    # Out-of-range padded indices (== N_pad / G_pad) give all-zero rows/cols.
    n_iota_en = jax.lax.broadcasted_iota(jnp.int32, (E_pad, N_pad), 1)
    src_oh = jnp.where(n_iota_en == src, 1.0, 0.0).astype(bf16)      # (E, N)
    n_iota_ne = jax.lax.broadcasted_iota(jnp.int32, (N_pad, E_pad), 0)
    dst_oht = jnp.where(n_iota_ne == dst, 1.0, 0.0).astype(bf16)     # (N, E)
    g_iota = jax.lax.broadcasted_iota(jnp.int32, (G_pad, N_pad), 0)
    pool_oht = jnp.where(g_iota == brow, 1.0, 0.0).astype(bf16)      # (G, N)

    # h_in = h + vn[batch]  (VPU select over the G_pad graphs; no tiny K=G MXU matmul)
    vn_b = jnp.zeros((N_pad, D), f32)
    for g in range(G_pad):
        vn_b = jnp.where(bcol == g, vn[g:g + 1, :], vn_b)
    h_in = h + vn_b
    h_in_b = h_in.astype(bf16)          # single cast, reused by gather + pool matmuls

    # GIN message: relu(h_in[src] + bond_emb); aggregation: scatter-add over dst (MXU).
    x_src = jnp.dot(src_oh, h_in_b, preferred_element_type=f32)       # (E, D)
    msg = jnp.maximum((x_src + eemb_ref[0]).astype(bf16), 0)          # relu exact in bf16
    agg = jnp.dot(dst_oht, msg, preferred_element_type=f32)           # (N, D)
    z = (1.0 + eps_ref[0]) * h_in + agg

    # GIN MLP (D -> 2D -> D) with eval-mode BN folded into the linears.
    t1 = jnp.dot(z.astype(bf16), gw1_ref[0], preferred_element_type=f32) + gb1_ref[0]
    t1 = jnp.maximum(t1, 0.0).astype(bf16)
    z2 = jnp.dot(t1, gw2_ref[0], preferred_element_type=f32) + gb2_ref[0]

    # Next layer reads relu(z2); the last layer's pooling uses z2 without relu (nothing reads
    # h_scr after the last step, so unconditionally storing the relu'd value is harmless).
    h_scr[...] = jnp.maximum(z2, 0.0)

    @pl.when(l != last)
    def _vn_update():
        pooled = jnp.dot(pool_oht, h_in_b, preferred_element_type=f32) + vn     # (G, D)
        u = jnp.dot(pooled.astype(bf16), vw1_ref[0], preferred_element_type=f32) + vb1_ref[0]
        u = jnp.maximum(u, 0.0).astype(bf16)
        u = jnp.dot(u, vw2_ref[0], preferred_element_type=f32) + vb2_ref[0]
        vn_scr[...] = jnp.maximum(u, 0.0)

    @pl.when(l == last)
    def _head():
        hb = z2.astype(bf16)                                          # final h: no relu
        pooled = jnp.dot(pool_oht, hb, preferred_element_type=f32) * invc_ref[...]
        out_ref[...] = (jnp.dot(pooled.astype(bf16), wp_ref[...],
                                preferred_element_type=f32) + bp_ref[...])


# ----------------------------- parameter init (deterministic, raw torch-style) ----------------
def init_params(key):
    keys = iter(jax.random.split(key, 512))
    nxt = lambda: next(keys)

    def dense(fin, fout):
        return jax.random.normal(nxt(), (fin, fout), jnp.float32) / np.sqrt(fin)

    def vec(n, scale=0.1):
        return scale * jax.random.normal(nxt(), (1, n), jnp.float32)

    def bn(n):
        return {'gamma': 1.0 + 0.1 * jax.random.normal(nxt(), (1, n), jnp.float32),
                'beta': 0.1 * jax.random.normal(nxt(), (1, n), jnp.float32),
                'mean': 0.05 * jax.random.normal(nxt(), (1, n), jnp.float32),
                'var': 1.0 + 0.1 * jnp.abs(jax.random.normal(nxt(), (1, n), jnp.float32))}

    p = {}
    p['atom_emb'] = [0.1 * jax.random.normal(nxt(), (v, EMB_DIM), jnp.float32) for v in ATOM_DIMS]

    gin = []
    for _ in range(NUM_LAYER):
        lp = {'bond_emb': [0.1 * jax.random.normal(nxt(), (v, EMB_DIM), jnp.float32)
                           for v in BOND_DIMS],
              'eps': 0.0,
              'w1': dense(EMB_DIM, 2 * EMB_DIM), 'b1': vec(2 * EMB_DIM), 'bn1': bn(2 * EMB_DIM),
              'w2': dense(2 * EMB_DIM, EMB_DIM), 'b2': vec(EMB_DIM), 'bn_layer': bn(EMB_DIM)}
        gin.append(lp)
    p['gin'] = gin

    vns = []
    for _ in range(NUM_LAYER - 1):
        vp = {'w1': dense(EMB_DIM, 2 * EMB_DIM), 'b1': vec(2 * EMB_DIM), 'bn1': bn(2 * EMB_DIM),
              'w2': dense(2 * EMB_DIM, EMB_DIM), 'b2': vec(EMB_DIM), 'bn2': bn(EMB_DIM)}
        vns.append(vp)
    p['vn_mlp'] = vns

    p['vn_emb'] = jnp.zeros((1, EMB_DIM), jnp.float32)   # OGB inits virtualnode embedding to 0
    p['wp'] = dense(EMB_DIM, NUM_TASKS)
    p['bp'] = vec(NUM_TASKS)
    return p


def _bn_apply(z, bn):
    return (z - bn['mean']) / jnp.sqrt(bn['var'] + BN_EPS) * bn['gamma'] + bn['beta']


def _bn_fold(w, b, bn):
    """Fold eval-mode BN into the preceding Linear: BN(x@W+b) == x@W' + b'."""
    s = bn['gamma'] / jnp.sqrt(bn['var'] + BN_EPS)
    t = bn['beta'] - bn['mean'] * s
    return w * s, b * s + t


def prepare_kernel_params(params):
    """Fold BN, stack per-layer weights on a leading layer axis, cast MXU operands to bf16."""
    gw1, gb1, gw2, gb2, eps = [], [], [], [], []
    for lp in params['gin']:
        w1, b1 = _bn_fold(lp['w1'], lp['b1'], lp['bn1'])
        w2, b2 = _bn_fold(lp['w2'], lp['b2'], lp['bn_layer'])
        gw1.append(w1); gb1.append(b1); gw2.append(w2); gb2.append(b2)
        eps.append(jnp.full((1, EMB_DIM), lp['eps'], jnp.float32))

    vw1, vb1, vw2, vb2 = [], [], [], []
    for vp in params['vn_mlp']:
        w1, b1 = _bn_fold(vp['w1'], vp['b1'], vp['bn1'])
        w2, b2 = _bn_fold(vp['w2'], vp['b2'], vp['bn2'])
        vw1.append(w1); vb1.append(b1); vw2.append(w2); vb2.append(b2)
    # pad virtual-node MLP stacks to NUM_LAYER entries (last entry unused, guarded by pl.when)
    vw1.append(jnp.zeros((EMB_DIM, 2 * EMB_DIM), jnp.float32))
    vb1.append(jnp.zeros((1, 2 * EMB_DIM), jnp.float32))
    vw2.append(jnp.zeros((2 * EMB_DIM, EMB_DIM), jnp.float32))
    vb2.append(jnp.zeros((1, EMB_DIM), jnp.float32))

    wp = jnp.zeros((EMB_DIM, T_PAD), jnp.float32).at[:, :NUM_TASKS].set(params['wp'])
    bp = jnp.zeros((1, T_PAD), jnp.float32).at[:, :NUM_TASKS].set(params['bp'])

    return {'eps': jnp.stack(eps),                                   # (L, 1, D)   f32
            'gw1': _b16(jnp.stack(gw1)), 'gb1': jnp.stack(gb1),      # (L, D, 2D)  bf16 / f32
            'gw2': _b16(jnp.stack(gw2)), 'gb2': jnp.stack(gb2),      # (L, 2D, D)  bf16 / f32
            'vw1': _b16(jnp.stack(vw1)), 'vb1': jnp.stack(vb1),
            'vw2': _b16(jnp.stack(vw2)), 'vb2': jnp.stack(vb2),
            'wp': _b16(wp), 'bp': bp}


# ----------------------------- forward pass (single fused Pallas call) -------------------------
def gnn_forward(params, x_feat, edge_index, edge_attr, batch, num_graphs):
    N = x_feat.shape[0]
    E = edge_index.shape[1]
    G = num_graphs
    N_pad = _round_up(max(N, SUBLANE), LANE)
    E_pad = _round_up(max(E, SUBLANE), LANE)
    G_pad = _round_up(max(G, 1), SUBLANE)

    kp = prepare_kernel_params(params)

    # AtomEncoder: sum of per-feature embedding lookups (glue gather), zero-padded.
    h0 = sum(tab[x_feat[:, i]] for i, tab in enumerate(params['atom_emb']))
    h0 = jnp.zeros((N_pad, EMB_DIM), jnp.float32).at[:N].set(h0)

    # BondEncoder per GIN layer, stacked on the layer axis, stored bf16 (streamed per layer).
    eemb = jnp.stack([
        jnp.zeros((E_pad, EMB_DIM), jnp.float32).at[:E].set(
            sum(tab[edge_attr[:, i]] for i, tab in enumerate(lp['bond_emb'])))
        for lp in params['gin']]).astype(jnp.bfloat16)                 # (L, E_pad, D)

    # Padded index vectors (out-of-range sentinel -> all-zero one-hot row/col inside the kernel).
    src = jnp.full((E_pad, 1), N_pad, jnp.int32).at[:E, 0].set(edge_index[0])
    dst = jnp.full((1, E_pad), N_pad, jnp.int32).at[0, :E].set(edge_index[1])
    bcol = jnp.full((N_pad, 1), G_pad, jnp.int32).at[:N, 0].set(batch)
    brow = jnp.full((1, N_pad), G_pad, jnp.int32).at[0, :N].set(batch)

    counts = jax.ops.segment_sum(jnp.ones((N,), jnp.float32), batch,
                                 num_segments=G_pad)[:, None]          # (G_pad, 1)
    invc = 1.0 / jnp.maximum(counts, 1.0)

    vn0 = jnp.broadcast_to(params['vn_emb'], (G_pad, EMB_DIM)).astype(jnp.float32)

    const_ins = (h0, src, dst, bcol, brow, invc, vn0)
    layer_ins = (eemb, kp['eps'], kp['gw1'], kp['gb1'], kp['gw2'], kp['gb2'],
                 kp['vw1'], kp['vb1'], kp['vw2'], kp['vb2'])
    tail_ins = (kp['wp'], kp['bp'])
    args = const_ins + layer_ins + tail_ins

    in_specs = ([_const_spec(a.shape) for a in const_ins]
                + [_layer_spec(a.shape) for a in layer_ins]
                + [_const_spec(a.shape) for a in tail_ins])

    out_shape = (G_pad, T_PAD)

    grid_spec = pltpu.PrefetchScalarGridSpec(
        num_scalar_prefetch=0,
        grid=(NUM_LAYER,),
        in_specs=in_specs,
        out_specs=pl.BlockSpec(out_shape, lambda l: (0, 0)),
        scratch_shapes=[pltpu.VMEM((N_pad, EMB_DIM), jnp.float32),     # h carried across layers
                        pltpu.VMEM((G_pad, EMB_DIM), jnp.float32)])    # vn carried across layers

    # Advisory cost estimate (MXU flops + HBM bytes) so XLA schedules around the call sensibly.
    D = EMB_DIM
    flops_layer = (4 * E_pad * N_pad * D           # gather + scatter matmuls
                   + 8 * N_pad * D * D             # node MLP D -> 2D -> D
                   + 2 * G_pad * N_pad * D         # global pool
                   + 8 * G_pad * D * D)            # virtual-node MLP
    flops = NUM_LAYER * flops_layer + 2 * G_pad * D * T_PAD
    bytes_accessed = sum(int(np.prod(a.shape)) * a.dtype.itemsize for a in args)
    bytes_accessed += int(np.prod(out_shape)) * 4
    ce = pl.CostEstimate(flops=int(flops), transcendentals=0, bytes_accessed=int(bytes_accessed))

    out = pl.pallas_call(
        fused_gnn_kernel,
        grid_spec=grid_spec,
        out_shape=jax.ShapeDtypeStruct(out_shape, jnp.float32),
        compiler_params=pltpu.CompilerParams(
            dimension_semantics=("arbitrary",),          # layer axis is sequential (scratch carry)
            vmem_limit_bytes=48 * 1024 * 1024),          # v7x-safe headroom (64 MiB total there)
        cost_estimate=ce,
    )(*args)
    return out[:G, :NUM_TASKS]


# ----------------------------- pure-JAX reference for verification -----------------------------
def gnn_forward_reference(params, x_feat, edge_index, edge_attr, batch, num_graphs):
    hp = jax.lax.Precision.HIGHEST
    N = x_feat.shape[0]
    G = num_graphs
    src, dst = edge_index[0], edge_index[1]

    h = sum(tab[x_feat[:, i]] for i, tab in enumerate(params['atom_emb']))
    vn = jnp.broadcast_to(params['vn_emb'][0], (G, EMB_DIM))

    for layer in range(NUM_LAYER):
        lp = params['gin'][layer]
        h_in = h + vn[batch]
        eemb = sum(tab[edge_attr[:, i]] for i, tab in enumerate(lp['bond_emb']))
        msg = jax.nn.relu(h_in[src] + eemb)
        agg = jax.ops.segment_sum(msg, dst, num_segments=N)
        z = (1.0 + lp['eps']) * h_in + agg
        z = jnp.dot(z, lp['w1'], precision=hp) + lp['b1']
        z = jax.nn.relu(_bn_apply(z, lp['bn1']))
        z = jnp.dot(z, lp['w2'], precision=hp) + lp['b2']
        z = _bn_apply(z, lp['bn_layer'])
        if layer != NUM_LAYER - 1:
            z = jax.nn.relu(z)
        if layer < NUM_LAYER - 1:
            vp = params['vn_mlp'][layer]
            pooled = jax.ops.segment_sum(h_in, batch, num_segments=G) + vn
            t = jnp.dot(pooled, vp['w1'], precision=hp) + vp['b1']
            t = jax.nn.relu(_bn_apply(t, vp['bn1']))
            t = jnp.dot(t, vp['w2'], precision=hp) + vp['b2']
            t = jax.nn.relu(_bn_apply(t, vp['bn2']))
            vn = t
        h = z

    counts = jax.ops.segment_sum(jnp.ones((N,), jnp.float32), batch, num_segments=G)[:, None]
    h_graph = jax.ops.segment_sum(h, batch, num_segments=G) / jnp.maximum(counts, 1.0)
    return jnp.dot(h_graph, params['wp'], precision=hp) + params['bp']


# ----------------------------- main -------------------------------------------------------------
if __name__ == "__main__":
    key = jax.random.PRNGKey(0)
    kp_, kd = jax.random.split(key)
    params = init_params(kp_)

    # Synthetic batched graph: 2 graphs x 16 nodes, 32 intra-graph edges each.
    G, nodes_per, e_per = 2, 16, 32
    N, E = G * nodes_per, G * e_per

    dkeys = jax.random.split(kd, 4)
    akeys = jax.random.split(dkeys[0], len(ATOM_DIMS))
    x_feat = jnp.stack(
        [jax.random.randint(akeys[i], (N,), 0, v) for i, v in enumerate(ATOM_DIMS)], axis=1)
    bkeys = jax.random.split(dkeys[1], len(BOND_DIMS))
    edge_attr = jnp.stack(
        [jax.random.randint(bkeys[i], (E,), 0, v) for i, v in enumerate(BOND_DIMS)], axis=1)

    ekeys = jax.random.split(dkeys[2], 2 * G)
    src_parts, dst_parts = [], []
    for g in range(G):
        lo, hi = g * nodes_per, (g + 1) * nodes_per
        src_parts.append(jax.random.randint(ekeys[2 * g], (e_per,), lo, hi))
        dst_parts.append(jax.random.randint(ekeys[2 * g + 1], (e_per,), lo, hi))
    edge_index = jnp.stack([jnp.concatenate(src_parts), jnp.concatenate(dst_parts)], axis=0)
    batch = jnp.repeat(jnp.arange(G, dtype=jnp.int32), nodes_per)

    out = gnn_forward(params, x_feat, edge_index, edge_attr, batch, G)
    out = jax.block_until_ready(out)

    ref = jax.block_until_ready(
        gnn_forward_reference(params, x_feat, edge_index, edge_attr, batch, G))

    assert out.shape == (G, NUM_TASKS), out.shape
    # Kernel uses bf16 MXU operands / bf16 bond embeddings (f32 accumulation) vs the f32
    # HIGHEST-precision reference; structural errors would be orders of magnitude larger.
    np.testing.assert_allclose(np.asarray(out), np.asarray(ref), rtol=5e-2, atol=5e-2)
    print("KERNEL_OK")
</pallas_src>

<mosaic_0001>
module attributes {stable_mosaic.version = 11 : i64} {
  func.func @fused_gnn_kernel(%arg0: i32, %arg1: memref<128x128xf32, #tpu.memory_space<vmem>>, %arg2: memref<128x1xi32, #tpu.memory_space<vmem>>, %arg3: memref<1x128xi32, #tpu.memory_space<vmem>>, %arg4: memref<128x1xi32, #tpu.memory_space<vmem>>, %arg5: memref<1x128xi32, #tpu.memory_space<vmem>>, %arg6: memref<8x1xf32, #tpu.memory_space<vmem>>, %arg7: memref<8x128xf32, #tpu.memory_space<vmem>>, %arg8: memref<1x128x128xbf16, #tpu.memory_space<vmem>>, %arg9: memref<1x1x128xf32, #tpu.memory_space<vmem>>, %arg10: memref<1x128x256xbf16, #tpu.memory_space<vmem>>, %arg11: memref<1x1x256xf32, #tpu.memory_space<vmem>>, %arg12: memref<1x256x128xbf16, #tpu.memory_space<vmem>>, %arg13: memref<1x1x128xf32, #tpu.memory_space<vmem>>, %arg14: memref<1x128x256xbf16, #tpu.memory_space<vmem>>, %arg15: memref<1x1x256xf32, #tpu.memory_space<vmem>>, %arg16: memref<1x256x128xbf16, #tpu.memory_space<vmem>>, %arg17: memref<1x1x128xf32, #tpu.memory_space<vmem>>, %arg18: memref<128x128xbf16, #tpu.memory_space<vmem>>, %arg19: memref<1x128xf32, #tpu.memory_space<vmem>>, %arg20: memref<8x128xf32, #tpu.memory_space<vmem>>, %arg21: memref<128x128xf32, #tpu.memory_space<vmem>>, %arg22: memref<8x128xf32, #tpu.memory_space<vmem>>) attributes {dimension_semantics = [#tpu.dimension_semantics<arbitrary>], iteration_bounds = array<i64: 3>, scalar_prefetch = 0 : i64, scratch_operands = 2 : i64, tpu.core_type = #tpu.core_type<tc>, window_params = [{pipeline_mode = #tpu.pipeline_mode<synchronous>, transform_indices = @transform_0, window_bounds = array<i64: 128, 128>}, {pipeline_mode = #tpu.pipeline_mode<synchronous>, transform_indices = @transform_1, window_bounds = array<i64: 128, 1>}, {pipeline_mode = #tpu.pipeline_mode<synchronous>, transform_indices = @transform_2, window_bounds = array<i64: 1, 128>}, {pipeline_mode = #tpu.pipeline_mode<synchronous>, transform_indices = @transform_3, window_bounds = array<i64: 128, 1>}, {pipeline_mode = #tpu.pipeline_mode<synchronous>, transform_indices = @transform_4, window_bounds = array<i64: 1, 128>}, {pipeline_mode = #tpu.pipeline_mode<synchronous>, transform_indices = @transform_5, window_bounds = array<i64: 8, 1>}, {pipeline_mode = #tpu.pipeline_mode<synchronous>, transform_indices = @transform_6, window_bounds = array<i64: 8, 128>}, {transform_indices = @transform_7, window_bounds = array<i64: 1, 128, 128>}, {transform_indices = @transform_8, window_bounds = array<i64: 1, 1, 128>}, {transform_indices = @transform_9, window_bounds = array<i64: 1, 128, 256>}, {transform_indices = @transform_10, window_bounds = array<i64: 1, 1, 256>}, {transform_indices = @transform_11, window_bounds = array<i64: 1, 256, 128>}, {transform_indices = @transform_12, window_bounds = array<i64: 1, 1, 128>}, {transform_indices = @transform_13, window_bounds = array<i64: 1, 128, 256>}, {transform_indices = @transform_14, window_bounds = array<i64: 1, 1, 256>}, {transform_indices = @transform_15, window_bounds = array<i64: 1, 256, 128>}, {transform_indices = @transform_16, window_bounds = array<i64: 1, 1, 128>}, {pipeline_mode = #tpu.pipeline_mode<synchronous>, transform_indices = @transform_17, window_bounds = array<i64: 128, 128>}, {pipeline_mode = #tpu.pipeline_mode<synchronous>, transform_indices = @transform_18, window_bounds = array<i64: 1, 128>}, {pipeline_mode = #tpu.pipeline_mode<synchronous>, transform_indices = @transform_19, window_bounds = array<i64: 8, 128>}]} {
    %c0_i32 = arith.constant 0 : i32
    %0 = arith.cmpi eq, %arg0, %c0_i32 : i32
    %1 = arith.extui %0 : i1 to i32
    %c0_i32_0 = arith.constant 0 : i32
    %2 = arith.cmpi ne, %1, %c0_i32_0 : i32
    scf.if %2 {
      %c0_51 = arith.constant 0 : index
      %c0_52 = arith.constant 0 : index
      %140 = vector.load %arg1[%c0_51, %c0_52] : memref<128x128xf32, #tpu.memory_space<vmem>>, vector<128x128xf32>
      %c0_53 = arith.constant 0 : index
      %c0_54 = arith.constant 0 : index
      %141 = vector.load %arg21[%c0_53, %c0_54] : memref<128x128xf32, #tpu.memory_space<vmem>>, vector<128x128xf32>
      tpu.vector_store %arg21[%c0_53, %c0_54], %140 {strides = array<i32>} : memref<128x128xf32, #tpu.memory_space<vmem>>, vector<128x128xf32>,
      %c0_55 = arith.constant 0 : index
      %c0_56 = arith.constant 0 : index
      %142 = vector.load %arg7[%c0_55, %c0_56] : memref<8x128xf32, #tpu.memory_space<vmem>>, vector<8x128xf32>
      %c0_57 = arith.constant 0 : index
      %c0_58 = arith.constant 0 : index
      %143 = vector.load %arg22[%c0_57, %c0_58] : memref<8x128xf32, #tpu.memory_space<vmem>>, vector<8x128xf32>
      tpu.vector_store %arg22[%c0_57, %c0_58], %142 {strides = array<i32>} : memref<8x128xf32, #tpu.memory_space<vmem>>, vector<8x128xf32>,
    } else {
    }
    %c0 = arith.constant 0 : index
    %c0_1 = arith.constant 0 : index
    %3 = vector.load %arg21[%c0, %c0_1] : memref<128x128xf32, #tpu.memory_space<vmem>>, vector<128x128xf32>
    %c0_2 = arith.constant 0 : index
    %c0_3 = arith.constant 0 : index
    %4 = vector.load %arg22[%c0_2, %c0_3] : memref<8x128xf32, #tpu.memory_space<vmem>>, vector<8x128xf32>
    %c0_4 = arith.constant 0 : index
    %c0_5 = arith.constant 0 : index
    %5 = vector.load %arg4[%c0_4, %c0_5] : memref<128x1xi32, #tpu.memory_space<vmem>>, vector<128x1xi32>
    %c0_6 = arith.constant 0 : index
    %c0_7 = arith.constant 0 : index
    %6 = vector.load %arg5[%c0_6, %c0_7] : memref<1x128xi32, #tpu.memory_space<vmem>>, vector<1x128xi32>
    %c0_8 = arith.constant 0 : index
    %c0_9 = arith.constant 0 : index
    %7 = vector.load %arg2[%c0_8, %c0_9] : memref<128x1xi32, #tpu.memory_space<vmem>>, vector<128x1xi32>
    %c0_10 = arith.constant 0 : index
    %c0_11 = arith.constant 0 : index
    %8 = vector.load %arg3[%c0_10, %c0_11] : memref<1x128xi32, #tpu.memory_space<vmem>>, vector<1x128xi32>
    %9 = tpu.iota {dimensions = array<i32: 1>} : vector<128x128xi32>
    %10 = vector.broadcast %7 : vector<128x1xi32> to vector<128x128xi32>
    %11 = arith.cmpi eq, %9, %10 : vector<128x128xi32>
    %cst = arith.constant 1.000000e+00 : f32
    %cst_12 = arith.constant 0.000000e+00 : f32
    %12 = vector.broadcast %cst : f32 to vector<128x128xf32>
    %13 = vector.broadcast %cst_12 : f32 to vector<128x128xf32>
    %14 = arith.select %11, %12, %13 : vector<128x128xi1>, vector<128x128xf32>
    %15 = arith.truncf %14 : vector<128x128xf32> to vector<128x128xbf16>
    %16 = tpu.iota {dimensions = array<i32: 0>} : vector<128x128xi32>
    %17 = vector.broadcast %8 : vector<1x128xi32> to vector<128x128xi32>
    %18 = arith.cmpi eq, %16, %17 : vector<128x128xi32>
    %cst_13 = arith.constant 1.000000e+00 : f32
    %cst_14 = arith.constant 0.000000e+00 : f32
    %19 = vector.broadcast %cst_13 : f32 to vector<128x128xf32>
    %20 = vector.broadcast %cst_14 : f32 to vector<128x128xf32>
    %21 = arith.select %18, %19, %20 : vector<128x128xi1>, vector<128x128xf32>
    %22 = arith.truncf %21 : vector<128x128xf32> to vector<128x128xbf16>
    %23 = tpu.iota {dimensions = array<i32: 0>} : vector<8x128xi32>
    %24 = vector.broadcast %6 : vector<1x128xi32> to vector<8x128xi32>
    %25 = arith.cmpi eq, %23, %24 : vector<8x128xi32>
    %cst_15 = arith.constant 1.000000e+00 : f32
    %cst_16 = arith.constant 0.000000e+00 : f32
    %26 = vector.broadcast %cst_15 : f32 to vector<8x128xf32>
    %27 = vector.broadcast %cst_16 : f32 to vector<8x128xf32>
    %28 = arith.select %25, %26, %27 : vector<8x128xi1>, vector<8x128xf32>
    %29 = arith.truncf %28 : vector<8x128xf32> to vector<8x128xbf16>
    %cst_17 = arith.constant 0.000000e+00 : f32
    %30 = vector.broadcast %cst_17 : f32 to vector<128x128xf32>
    %c0_i32_18 = arith.constant 0 : i32
    %31 = vector.broadcast %c0_i32_18 : i32 to vector<128x1xi32>
    %32 = arith.cmpi eq, %5, %31 : vector<128x1xi32>
    %33 = vector.extract_strided_slice %4 {offsets = [0, 0], sizes = [1, 128], strides = [1, 1]} : vector<8x128xf32> to vector<1x128xf32>
    %34 = vector.shape_cast %32 : vector<128x1xi1> to vector<128x1xi1>
    %35 = vector.broadcast %34 : vector<128x1xi1> to vector<128x128xi1>
    %36 = vector.shape_cast %33 : vector<1x128xf32> to vector<1x128xf32>
    %37 = vector.broadcast %36 : vector<1x128xf32> to vector<128x128xf32>
    %38 = arith.select %35, %37, %30 : vector<128x128xi1>, vector<128x128xf32>
    %c1_i32 = arith.constant 1 : i32
    %39 = vector.broadcast %c1_i32 : i32 to vector<128x1xi32>
    %40 = arith.cmpi eq, %5, %39 : vector<128x1xi32>
    %41 = vector.extract_strided_slice %4 {offsets = [1, 0], sizes = [1, 128], strides = [1, 1]} : vector<8x128xf32> to vector<1x128xf32>
    %42 = vector.shape_cast %40 : vector<128x1xi1> to vector<128x1xi1>
    %43 = vector.broadcast %42 : vector<128x1xi1> to vector<128x128xi1>
    %44 = vector.shape_cast %41 : vector<1x128xf32> to vector<1x128xf32>
    %45 = vector.broadcast %44 : vector<1x128xf32> to vector<128x128xf32>
    %46 = arith.select %43, %45, %38 : vector<128x128xi1>, vector<128x128xf32>
    %c2_i32 = arith.constant 2 : i32
    %47 = vector.broadcast %c2_i32 : i32 to vector<128x1xi32>
    %48 = arith.cmpi eq, %5, %47 : vector<128x1xi32>
    %49 = vector.extract_strided_slice %4 {offsets = [2, 0], sizes = [1, 128], strides = [1, 1]} : vector<8x128xf32> to vector<1x128xf32>
    %50 = vector.shape_cast %48 : vector<128x1xi1> to vector<128x1xi1>
    %51 = vector.broadcast %50 : vector<128x1xi1> to vector<128x128xi1>
    %52 = vector.shape_cast %49 : vector<1x128xf32> to vector<1x128xf32>
    %53 = vector.broadcast %52 : vector<1x128xf32> to vector<128x128xf32>
    %54 = arith.select %51, %53, %46 : vector<128x128xi1>, vector<128x128xf32>
    %c3_i32 = arith.constant 3 : i32
    %55 = vector.broadcast %c3_i32 : i32 to vector<128x1xi32>
    %56 = arith.cmpi eq, %5, %55 : vector<128x1xi32>
    %57 = vector.extract_strided_slice %4 {offsets = [3, 0], sizes = [1, 128], strides = [1, 1]} : vector<8x128xf32> to vector<1x128xf32>
    %58 = vector.shape_cast %56 : vector<128x1xi1> to vector<128x1xi1>
    %59 = vector.broadcast %58 : vector<128x1xi1> to vector<128x128xi1>
    %60 = vector.shape_cast %57 : vector<1x128xf32> to vector<1x128xf32>
    %61 = vector.broadcast %60 : vector<1x128xf32> to vector<128x128xf32>
    %62 = arith.select %59, %61, %54 : vector<128x128xi1>, vector<128x128xf32>
    %c4_i32 = arith.constant 4 : i32
    %63 = vector.broadcast %c4_i32 : i32 to vector<128x1xi32>
    %64 = arith.cmpi eq, %5, %63 : vector<128x1xi32>
    %65 = vector.extract_strided_slice %4 {offsets = [4, 0], sizes = [1, 128], strides = [1, 1]} : vector<8x128xf32> to vector<1x128xf32>
    %66 = vector.shape_cast %64 : vector<128x1xi1> to vector<128x1xi1>
    %67 = vector.broadcast %66 : vector<128x1xi1> to vector<128x128xi1>
    %68 = vector.shape_cast %65 : vector<1x128xf32> to vector<1x128xf32>
    %69 = vector.broadcast %68 : vector<1x128xf32> to vector<128x128xf32>
    %70 = arith.select %67, %69, %62 : vector<128x128xi1>, vector<128x128xf32>
    %c5_i32 = arith.constant 5 : i32
    %71 = vector.broadcast %c5_i32 : i32 to vector<128x1xi32>
    %72 = arith.cmpi eq, %5, %71 : vector<128x1xi32>
    %73 = vector.extract_strided_slice %4 {offsets = [5, 0], sizes = [1, 128], strides = [1, 1]} : vector<8x128xf32> to vector<1x128xf32>
    %74 = vector.shape_cast %72 : vector<128x1xi1> to vector<128x1xi1>
    %75 = vector.broadcast %74 : vector<128x1xi1> to vector<128x128xi1>
    %76 = vector.shape_cast %73 : vector<1x128xf32> to vector<1x128xf32>
    %77 = vector.broadcast %76 : vector<1x128xf32> to vector<128x128xf32>
    %78 = arith.select %75, %77, %70 : vector<128x128xi1>, vector<128x128xf32>
    %c6_i32 = arith.constant 6 : i32
    %79 = vector.broadcast %c6_i32 : i32 to vector<128x1xi32>
    %80 = arith.cmpi eq, %5, %79 : vector<128x1xi32>
    %81 = vector.extract_strided_slice %4 {offsets = [6, 0], sizes = [1, 128], strides = [1, 1]} : vector<8x128xf32> to vector<1x128xf32>
    %82 = vector.shape_cast %80 : vector<128x1xi1> to vector<128x1xi1>
    %83 = vector.broadcast %82 : vector<128x1xi1> to vector<128x128xi1>
    %84 = vector.shape_cast %81 : vector<1x128xf32> to vector<1x128xf32>
    %85 = vector.broadcast %84 : vector<1x128xf32> to vector<128x128xf32>
    %86 = arith.select %83, %85, %78 : vector<128x128xi1>, vector<128x128xf32>
    %c7_i32 = arith.constant 7 : i32
    %87 = vector.broadcast %c7_i32 : i32 to vector<128x1xi32>
    %88 = arith.cmpi eq, %5, %87 : vector<128x1xi32>
    %89 = vector.extract_strided_slice %4 {offsets = [7, 0], sizes = [1, 128], strides = [1, 1]} : vector<8x128xf32> to vector<1x128xf32>
    %90 = vector.shape_cast %88 : vector<128x1xi1> to vector<128x1xi1>
    %91 = vector.broadcast %90 : vector<128x1xi1> to vector<128x128xi1>
    %92 = vector.shape_cast %89 : vector<1x128xf32> to vector<1x128xf32>
    %93 = vector.broadcast %92 : vector<1x128xf32> to vector<128x128xf32>
    %94 = arith.select %91, %93, %86 : vector<128x128xi1>, vector<128x128xf32>
    %95 = arith.addf %3, %94 : vector<128x128xf32>
    %96 = arith.truncf %95 : vector<128x128xf32> to vector<128x128xbf16>
    %cst_19 = arith.constant dense<0.000000e+00> : vector<128x128xf32>
    %97 = tpu.matmul %15, %96, %cst_19 {dimension_numbers = #tpu.dot_dimension_numbers<[1], [0], [0], [1], [0, 0, 1, 1], [], []>} : vector<128x128xbf16>, vector<128x128xbf16>, vector<128x128xf32> -> vector<128x128xf32>
    %c0_20 = arith.constant 0 : index
    %c0_21 = arith.constant 0 : index
    %c0_22 = arith.constant 0 : index
    %98 = vector.load %arg8[%c0_20, %c0_21, %c0_22] : memref<1x128x128xbf16, #tpu.memory_space<vmem>>, vector<1x128x128xbf16>
    %99 = vector.shape_cast %98 : vector<1x128x128xbf16> to vector<128x128xbf16>
    %100 = arith.extf %99 : vector<128x128xbf16> to vector<128x128xf32>
    %101 = arith.addf %97, %100 : vector<128x128xf32>
    %102 = arith.truncf %101 : vector<128x128xf32> to vector<128x128xbf16>
    %cst_23 = arith.constant 0.000000e+00 : bf16
    %103 = vector.broadcast %cst_23 : bf16 to vector<128x128xbf16>
    %104 = arith.maximumf %102, %103 : vector<128x128xbf16>
    %cst_24 = arith.constant dense<0.000000e+00> : vector<128x128xf32>
    %105 = tpu.matmul %22, %104, %cst_24 {dimension_numbers = #tpu.dot_dimension_numbers<[1], [0], [0], [1], [0, 0, 1, 1], [], []>} : vector<128x128xbf16>, vector<128x128xbf16>, vector<128x128xf32> -> vector<128x128xf32>
    %c0_25 = arith.constant 0 : index
    %c0_26 = arith.constant 0 : index
    %c0_27 = arith.constant 0 : index
    %106 = vector.load %arg9[%c0_25, %c0_26, %c0_27] : memref<1x1x128xf32, #tpu.memory_space<vmem>>, vector<1x1x128xf32>
    %107 = vector.shape_cast %106 : vector<1x1x128xf32> to vector<1x128xf32>
    %cst_28 = arith.constant 1.000000e+00 : f32
    %108 = vector.broadcast %cst_28 : f32 to vector<1x128xf32>
    %109 = arith.addf %108, %107 : vector<1x128xf32>
    %110 = vector.broadcast %109 : vector<1x128xf32> to vector<128x128xf32>
    %111 = arith.mulf %110, %95 : vector<128x128xf32>
    %112 = arith.addf %111, %105 : vector<128x128xf32>
    %113 = arith.truncf %112 : vector<128x128xf32> to vector<128x128xbf16>
    %c0_29 = arith.constant 0 : index
    %c0_30 = arith.constant 0 : index
    %c0_31 = arith.constant 0 : index
    %114 = vector.load %arg10[%c0_29, %c0_30, %c0_31] : memref<1x128x256xbf16, #tpu.memory_space<vmem>>, vector<1x128x256xbf16>
    %115 = vector.shape_cast %114 : vector<1x128x256xbf16> to vector<128x256xbf16>
    %cst_32 = arith.constant dense<0.000000e+00> : vector<128x256xf32>
    %116 = tpu.matmul %113, %115, %cst_32 {dimension_numbers = #tpu.dot_dimension_numbers<[1], [0], [0], [1], [0, 0, 1, 1], [], []>} : vector<128x128xbf16>, vector<128x256xbf16>, vector<128x256xf32> -> vector<128x256xf32>
    %c0_33 = arith.constant 0 : index
    %c0_34 = arith.constant 0 : index
    %c0_35 = arith.constant 0 : index
    %117 = vector.load %arg11[%c0_33, %c0_34, %c0_35] : memref<1x1x256xf32, #tpu.memory_space<vmem>>, vector<1x1x256xf32>
    %118 = vector.shape_cast %117 : vector<1x1x256xf32> to vector<1x256xf32>
    %119 = vector.broadcast %118 : vector<1x256xf32> to vector<128x256xf32>
    %120 = arith.addf %116, %119 : vector<128x256xf32>
    %cst_36 = arith.constant 0.000000e+00 : f32
    %121 = vector.broadcast %cst_36 : f32 to vector<128x256xf32>
    %122 = arith.maximumf %120, %121 : vector<128x256xf32>
    %123 = arith.truncf %122 : vector<128x256xf32> to vector<128x256xbf16>
    %c0_37 = arith.constant 0 : index
    %c0_38 = arith.constant 0 : index
    %c0_39 = arith.constant 0 : index
    %124 = vector.load %arg12[%c0_37, %c0_38, %c0_39] : memref<1x256x128xbf16, #tpu.memory_space<vmem>>, vector<1x256x128xbf16>
    %125 = vector.shape_cast %124 : vector<1x256x128xbf16> to vector<256x128xbf16>
    %cst_40 = arith.constant dense<0.000000e+00> : vector<128x128xf32>
    %126 = tpu.matmul %123, %125, %cst_40 {dimension_numbers = #tpu.dot_dimension_numbers<[1], [0], [0], [1], [0, 0, 1, 1], [], []>} : vector<128x256xbf16>, vector<256x128xbf16>, vector<128x128xf32> -> vector<128x128xf32>
    %c0_41 = arith.constant 0 : index
    %c0_42 = arith.constant 0 : index
    %c0_43 = arith.constant 0 : index
    %127 = vector.load %arg13[%c0_41, %c0_42, %c0_43] : memref<1x1x128xf32, #tpu.memory_space<vmem>>, vector<1x1x128xf32>
    %128 = vector.shape_cast %127 : vector<1x1x128xf32> to vector<1x128xf32>
    %129 = vector.broadcast %128 : vector<1x128xf32> to vector<128x128xf32>
    %130 = arith.addf %126, %129 : vector<128x128xf32>
    %cst_44 = arith.constant 0.000000e+00 : f32
    %131 = vector.broadcast %cst_44 : f32 to vector<128x128xf32>
    %132 = arith.maximumf %130, %131 : vector<128x128xf32>
    %c0_45 = arith.constant 0 : index
    %c0_46 = arith.constant 0 : index
    %133 = vector.load %arg21[%c0_45, %c0_46] : memref<128x128xf32, #tpu.memory_space<vmem>>, vector<128x128xf32>
    tpu.vector_store %arg21[%c0_45, %c0_46], %132 {strides = array<i32>} : memref<128x128xf32, #tpu.memory_space<vmem>>, vector<128x128xf32>,
    %c2_i32_47 = arith.constant 2 : i32
    %134 = arith.cmpi ne, %arg0, %c2_i32_47 : i32
    %135 = arith.extui %134 : i1 to i32
    %c0_i32_48 = arith.constant 0 : i32
    %136 = arith.cmpi ne, %135, %c0_i32_48 : i32
    scf.if %136 {
      %cst_51 = arith.constant dense<0.000000e+00> : vector<8x128xf32>
      %140 = tpu.matmul %29, %96, %cst_51 {dimension_numbers = #tpu.dot_dimension_numbers<[1], [0], [0], [1], [0, 0, 1, 1], [], []>} : vector<8x128xbf16>, vector<128x128xbf16>, vector<8x128xf32> -> vector<8x128xf32>
      %141 = arith.addf %140, %4 : vector<8x128xf32>
      %142 = arith.truncf %141 : vector<8x128xf32> to vector<8x128xbf16>
      %c0_52 = arith.constant 0 : index
      %c0_53 = arith.constant 0 : index
      %c0_54 = arith.constant 0 : index
      %143 = vector.load %arg14[%c0_52, %c0_53, %c0_54] : memref<1x128x256xbf16, #tpu.memory_space<vmem>>, vector<1x128x256xbf16>
      %144 = vector.shape_cast %143 : vector<1x128x256xbf16> to vector<128x256xbf16>
      %cst_55 = arith.constant dense<0.000000e+00> : vector<8x256xf32>
      %145 = tpu.matmul %142, %144, %cst_55 {dimension_numbers = #tpu.dot_dimension_numbers<[1], [0], [0], [1], [0, 0, 1, 1], [], []>} : vector<8x128xbf16>, vector<128x256xbf16>, vector<8x256xf32> -> vector<8x256xf32>
      %c0_56 = arith.constant 0 : index
      %c0_57 = arith.constant 0 : index
      %c0_58 = arith.constant 0 : index
      %146 = vector.load %arg15[%c0_56, %c0_57, %c0_58] : memref<1x1x256xf32, #tpu.memory_space<vmem>>, vector<1x1x256xf32>
      %147 = vector.shape_cast %146 : vector<1x1x256xf32> to vector<1x256xf32>
      %148 = vector.broadcast %147 : vector<1x256xf32> to vector<8x256xf32>
      %149 = arith.addf %145, %148 : vector<8x256xf32>
      %cst_59 = arith.constant 0.000000e+00 : f32
      %150 = vector.broadcast %cst_59 : f32 to vector<8x256xf32>
      %151 = arith.maximumf %149, %150 : vector<8x256xf32>
      %152 = arith.truncf %151 : vector<8x256xf32> to vector<8x256xbf16>
      %c0_60 = arith.constant 0 : index
      %c0_61 = arith.constant 0 : index
      %c0_62 = arith.constant 0 : index
      %153 = vector.load %arg16[%c0_60, %c0_61, %c0_62] : memref<1x256x128xbf16, #tpu.memory_space<vmem>>, vector<1x256x128xbf16>
      %154 = vector.shape_cast %153 : vector<1x256x128xbf16> to vector<256x128xbf16>
      %cst_63 = arith.constant dense<0.000000e+00> : vector<8x128xf32>
      %155 = tpu.matmul %152, %154, %cst_63 {dimension_numbers = #tpu.dot_dimension_numbers<[1], [0], [0], [1], [0, 0, 1, 1], [], []>} : vector<8x256xbf16>, vector<256x128xbf16>, vector<8x128xf32> -> vector<8x128xf32>
      %c0_64 = arith.constant 0 : index
      %c0_65 = arith.constant 0 : index
      %c0_66 = arith.constant 0 : index
      %156 = vector.load %arg17[%c0_64, %c0_65, %c0_66] : memref<1x1x128xf32, #tpu.memory_space<vmem>>, vector<1x1x128xf32>
      %157 = vector.shape_cast %156 : vector<1x1x128xf32> to vector<1x128xf32>
      %158 = vector.broadcast %157 : vector<1x128xf32> to vector<8x128xf32>
      %159 = arith.addf %155, %158 : vector<8x128xf32>
      %cst_67 = arith.constant 0.000000e+00 : f32
      %160 = vector.broadcast %cst_67 : f32 to vector<8x128xf32>
      %161 = arith.maximumf %159, %160 : vector<8x128xf32>
      %c0_68 = arith.constant 0 : index
      %c0_69 = arith.constant 0 : index
      %162 = vector.load %arg22[%c0_68, %c0_69] : memref<8x128xf32, #tpu.memory_space<vmem>>, vector<8x128xf32>
      tpu.vector_store %arg22[%c0_68, %c0_69], %161 {strides = array<i32>} : memref<8x128xf32, #tpu.memory_space<vmem>>, vector<8x128xf32>,
    } else {
    }
    %c2_i32_49 = arith.constant 2 : i32
    %137 = arith.cmpi eq, %arg0, %c2_i32_49 : i32
    %138 = arith.extui %137 : i1 to i32
    %c0_i32_50 = arith.constant 0 : i32
    %139 = arith.cmpi ne, %138, %c0_i32_50 : i32
    scf.if %139 {
      %140 = arith.truncf %130 : vector<128x128xf32> to vector<128x128xbf16>
      %cst_51 = arith.constant dense<0.000000e+00> : vector<8x128xf32>
      %141 = tpu.matmul %29, %140, %cst_51 {dimension_numbers = #tpu.dot_dimension_numbers<[1], [0], [0], [1], [0, 0, 1, 1], [], []>} : vector<8x128xbf16>, vector<128x128xbf16>, vector<8x128xf32> -> vector<8x128xf32>
      %c0_52 = arith.constant 0 : index
      %c0_53 = arith.constant 0 : index
      %142 = vector.load %arg6[%c0_52, %c0_53] : memref<8x1xf32, #tpu.memory_space<vmem>>, vector<8x1xf32>
      %143 = vector.broadcast %142 : vector<8x1xf32> to vector<8x128xf32>
      %144 = arith.mulf %141, %143 : vector<8x128xf32>
      %145 = arith.truncf %144 : vector<8x128xf32> to vector<8x128xbf16>
      %c0_54 = arith.constant 0 : index
      %c0_55 = arith.constant 0 : index
      %146 = vector.load %arg18[%c0_54, %c0_55] : memref<128x128xbf16, #tpu.memory_space<vmem>>, vector<128x128xbf16>
      %cst_56 = arith.constant dense<0.000000e+00> : vector<8x128xf32>
      %147 = tpu.matmul %145, %146, %cst_56 {dimension_numbers = #tpu.dot_dimension_numbers<[1], [0], [0], [1], [0, 0, 1, 1], [], []>} : vector<8x128xbf16>, vector<128x128xbf16>, vector<8x128xf32> -> vector<8x128xf32>
      %c0_57 = arith.constant 0 : index
      %c0_58 = arith.constant 0 : index
      %148 = vector.load %arg19[%c0_57, %c0_58] : memref<1x128xf32, #tpu.memory_space<vmem>>, vector<1x128xf32>
      %149 = vector.broadcast %148 : vector<1x128xf32> to vector<8x128xf32>
      %150 = arith.addf %147, %149 : vector<8x128xf32>
      %c0_59 = arith.constant 0 : index
      %c0_60 = arith.constant 0 : index
      %151 = vector.load %arg20[%c0_59, %c0_60] : memref<8x128xf32, #tpu.memory_space<vmem>>, vector<8x128xf32>
      tpu.vector_store %arg20[%c0_59, %c0_60], %150 {strides = array<i32>} : memref<8x128xf32, #tpu.memory_space<vmem>>, vector<8x128xf32>,
    } else {
    }
    return
  }
  func.func @transform_0(%arg0: i32) -> (i32, i32) {
    %c0_i32 = arith.constant 0 : i32
    %c0_i32_0 = arith.constant 0 : i32
    %c0_i32_1 = arith.constant 0 : i32
    return %c0_i32, %c0_i32_0 : i32, i32
  }
  func.func @transform_1(%arg0: i32) -> (i32, i32) {
    %c0_i32 = arith.constant 0 : i32
    %c0_i32_0 = arith.constant 0 : i32
    %c0_i32_1 = arith.constant 0 : i32
    return %c0_i32, %c0_i32_0 : i32, i32
  }
  func.func @transform_2(%arg0: i32) -> (i32, i32) {
    %c0_i32 = arith.constant 0 : i32
    %c0_i32_0 = arith.constant 0 : i32
    %c0_i32_1 = arith.constant 0 : i32
    return %c0_i32, %c0_i32_0 : i32, i32
  }
  func.func @transform_3(%arg0: i32) -> (i32, i32) {
    %c0_i32 = arith.constant 0 : i32
    %c0_i32_0 = arith.constant 0 : i32
    %c0_i32_1 = arith.constant 0 : i32
    return %c0_i32, %c0_i32_0 : i32, i32
  }
  func.func @transform_4(%arg0: i32) -> (i32, i32) {
    %c0_i32 = arith.constant 0 : i32
    %c0_i32_0 = arith.constant 0 : i32
    %c0_i32_1 = arith.constant 0 : i32
    return %c0_i32, %c0_i32_0 : i32, i32
  }
  func.func @transform_5(%arg0: i32) -> (i32, i32) {
    %c0_i32 = arith.constant 0 : i32
    %c0_i32_0 = arith.constant 0 : i32
    %c0_i32_1 = arith.constant 0 : i32
    return %c0_i32, %c0_i32_0 : i32, i32
  }
  func.func @transform_6(%arg0: i32) -> (i32, i32) {
    %c0_i32 = arith.constant 0 : i32
    %c0_i32_0 = arith.constant 0 : i32
    %c0_i32_1 = arith.constant 0 : i32
    return %c0_i32, %c0_i32_0 : i32, i32
  }
  func.func @transform_7(%arg0: i32) -> (i32, i32, i32) {
    %c0_i32 = arith.constant 0 : i32
    %c0_i32_0 = arith.constant 0 : i32
    %c0_i32_1 = arith.constant 0 : i32
    return %arg0, %c0_i32, %c0_i32_0 : i32, i32, i32
  }
  func.func @transform_8(%arg0: i32) -> (i32, i32, i32) {
    %c0_i32 = arith.constant 0 : i32
    %c0_i32_0 = arith.constant 0 : i32
    %c0_i32_1 = arith.constant 0 : i32
    return %arg0, %c0_i32, %c0_i32_0 : i32, i32, i32
  }
  func.func @transform_9(%arg0: i32) -> (i32, i32, i32) {
    %c0_i32 = arith.constant 0 : i32
    %c0_i32_0 = arith.constant 0 : i32
    %c0_i32_1 = arith.constant 0 : i32
    return %arg0, %c0_i32, %c0_i32_0 : i32, i32, i32
  }
  func.func @transform_10(%arg0: i32) -> (i32, i32, i32) {
    %c0_i32 = arith.constant 0 : i32
    %c0_i32_0 = arith.constant 0 : i32
    %c0_i32_1 = arith.constant 0 : i32
    return %arg0, %c0_i32, %c0_i32_0 : i32, i32, i32
  }
  func.func @transform_11(%arg0: i32) -> (i32, i32, i32) {
    %c0_i32 = arith.constant 0 : i32
    %c0_i32_0 = arith.constant 0 : i32
    %c0_i32_1 = arith.constant 0 : i32
    return %arg0, %c0_i32, %c0_i32_0 : i32, i32, i32
  }
  func.func @transform_12(%arg0: i32) -> (i32, i32, i32) {
    %c0_i32 = arith.constant 0 : i32
    %c0_i32_0 = arith.constant 0 : i32
    %c0_i32_1 = arith.constant 0 : i32
    return %arg0, %c0_i32, %c0_i32_0 : i32, i32, i32
  }
  func.func @transform_13(%arg0: i32) -> (i32, i32, i32) {
    %c0_i32 = arith.constant 0 : i32
    %c0_i32_0 = arith.constant 0 : i32
    %c0_i32_1 = arith.constant 0 : i32
    return %arg0, %c0_i32, %c0_i32_0 : i32, i32, i32
  }
  func.func @transform_14(%arg0: i32) -> (i32, i32, i32) {
    %c0_i32 = arith.constant 0 : i32
    %c0_i32_0 = arith.constant 0 : i32
    %c0_i32_1 = arith.constant 0 : i32
    return %arg0, %c0_i32, %c0_i32_0 : i32, i32, i32
  }
  func.func @transform_15(%arg0: i32) -> (i32, i32, i32) {
    %c0_i32 = arith.constant 0 : i32
    %c0_i32_0 = arith.constant 0 : i32
    %c0_i32_1 = arith.constant 0 : i32
    return %arg0, %c0_i32, %c0_i32_0 : i32, i32, i32
  }
  func.func @transform_16(%arg0: i32) -> (i32, i32, i32) {
    %c0_i32 = arith.constant 0 : i32
    %c0_i32_0 = arith.constant 0 : i32
    %c0_i32_1 = arith.constant 0 : i32
    return %arg0, %c0_i32, %c0_i32_0 : i32, i32, i32
  }
  func.func @transform_17(%arg0: i32) -> (i32, i32) {
    %c0_i32 = arith.constant 0 : i32
    %c0_i32_0 = arith.constant 0 : i32
    %c0_i32_1 = arith.constant 0 : i32
    return %c0_i32, %c0_i32_0 : i32, i32
  }
  func.func @transform_18(%arg0: i32) -> (i32, i32) {
    %c0_i32 = arith.constant 0 : i32
    %c0_i32_0 = arith.constant 0 : i32
    %c0_i32_1 = arith.constant 0 : i32
    return %c0_i32, %c0_i32_0 : i32, i32
  }
  func.func @transform_19(%arg0: i32) -> (i32, i32) {
    %c0_i32 = arith.constant 0 : i32
    %c0_i32_0 = arith.constant 0 : i32
    %c0_i32_1 = arith.constant 0 : i32
    return %c0_i32, %c0_i32_0 : i32, i32
  }
}

</mosaic_0001>

<llo_original>
// kernel: tpu_custom_call.1
$region0: #{tpu_custom_call.1}
  #allocation0 [shape = 'u32[]', space=smem, size = 0x4, offset = 0x4, fixed_abs, tag = 'smem constant byte address 0x4 - core index']
  #allocation1 [shape = 'u32[144,128]{1,0:T(1,128)}', space=vmem, size = 0x12000, scoped, tag = 'internal scratch']
  #allocation2 [shape = 'f32[128,128]{1,0:T(8,128)}', space=vmem, size = 0x10000, scoped, tag = 'scratch operand']
  #allocation3 [shape = 'f32[8,128]{1,0:T(8,128)}', space=vmem, size = 0x1000, scoped, tag = 'scratch operand']
  %s0 = inlined_call_operand.hbm [shape: f32[128,128], index: 0, kind: input, shape index: {}]
  %s1 = inlined_call_operand.vmem [shape: s32[128,1], index: 1, kind: input, shape index: {}]
  %s2 = inlined_call_operand.vmem [shape: s32[1,128], index: 2, kind: input, shape index: {}]
  %s3 = inlined_call_operand.vmem [shape: s32[128,1], index: 3, kind: input, shape index: {}]
  %s4 = inlined_call_operand.vmem [shape: s32[1,128], index: 4, kind: input, shape index: {}]
  %s5 = inlined_call_operand.vmem [shape: f32[8,1], index: 5, kind: input, shape index: {}]
  %s6 = inlined_call_operand.vmem [shape: f32[8,128], index: 6, kind: input, shape index: {}]
  %s7 = inlined_call_operand.vmem [shape: bf16[3,128,128], index: 7, kind: input, shape index: {}]
  %s8 = inlined_call_operand.vmem [shape: f32[3,1,128], index: 8, kind: input, shape index: {}]
  %s9 = inlined_call_operand.hbm [shape: bf16[3,128,256], index: 9, kind: input, shape index: {}]
  %s10 = inlined_call_operand.vmem [shape: f32[3,1,256], index: 10, kind: input, shape index: {}]
  %s11 = inlined_call_operand.hbm [shape: bf16[3,256,128], index: 11, kind: input, shape index: {}]
  %s12 = inlined_call_operand.vmem [shape: f32[3,1,128], index: 12, kind: input, shape index: {}]
  %s13 = inlined_call_operand.hbm [shape: bf16[3,128,256], index: 13, kind: input, shape index: {}]
  %s14 = inlined_call_operand.vmem [shape: f32[3,1,256], index: 14, kind: input, shape index: {}]
  %s15 = inlined_call_operand.hbm [shape: bf16[3,256,128], index: 15, kind: input, shape index: {}]
  %s16 = inlined_call_operand.vmem [shape: f32[3,1,128], index: 16, kind: input, shape index: {}]
  %s17 = inlined_call_operand.vmem [shape: bf16[128,128], index: 17, kind: input, shape index: {}]
  %s18 = inlined_call_operand.vmem [shape: f32[1,128], index: 18, kind: input, shape index: {}]
  %s19 = inlined_call_operand.hbm [shape: f32[8,128], index: 19, kind: output, shape index: {}]
  %s20 = sld [smem:[#allocation0]]
  $region141: #{tpu_custom_call.1} parent=0
    _
  %s22 = ssub.s32 1, %s20
  %s23 = scalar_select 0, %s22, %s20
  $region1: #{tpu_custom_call.1} parent=0
    #allocation4 [shape = 'u8[65536]{0}', space=vmem, size = 0x10000, scoped, tag = 'input window, operand 0, single buffered']
    #allocation5 [shape = 's32[2]{0}', space=sflag, size = 0x8, scoped, tag = 'scoped memory for tpu_custom_call.1']
    #allocation6 [shape = 's32[2]{0}', space=sflag, size = 0x8, scoped, tag = 'scoped memory for tpu_custom_call.1']
    #allocation7 [shape = 'u8[131072]{0}', space=vmem, size = 0x20000, scoped, tag = 'input window, operand 9']
    #allocation8 [shape = 's32[2]{0}', space=sflag, size = 0x8, scoped, tag = 'scoped memory for tpu_custom_call.1']
    #allocation9 [shape = 'u8[131072]{0}', space=vmem, size = 0x20000, scoped, tag = 'input window, operand 11']
    #allocation10 [shape = 'u8[131072]{0}', space=vmem, size = 0x20000, scoped, tag = 'input window, operand 13']
    #allocation11 [shape = 's32[2]{0}', space=sflag, size = 0x8, scoped, tag = 'scoped memory for tpu_custom_call.1']
    #allocation12 [shape = 'u8[131072]{0}', space=vmem, size = 0x20000, scoped, tag = 'input window, operand 15']
    #allocation13 [shape = 'u8[4096]{0}', space=vmem, size = 0x1000, scoped, tag = 'output window, operand 0, single buffered']
    %24 = vsyncpa [#allocation5], 0
    %25 = vsyncpa [#allocation8], 0
    %s26 = scalar_lea.sflag [#allocation8], 1
    %27 = vsyncpa %s26, 0
    %28 = vsyncpa [#allocation11], 0
    %s29 = scalar_lea.sflag [#allocation11], 1
    %30 = vsyncpa %s29, 0
    %31 = vsyncpa [#allocation6], 0
    loop: start=0, step=1, limit=5
    $region2: #{tpu_custom_call.1} parent=1 // loop_pre_header
      _
    $region3: #{tpu_custom_call.1} parent=1 // loop_header
      %s33 = sphi 0, %s37
      %p34 = scmp.ge.s32.totalorder %s33, 5
      %s41 = sphi 0, %s41
      %s43 = sphi 0, %s41
      %s44 = sphi 0, %s43
      %s58 = sphi 0, %s44
      %s62 = sphi 0, %s62
      %s64 = sphi 0, %s62
      %s65 = sphi 0, %s64
      %s79 = sphi 0, %s65
      %s83 = sphi 0, %s83
      %s85 = sphi 0, %s83
      %s86 = sphi 0, %s85
      %s100 = sphi 0, %s86
      %s104 = sphi 0, %s104
      %s106 = sphi 0, %s104
      %s107 = sphi 0, %s106
      %s121 = sphi 0, %s107
      %s125 = sphi 0, %s125
      %s127 = sphi 0, %s125
      %s128 = sphi 0, %s127
      %s142 = sphi 0, %s128
      %s146 = sphi 0, %s146
      %s148 = sphi 0, %s146
      %s149 = sphi 0, %s148
      %s163 = sphi 0, %s149
      %s167 = sphi 0, %s167
      %s169 = sphi 0, %s167
      %s170 = sphi 0, %s169
      %s184 = sphi 0, %s170
      %s190 = sphi 0, %s192
      %s193 = sphi 0, %s190
      %s194 = sphi 0, %s193
      %s210 = sphi 0, %s194
      %s216 = sphi 0, %s218
      %s219 = sphi 0, %s216
      %s220 = sphi 0, %s219
      %s236 = sphi 0, %s220
      %s242 = sphi 0, %s244
      %s245 = sphi 0, %s242
      %s246 = sphi 0, %s245
      %s262 = sphi 0, %s246
      %s268 = sphi 0, %s270
      %s271 = sphi 0, %s268
      %s272 = sphi 0, %s271
      %s288 = sphi 0, %s272
      %s294 = sphi 0, %s296
      %s297 = sphi 0, %s294
      %s298 = sphi 0, %s297
      %s314 = sphi 0, %s298
      %s320 = sphi 0, %s322
      %s323 = sphi 0, %s320
      %s324 = sphi 0, %s323
      %s340 = sphi 0, %s324
      %s346 = sphi 0, %s348
      %s349 = sphi 0, %s346
      %s350 = sphi 0, %s349
      %s366 = sphi 0, %s350
      %s372 = sphi 0, %s374
      %s375 = sphi 0, %s372
      %s376 = sphi 0, %s375
      %s392 = sphi 0, %s376
      %s398 = sphi 0, %s400
      %s401 = sphi 0, %s398
      %s402 = sphi 0, %s401
      %s418 = sphi 0, %s402
      %s424 = sphi 0, %s426
      %s427 = sphi 0, %s424
      %s428 = sphi 0, %s427
      %s444 = sphi 0, %s428
      %s448 = sphi 0, %s448
      %s450 = sphi 0, %s448
      %s451 = sphi 0, %s450
      %s465 = sphi 0, %s451
      %s469 = sphi 0, %s469
      %s471 = sphi 0, %s469
      %s472 = sphi 0, %s471
      %s486 = sphi 0, %s472
      %s490 = sphi 0, %s490
      %s492 = sphi 0, %s490
      %s493 = sphi 0, %s492
      %s507 = sphi 0, %s493
    $region4: #{tpu_custom_call.1} parent=1 // loop_header_branch
      %36 = sbr.rel (%p34) target = $region8
    $region5: #{tpu_custom_call.1} parent=1 // loop_body
      %s38 = ssub.s32 %s33, 1
      %s39 = ssub.s32 %s33, 2
      %s40 = sadd.s32 %s33, 1
      %s42 = sadd.s32 %s41, 1
      %p45 = scmp.eq.s32.totalorder %s33, 2
      %p46 = scmp.ne.s32.totalorder %s41, %s43
      %p47 = scmp.eq.s32.totalorder %s33, 0
      %p48 = por %p46, %p47
      %p49 = scmp.ne.s32.totalorder %s41, %s43
      %p50 = scmp.eq.s32.totalorder %s38, 2
      %p51 = por %p49, %p50
      %p52 = scmp.ne.s32.totalorder %s43, %s44
      %p53 = scmp.eq.s32.totalorder %s38, 0
      %p54 = por %p52, %p53
      %p55 = scmp.ne.s32.totalorder %s43, %s44
      %p56 = scmp.eq.s32.totalorder %s39, 2
      %p57 = por %p55, %p56
      %p59 = scmp.ne.s32.totalorder %s44, %s58
      %p60 = scmp.eq.s32.totalorder %s39, 0
      %p61 = por %p59, %p60
      %s63 = sadd.s32 %s62, 1
      %p66 = scmp.eq.s32.totalorder %s33, 2
      %p67 = scmp.ne.s32.totalorder %s62, %s64
      %p68 = scmp.eq.s32.totalorder %s33, 0
      %p69 = por %p67, %p68
      %p70 = scmp.ne.s32.totalorder %s62, %s64
      %p71 = scmp.eq.s32.totalorder %s38, 2
      %p72 = por %p70, %p71
      %p73 = scmp.ne.s32.totalorder %s64, %s65
      %p74 = scmp.eq.s32.totalorder %s38, 0
      %p75 = por %p73, %p74
      %p76 = scmp.ne.s32.totalorder %s64, %s65
      %p77 = scmp.eq.s32.totalorder %s39, 2
      %p78 = por %p76, %p77
      %p80 = scmp.ne.s32.totalorder %s65, %s79
      %p81 = scmp.eq.s32.totalorder %s39, 0
      %p82 = por %p80, %p81
      %s84 = sadd.s32 %s83, 1
      %p87 = scmp.eq.s32.totalorder %s33, 2
      %p88 = scmp.ne.s32.totalorder %s83, %s85
      %p89 = scmp.eq.s32.totalorder %s33, 0
      %p90 = por %p88, %p89
      %p91 = scmp.ne.s32.totalorder %s83, %s85
      %p92 = scmp.eq.s32.totalorder %s38, 2
      %p93 = por %p91, %p92
      %p94 = scmp.ne.s32.totalorder %s85, %s86
      %p95 = scmp.eq.s32.totalorder %s38, 0
      %p96 = por %p94, %p95
      %p97 = scmp.ne.s32.totalorder %s85, %s86
      %p98 = scmp.eq.s32.totalorder %s39, 2
      %p99 = por %p97, %p98
      %p101 = scmp.ne.s32.totalorder %s86, %s100
      %p102 = scmp.eq.s32.totalorder %s39, 0
      %p103 = por %p101, %p102
      %s105 = sadd.s32 %s104, 1
      %p108 = scmp.eq.s32.totalorder %s33, 2
      %p109 = scmp.ne.s32.totalorder %s104, %s106
      %p110 = scmp.eq.s32.totalorder %s33, 0
      %p111 = por %p109, %p110
      %p112 = scmp.ne.s32.totalorder %s104, %s106
      %p113 = scmp.eq.s32.totalorder %s38, 2
      %p114 = por %p112, %p113
      %p115 = scmp.ne.s32.totalorder %s106, %s107
      %p116 = scmp.eq.s32.totalorder %s38, 0
      %p117 = por %p115, %p116
      %p118 = scmp.ne.s32.totalorder %s106, %s107
      %p119 = scmp.eq.s32.totalorder %s39, 2
      %p120 = por %p118, %p119
      %p122 = scmp.ne.s32.totalorder %s107, %s121
      %p123 = scmp.eq.s32.totalorder %s39, 0
      %p124 = por %p122, %p123
      %s126 = sadd.s32 %s125, 1
      %p129 = scmp.eq.s32.totalorder %s33, 2
      %p130 = scmp.ne.s32.totalorder %s125, %s127
      %p131 = scmp.eq.s32.totalorder %s33, 0
      %p132 = por %p130, %p131
      %p133 = scmp.ne.s32.totalorder %s125, %s127
      %p134 = scmp.eq.s32.totalorder %s38, 2
      %p135 = por %p133, %p134
      %p136 = scmp.ne.s32.totalorder %s127, %s128
      %p137 = scmp.eq.s32.totalorder %s38, 0
      %p138 = por %p136, %p137
      %p139 = scmp.ne.s32.totalorder %s127, %s128
      %p140 = scmp.eq.s32.totalorder %s39, 2
      %p141 = por %p139, %p140
      %p143 = scmp.ne.s32.totalorder %s128, %s142
      %p144 = scmp.eq.s32.totalorder %s39, 0
      %p145 = por %p143, %p144
      %s147 = sadd.s32 %s146, 1
      %p150 = scmp.eq.s32.totalorder %s33, 2
      %p151 = scmp.ne.s32.totalorder %s146, %s148
      %p152 = scmp.eq.s32.totalorder %s33, 0
      %p153 = por %p151, %p152
      %p154 = scmp.ne.s32.totalorder %s146, %s148
      %p155 = scmp.eq.s32.totalorder %s38, 2
      %p156 = por %p154, %p155
      %p157 = scmp.ne.s32.totalorder %s148, %s149
      %p158 = scmp.eq.s32.totalorder %s38, 0
      %p159 = por %p157, %p158
      %p160 = scmp.ne.s32.totalorder %s148, %s149
      %p161 = scmp.eq.s32.totalorder %s39, 2
      %p162 = por %p160, %p161
      %p164 = scmp.ne.s32.totalorder %s149, %s163
      %p165 = scmp.eq.s32.totalorder %s39, 0
      %p166 = por %p164, %p165
      %s168 = sadd.s32 %s167, 1
      %p171 = scmp.eq.s32.totalorder %s33, 2
      %p172 = scmp.ne.s32.totalorder %s167, %s169
      %p173 = scmp.eq.s32.totalorder %s33, 0
      %p174 = por %p172, %p173
      %p175 = scmp.ne.s32.totalorder %s167, %s169
      %p176 = scmp.eq.s32.totalorder %s38, 2
      %p177 = por %p175, %p176
      %p178 = scmp.ne.s32.totalorder %s169, %s170
      %p179 = scmp.eq.s32.totalorder %s38, 0
      %p180 = por %p178, %p179
      %p181 = scmp.ne.s32.totalorder %s169, %s170
      %p182 = scmp.eq.s32.totalorder %s39, 2
      %p183 = por %p181, %p182
      %p185 = scmp.ne.s32.totalorder %s170, %s184
      %p186 = scmp.eq.s32.totalorder %s39, 0
      %p187 = por %p185, %p186
      %s188 = ssub.s32 %s33, %s40
      %p189 = scmp.eq.s32.totalorder %s188, 0
      %s191 = sadd.s32 %s190, 1
      %s192 = scalar_select %p189, %s190, %s191
      %p195 = pneg %p189
      %p196 = scmp.eq.s32.totalorder %s33, 2
      %p197 = por %p195, %p196
      %p198 = scmp.ne.s32.totalorder %s190, %s193
      %p199 = scmp.eq.s32.totalorder %s33, 0
      %p200 = por %p198, %p199
      %p201 = scmp.ne.s32.totalorder %s190, %s193
      %p202 = scmp.eq.s32.totalorder %s38, 2
      %p203 = por %p201, %p202
      %p204 = scmp.ne.s32.totalorder %s193, %s194
      %p205 = scmp.eq.s32.totalorder %s38, 0
      %p206 = por %p204, %p205
      %p207 = scmp.ne.s32.totalorder %s193, %s194
      %p208 = scmp.eq.s32.totalorder %s39, 2
      %p209 = por %p207, %p208
      %p211 = scmp.ne.s32.totalorder %s194, %s210
      %p212 = scmp.eq.s32.totalorder %s39, 0
      %p213 = por %p211, %p212
      %s214 = ssub.s32 %s33, %s40
      %p215 = scmp.eq.s32.totalorder %s214, 0
      %s217 = sadd.s32 %s216, 1
      %s218 = scalar_select %p215, %s216, %s217
      %p221 = pneg %p215
      %p222 = scmp.eq.s32.totalorder %s33, 2
      %p223 = por %p221, %p222
      %p224 = scmp.ne.s32.totalorder %s216, %s219
      %p225 = scmp.eq.s32.totalorder %s33, 0
      %p226 = por %p224, %p225
      %p227 = scmp.ne.s32.totalorder %s216, %s219
      %p228 = scmp.eq.s32.totalorder %s38, 2
      %p229 = por %p227, %p228
      %p230 = scmp.ne.s32.totalorder %s219, %s220
      %p231 = scmp.eq.s32.totalorder %s38, 0
      %p232 = por %p230, %p231
      %p233 = scmp.ne.s32.totalorder %s219, %s220
      %p234 = scmp.eq.s32.totalorder %s39, 2
      %p235 = por %p233, %p234
      %p237 = scmp.ne.s32.totalorder %s220, %s236
      %p238 = scmp.eq.s32.totalorder %s39, 0
      %p239 = por %p237, %p238
      %s240 = ssub.s32 %s33, %s40
      %p241 = scmp.eq.s32.totalorder %s240, 0
      %s243 = sadd.s32 %s242, 1
      %s244 = scalar_select %p241, %s242, %s243
      %p247 = pneg %p241
      %p248 = scmp.eq.s32.totalorder %s33, 2
      %p249 = por %p247, %p248
      %p250 = scmp.ne.s32.totalorder %s242, %s245
      %p251 = scmp.eq.s32.totalorder %s33, 0
      %p252 = por %p250, %p251
      %p253 = scmp.ne.s32.totalorder %s242, %s245
      %p254 = scmp.eq.s32.totalorder %s38, 2
      %p255 = por %p253, %p254
      %p256 = scmp.ne.s32.totalorder %s245, %s246
      %p257 = scmp.eq.s32.totalorder %s38, 0
      %p258 = por %p256, %p257
      %p259 = scmp.ne.s32.totalorder %s245, %s246
      %p260 = scmp.eq.s32.totalorder %s39, 2
      %p261 = por %p259, %p260
      %p263 = scmp.ne.s32.totalorder %s246, %s262
      %p264 = scmp.eq.s32.totalorder %s39, 0
      %p265 = por %p263, %p264
      %s266 = ssub.s32 %s33, %s40
      %p267 = scmp.eq.s32.totalorder %s266, 0
      %s269 = sadd.s32 %s268, 1
      %s270 = scalar_select %p267, %s268, %s269
      %p273 = pneg %p267
      %p274 = scmp.eq.s32.totalorder %s33, 2
      %p275 = por %p273, %p274
      %p276 = scmp.ne.s32.totalorder %s268, %s271
      %p277 = scmp.eq.s32.totalorder %s33, 0
      %p278 = por %p276, %p277
      %p279 = scmp.ne.s32.totalorder %s268, %s271
      %p280 = scmp.eq.s32.totalorder %s38, 2
      %p281 = por %p279, %p280
      %p282 = scmp.ne.s32.totalorder %s271, %s272
      %p283 = scmp.eq.s32.totalorder %s38, 0
      %p284 = por %p282, %p283
      %p285 = scmp.ne.s32.totalorder %s271, %s272
      %p286 = scmp.eq.s32.totalorder %s39, 2
      %p287 = por %p285, %p286
      %p289 = scmp.ne.s32.totalorder %s272, %s288
      %p290 = scmp.eq.s32.totalorder %s39, 0
      %p291 = por %p289, %p290
      %s292 = ssub.s32 %s33, %s40
      %p293 = scmp.eq.s32.totalorder %s292, 0
      %s295 = sadd.s32 %s294, 1
      %s296 = scalar_select %p293, %s294, %s295
      %p299 = pneg %p293
      %p300 = scmp.eq.s32.totalorder %s33, 2
      %p301 = por %p299, %p300
      %p302 = scmp.ne.s32.totalorder %s294, %s297
      %p303 = scmp.eq.s32.totalorder %s33, 0
      %p304 = por %p302, %p303
      %p305 = scmp.ne.s32.totalorder %s294, %s297
      %p306 = scmp.eq.s32.totalorder %s38, 2
      %p307 = por %p305, %p306
      %p308 = scmp.ne.s32.totalorder %s297, %s298
      %p309 = scmp.eq.s32.totalorder %s38, 0
      %p310 = por %p308, %p309
      %p311 = scmp.ne.s32.totalorder %s297, %s298
      %p312 = scmp.eq.s32.totalorder %s39, 2
      %p313 = por %p311, %p312
      %p315 = scmp.ne.s32.totalorder %s298, %s314
      %p316 = scmp.eq.s32.totalorder %s39, 0
      %p317 = por %p315, %p316
      %s318 = ssub.s32 %s33, %s40
      %p319 = scmp.eq.s32.totalorder %s318, 0
      %s321 = sadd.s32 %s320, 1
      %s322 = scalar_select %p319, %s320, %s321
      %p325 = pneg %p319
      %p326 = scmp.eq.s32.totalorder %s33, 2
      %p327 = por %p325, %p326
      %p328 = scmp.ne.s32.totalorder %s320, %s323
      %p329 = scmp.eq.s32.totalorder %s33, 0
      %p330 = por %p328, %p329
      %p331 = scmp.ne.s32.totalorder %s320, %s323
      %p332 = scmp.eq.s32.totalorder %s38, 2
      %p333 = por %p331, %p332
      %p334 = scmp.ne.s32.totalorder %s323, %s324
      %p335 = scmp.eq.s32.totalorder %s38, 0
      %p336 = por %p334, %p335
      %p337 = scmp.ne.s32.totalorder %s323, %s324
      %p338 = scmp.eq.s32.totalorder %s39, 2
      %p339 = por %p337, %p338
      %p341 = scmp.ne.s32.totalorder %s324, %s340
      %p342 = scmp.eq.s32.totalorder %s39, 0
      %p343 = por %p341, %p342
      %s344 = ssub.s32 %s33, %s40
      %p345 = scmp.eq.s32.totalorder %s344, 0
      %s347 = sadd.s32 %s346, 1
      %s348 = scalar_select %p345, %s346, %s347
      %p351 = pneg %p345
      %p352 = scmp.eq.s32.totalorder %s33, 2
      %p353 = por %p351, %p352
      %p354 = scmp.ne.s32.totalorder %s346, %s349
      %p355 = scmp.eq.s32.totalorder %s33, 0
      %p356 = por %p354, %p355
      %p357 = scmp.ne.s32.totalorder %s346, %s349
      %p358 = scmp.eq.s32.totalorder %s38, 2
      %p359 = por %p357, %p358
      %p360 = scmp.ne.s32.totalorder %s349, %s350
      %p361 = scmp.eq.s32.totalorder %s38, 0
      %p362 = por %p360, %p361
      %p363 = scmp.ne.s32.totalorder %s349, %s350
      %p364 = scmp.eq.s32.totalorder %s39, 2
      %p365 = por %p363, %p364
      %p367 = scmp.ne.s32.totalorder %s350, %s366
      %p368 = scmp.eq.s32.totalorder %s39, 0
      %p369 = por %p367, %p368
      %s370 = ssub.s32 %s33, %s40
      %p371 = scmp.eq.s32.totalorder %s370, 0
      %s373 = sadd.s32 %s372, 1
      %s374 = scalar_select %p371, %s372, %s373
      %p377 = pneg %p371
      %p378 = scmp.eq.s32.totalorder %s33, 2
      %p379 = por %p377, %p378
      %p380 = scmp.ne.s32.totalorder %s372, %s375
      %p381 = scmp.eq.s32.totalorder %s33, 0
      %p382 = por %p380, %p381
      %p383 = scmp.ne.s32.totalorder %s372, %s375
      %p384 = scmp.eq.s32.totalorder %s38, 2
      %p385 = por %p383, %p384
      %p386 = scmp.ne.s32.totalorder %s375, %s376
      %p387 = scmp.eq.s32.totalorder %s38, 0
      %p388 = por %p386, %p387
      %p389 = scmp.ne.s32.totalorder %s375, %s376
      %p390 = scmp.eq.s32.totalorder %s39, 2
      %p391 = por %p389, %p390
      %p393 = scmp.ne.s32.totalorder %s376, %s392
      %p394 = scmp.eq.s32.totalorder %s39, 0
      %p395 = por %p393, %p394
      %s396 = ssub.s32 %s33, %s40
      %p397 = scmp.eq.s32.totalorder %s396, 0
      %s399 = sadd.s32 %s398, 1
      %s400 = scalar_select %p397, %s398, %s399
      %p403 = pneg %p397
      %p404 = scmp.eq.s32.totalorder %s33, 2
      %p405 = por %p403, %p404
      %p406 = scmp.ne.s32.totalorder %s398, %s401
      %p407 = scmp.eq.s32.totalorder %s33, 0
      %p408 = por %p406, %p407
      %p409 = scmp.ne.s32.totalorder %s398, %s401
      %p410 = scmp.eq.s32.totalorder %s38, 2
      %p411 = por %p409, %p410
      %p412 = scmp.ne.s32.totalorder %s401, %s402
      %p413 = scmp.eq.s32.totalorder %s38, 0
      %p414 = por %p412, %p413
      %p415 = scmp.ne.s32.totalorder %s401, %s402
      %p416 = scmp.eq.s32.totalorder %s39, 2
      %p417 = por %p415, %p416
      %p419 = scmp.ne.s32.totalorder %s402, %s418
      %p420 = scmp.eq.s32.totalorder %s39, 0
      %p421 = por %p419, %p420
      %s422 = ssub.s32 %s33, %s40
      %p423 = scmp.eq.s32.totalorder %s422, 0
      %s425 = sadd.s32 %s424, 1
      %s426 = scalar_select %p423, %s424, %s425
      %p429 = pneg %p423
      %p430 = scmp.eq.s32.totalorder %s33, 2
      %p431 = por %p429, %p430
      %p432 = scmp.ne.s32.totalorder %s424, %s427
      %p433 = scmp.eq.s32.totalorder %s33, 0
      %p434 = por %p432, %p433
      %p435 = scmp.ne.s32.totalorder %s424, %s427
      %p436 = scmp.eq.s32.totalorder %s38, 2
      %p437 = por %p435, %p436
      %p438 = scmp.ne.s32.totalorder %s427, %s428
      %p439 = scmp.eq.s32.totalorder %s38, 0
      %p440 = por %p438, %p439
      %p441 = scmp.ne.s32.totalorder %s427, %s428
      %p442 = scmp.eq.s32.totalorder %s39, 2
      %p443 = por %p441, %p442
      %p445 = scmp.ne.s32.totalorder %s428, %s444
      %p446 = scmp.eq.s32.totalorder %s39, 0
      %p447 = por %p445, %p446
      %s449 = sadd.s32 %s448, 1
      %p452 = scmp.eq.s32.totalorder %s33, 2
      %p453 = scmp.ne.s32.totalorder %s448, %s450
      %p454 = scmp.eq.s32.totalorder %s33, 0
      %p455 = por %p453, %p454
      %p456 = scmp.ne.s32.totalorder %s448, %s450
      %p457 = scmp.eq.s32.totalorder %s38, 2
      %p458 = por %p456, %p457
      %p459 = scmp.ne.s32.totalorder %s450, %s451
      %p460 = scmp.eq.s32.totalorder %s38, 0
      %p461 = por %p459, %p460
      %p462 = scmp.ne.s32.totalorder %s450, %s451
      %p463 = scmp.eq.s32.totalorder %s39, 2
      %p464 = por %p462, %p463
      %p466 = scmp.ne.s32.totalorder %s451, %s465
      %p467 = scmp.eq.s32.totalorder %s39, 0
      %p468 = por %p466, %p467
      %s470 = sadd.s32 %s469, 1
      %p473 = scmp.eq.s32.totalorder %s33, 2
      %p474 = scmp.ne.s32.totalorder %s469, %s471
      %p475 = scmp.eq.s32.totalorder %s33, 0
      %p476 = por %p474, %p475
      %p477 = scmp.ne.s32.totalorder %s469, %s471
      %p478 = scmp.eq.s32.totalorder %s38, 2
      %p479 = por %p477, %p478
      %p480 = scmp.ne.s32.totalorder %s471, %s472
      %p481 = scmp.eq.s32.totalorder %s38, 0
      %p482 = por %p480, %p481
      %p483 = scmp.ne.s32.totalorder %s471, %s472
      %p484 = scmp.eq.s32.totalorder %s39, 2
      %p485 = por %p483, %p484
      %p487 = scmp.ne.s32.totalorder %s472, %s486
      %p488 = scmp.eq.s32.totalorder %s39, 0
      %p489 = por %p487, %p488
      %s491 = sadd.s32 %s490, 1
      %p494 = scmp.eq.s32.totalorder %s33, 2
      %p495 = scmp.ne.s32.totalorder %s490, %s492
      %p496 = scmp.eq.s32.totalorder %s33, 0
      %p497 = por %p495, %p496
      %p498 = scmp.ne.s32.totalorder %s490, %s492
      %p499 = scmp.eq.s32.totalorder %s38, 2
      %p500 = por %p498, %p499
      %p501 = scmp.ne.s32.totalorder %s492, %s493
      %p502 = scmp.eq.s32.totalorder %s38, 0
      %p503 = por %p501, %p502
      %p504 = scmp.ne.s32.totalorder %s492, %s493
      %p505 = scmp.eq.s32.totalorder %s39, 2
      %p506 = por %p504, %p505
      %p508 = scmp.ne.s32.totalorder %s493, %s507
      %p509 = scmp.eq.s32.totalorder %s39, 0
      %p510 = por %p508, %p509
      %p511 = scmp.le.s32.totalorder 1, %s33
      %p512 = scmp.lt.s32.totalorder %s33, 4
      %p513 = pnand %p511, %p512
      %p514 = pneg %p513
      // Predicated region
      $region9: #{tpu_custom_call.1} parent=5 // pred_check
        _
      $region10: #{tpu_custom_call.1} parent=5 // pred_check_branch
        %516 = sbr.rel (%p513) target = $region12
      $region11: #{tpu_custom_call.1} parent=5 // pred_region
        %s517 = ssub.s32 %s33, 1
        // Predicated region
        $region13: #{tpu_custom_call.1} parent=11 // pred_check
          %p518 = pneg %p54
        $region14: #{tpu_custom_call.1} parent=11 // pred_check_branch
          %520 = sbr.rel (%p518) target = $region16
        $region15: #{tpu_custom_call.1} parent=11 // pred_region
          %s522 = ssub.s32 2048, 2048
          %523 = vsyncadd [#allocation5], %s522
          %s524 = sshll.u32 [#allocation4], 4
          %s525 = int_to_ptr.vmem [resolvable:$true] %s524
          %530 = dma.hbm_to_vmem [thread:$0]  %s0, 2048, %s525, [#allocation5], 128, 128, 8
        $region16: #{tpu_custom_call.1} parent=11 // pred_fallthru
          _
        // Predicated region
        $region17: #{tpu_custom_call.1} parent=11 // pred_check
          %p531 = pneg %p75
        $region18: #{tpu_custom_call.1} parent=11 // pred_check_branch
          %533 = sbr.rel (%p531) target = $region20
        $region19: #{tpu_custom_call.1} parent=11 // pred_region
          _
        $region20: #{tpu_custom_call.1} parent=11 // pred_fallthru
          _
        // Predicated region
        $region21: #{tpu_custom_call.1} parent=11 // pred_check
          %p534 = pneg %p96
        $region22: #{tpu_custom_call.1} parent=11 // pred_check_branch
          %536 = sbr.rel (%p534) target = $region24
        $region23: #{tpu_custom_call.1} parent=11 // pred_region
          _
        $region24: #{tpu_custom_call.1} parent=11 // pred_fallthru
          _
        // Predicated region
        $region25: #{tpu_custom_call.1} parent=11 // pred_check
          %p537 = pneg %p117
        $region26: #{tpu_custom_call.1} parent=11 // pred_check_branch
          %539 = sbr.rel (%p537) target = $region28
        $region27: #{tpu_custom_call.1} parent=11 // pred_region
          _
        $region28: #{tpu_custom_call.1} parent=11 // pred_fallthru
          _
        // Predicated region
        $region29: #{tpu_custom_call.1} parent=11 // pred_check
          %p540 = pneg %p138
        $region30: #{tpu_custom_call.1} parent=11 // pred_check_branch
          %542 = sbr.rel (%p540) target = $region32
        $region31: #{tpu_custom_call.1} parent=11 // pred_region
          _
        $region32: #{tpu_custom_call.1} parent=11 // pred_fallthru
          _
        // Predicated region
        $region33: #{tpu_custom_call.1} parent=11 // pred_check
          %p543 = pneg %p159
        $region34: #{tpu_custom_call.1} parent=11 // pred_check_branch
          %545 = sbr.rel (%p543) target = $region36
        $region35: #{tpu_custom_call.1} parent=11 // pred_region
          _
        $region36: #{tpu_custom_call.1} parent=11 // pred_fallthru
          _
        // Predicated region
        $region37: #{tpu_custom_call.1} parent=11 // pred_check
          %p546 = pneg %p180
        $region38: #{tpu_custom_call.1} parent=11 // pred_check_branch
          %548 = sbr.rel (%p546) target = $region40
        $region39: #{tpu_custom_call.1} parent=11 // pred_region
          _
        $region40: #{tpu_custom_call.1} parent=11 // pred_fallthru
          _
        // Predicated region
        $region41: #{tpu_custom_call.1} parent=11 // pred_check
          %p549 = pneg %p461
        $region42: #{tpu_custom_call.1} parent=11 // pred_check_branch
          %551 = sbr.rel (%p549) target = $region44
        $region43: #{tpu_custom_call.1} parent=11 // pred_region
          _
        $region44: #{tpu_custom_call.1} parent=11 // pred_fallthru
          _
        // Predicated region
        $region45: #{tpu_custom_call.1} parent=11 // pred_check
          %p552 = pneg %p482
        $region46: #{tpu_custom_call.1} parent=11 // pred_check_branch
          %554 = sbr.rel (%p552) target = $region48
        $region47: #{tpu_custom_call.1} parent=11 // pred_region
          _
        $region48: #{tpu_custom_call.1} parent=11 // pred_fallthru
          _
      $region12: #{tpu_custom_call.1} parent=5 // pred_fallthru
        _
      %p555 = scmp.lt.s32.totalorder %s33, 3
      // Predicated region
      $region49: #{tpu_custom_call.1} parent=5 // pred_check
        %p556 = pneg %p555
      $region50: #{tpu_custom_call.1} parent=5 // pred_check_branch
        %558 = sbr.rel (%p556) target = $region52
      $region51: #{tpu_custom_call.1} parent=5 // pred_region
        // Predicated region
        $region53: #{tpu_custom_call.1} parent=51 // pred_check
          %p559 = pneg %p200
        $region54: #{tpu_custom_call.1} parent=51 // pred_check_branch
          %561 = sbr.rel (%p559) target = $region56
        $region55: #{tpu_custom_call.1} parent=51 // pred_region
          %p562 = scmp.lt.s32.totalorder %s33, 2
          %s563 = scalar_select %p562, %s33, 2
          %s564 = smul.addr %s563, 16
          %s565 = smul.addr %s564, 4
          %s566 = scalar_lea.vmem %s7, %s565
        $region56: #{tpu_custom_call.1} parent=51 // pred_fallthru
          _
        // Predicated region
        $region57: #{tpu_custom_call.1} parent=51 // pred_check
          %p567 = pneg %p226
        $region58: #{tpu_custom_call.1} parent=51 // pred_check_branch
          %569 = sbr.rel (%p567) target = $region60
        $region59: #{tpu_custom_call.1} parent=51 // pred_region
          %p570 = scmp.lt.s32.totalorder %s33, 2
          %s571 = scalar_select %p570, %s33, 2
          %s572 = scalar_lea.vmem %s8, %s571
        $region60: #{tpu_custom_call.1} parent=51 // pred_fallthru
          _
        // Predicated region
        $region61: #{tpu_custom_call.1} parent=51 // pred_check
          %p573 = pneg %p252
        $region62: #{tpu_custom_call.1} parent=51 // pred_check_branch
          %575 = sbr.rel (%p573) target = $region64
        $region63: #{tpu_custom_call.1} parent=51 // pred_region
          %s576 = sand.u32 %s33, 1
          %s577 = scalar_lea.sflag [#allocation8], %s576
          %s578 = sand.u32 %s242, 1
          %s579 = smul.addr %s578, 128
          %s580 = scalar_lea.vmem [#allocation7], %s579
          %s582 = ssub.s32 2048, 2048
          %583 = vsyncadd %s577, %s582
          %s584 = smul.addr %s33, 32
          %s585 = smul.addr %s584, 64
          %s586 = scalar_lea.hbm %s9, %s585
          %s587 = sshll.u32 %s580, 4
          %s588 = int_to_ptr.vmem [resolvable:$true] %s587
          %593 = dma.hbm_to_vmem [thread:$0]  %s586, 2048, %s588, %s577, 128, 128, 8
        $region64: #{tpu_custom_call.1} parent=51 // pred_fallthru
          _
        // Predicated region
        $region65: #{tpu_custom_call.1} parent=51 // pred_check
          %p594 = pneg %p278
        $region66: #{tpu_custom_call.1} parent=51 // pred_check_branch
          %596 = sbr.rel (%p594) target = $region68
        $region67: #{tpu_custom_call.1} parent=51 // pred_region
          %p597 = scmp.lt.s32.totalorder %s33, 2
          %s598 = scalar_select %p597, %s33, 2
          %s599 = smul.addr %s598, 2
          %s600 = scalar_lea.vmem %s10, %s599
        $region68: #{tpu_custom_call.1} parent=51 // pred_fallthru
          _
        // Predicated region
        $region69: #{tpu_custom_call.1} parent=51 // pred_check
          %p601 = pneg %p304
        $region70: #{tpu_custom_call.1} parent=51 // pred_check_branch
          %603 = sbr.rel (%p601) target = $region72
        $region71: #{tpu_custom_call.1} parent=51 // pred_region
          %s604 = sand.u32 %s33, 1
          %s605 = scalar_lea.sflag [#allocation8], %s604
          %s606 = sand.u32 %s294, 1
          %s607 = smul.addr %s606, 128
          %s608 = scalar_lea.vmem [#allocation9], %s607
          %s610 = ssub.s32 2048, 2048
          %611 = vsyncadd %s605, %s610
          %s612 = smul.addr %s33, 32
          %s613 = smul.addr %s612, 64
          %s614 = scalar_lea.hbm %s11, %s613
          %s615 = sshll.u32 %s608, 4
          %s616 = int_to_ptr.vmem [resolvable:$true] %s615
          %621 = dma.hbm_to_vmem [thread:$0]  %s614, 2048, %s616, %s605, 64, 64, 4
        $region72: #{tpu_custom_call.1} parent=51 // pred_fallthru
          _
        // Predicated region
        $region73: #{tpu_custom_call.1} parent=51 // pred_check
          %p622 = pneg %p330
        $region74: #{tpu_custom_call.1} parent=51 // pred_check_branch
          %624 = sbr.rel (%p622) target = $region76
        $region75: #{tpu_custom_call.1} parent=51 // pred_region
          %p625 = scmp.lt.s32.totalorder %s33, 2
          %s626 = scalar_select %p625, %s33, 2
          %s627 = scalar_lea.vmem %s12, %s626
        $region76: #{tpu_custom_call.1} parent=51 // pred_fallthru
          _
        // Predicated region
        $region77: #{tpu_custom_call.1} parent=51 // pred_check
          %p628 = pneg %p356
        $region78: #{tpu_custom_call.1} parent=51 // pred_check_branch
          %630 = sbr.rel (%p628) target = $region80
        $region79: #{tpu_custom_call.1} parent=51 // pred_region
          %s631 = sand.u32 %s33, 1
          %s632 = scalar_lea.sflag [#allocation11], %s631
          %s633 = sand.u32 %s346, 1
          %s634 = smul.addr %s633, 128
          %s635 = scalar_lea.vmem [#allocation10], %s634
          %s637 = ssub.s32 2048, 2048
          %638 = vsyncadd %s632, %s637
          %s639 = smul.addr %s33, 32
          %s640 = smul.addr %s639, 64
          %s641 = scalar_lea.hbm %s13, %s640
          %s642 = sshll.u32 %s635, 4
          %s643 = int_to_ptr.vmem [resolvable:$true] %s642
          %648 = dma.hbm_to_vmem [thread:$0]  %s641, 2048, %s643, %s632, 128, 128, 8
        $region80: #{tpu_custom_call.1} parent=51 // pred_fallthru
          _
        // Predicated region
        $region81: #{tpu_custom_call.1} parent=51 // pred_check
          %p649 = pneg %p382
        $region82: #{tpu_custom_call.1} parent=51 // pred_check_branch
          %651 = sbr.rel (%p649) target = $region84
        $region83: #{tpu_custom_call.1} parent=51 // pred_region
          %p652 = scmp.lt.s32.totalorder %s33, 2
          %s653 = scalar_select %p652, %s33, 2
          %s654 = smul.addr %s653, 2
          %s655 = scalar_lea.vmem %s14, %s654
        $region84: #{tpu_custom_call.1} parent=51 // pred_fallthru
          _
        // Predicated region
        $region85: #{tpu_custom_call.1} parent=51 // pred_check
          %p656 = pneg %p408
        $region86: #{tpu_custom_call.1} parent=51 // pred_check_branch
          %658 = sbr.rel (%p656) target = $region88
        $region87: #{tpu_custom_call.1} parent=51 // pred_region
          %s659 = sand.u32 %s33, 1
          %s660 = scalar_lea.sflag [#allocation11], %s659
          %s661 = sand.u32 %s398, 1
          %s662 = smul.addr %s661, 128
          %s663 = scalar_lea.vmem [#allocation12], %s662
          %s665 = ssub.s32 2048, 2048
          %666 = vsyncadd %s660, %s665
          %s667 = smul.addr %s33, 32
          %s668 = smul.addr %s667, 64
          %s669 = scalar_lea.hbm %s15, %s668
          %s670 = sshll.u32 %s663, 4
          %s671 = int_to_ptr.vmem [resolvable:$true] %s670
          %676 = dma.hbm_to_vmem [thread:$0]  %s669, 2048, %s671, %s660, 64, 64, 4
        $region88: #{tpu_custom_call.1} parent=51 // pred_fallthru
          _
        // Predicated region
        $region89: #{tpu_custom_call.1} parent=51 // pred_check
          %p677 = pneg %p434
        $region90: #{tpu_custom_call.1} parent=51 // pred_check_branch
          %679 = sbr.rel (%p677) target = $region92
        $region91: #{tpu_custom_call.1} parent=51 // pred_region
          %p680 = scmp.lt.s32.totalorder %s33, 2
          %s681 = scalar_select %p680, %s33, 2
          %s682 = scalar_lea.vmem %s16, %s681
        $region92: #{tpu_custom_call.1} parent=51 // pred_fallthru
          _
      $region52: #{tpu_custom_call.1} parent=5 // pred_fallthru
        _
      %p683 = scmp.le.s32.totalorder 1, %s33
      %p684 = scmp.lt.s32.totalorder %s33, 4
      %p685 = pnand %p683, %p684
      %p686 = pneg %p685
      // Predicated region
      $region93: #{tpu_custom_call.1} parent=5 // pred_check
        _
      $region94: #{tpu_custom_call.1} parent=5 // pred_check_branch
        %688 = sbr.rel (%p685) target = $region96
      $region95: #{tpu_custom_call.1} parent=5 // pred_region
        %s689 = ssub.s32 %s33, 1
        // Predicated region
        $region97: #{tpu_custom_call.1} parent=95 // pred_check
          %p690 = pneg %p54
        $region98: #{tpu_custom_call.1} parent=95 // pred_check_branch
          %692 = sbr.rel (%p690) target = $region100
        $region99: #{tpu_custom_call.1} parent=95 // pred_region
          %693 = dma.done [#allocation5], 2048
        $region100: #{tpu_custom_call.1} parent=95 // pred_fallthru
          _
        %s694 = sand.u32 %s38, 1
        %s695 = scalar_lea.sflag [#allocation8], %s694
        %s696 = sand.u32 %s245, 1
        %s697 = smul.addr %s696, 128
        %s698 = scalar_lea.vmem [#allocation7], %s697
        // Predicated region
        $region101: #{tpu_custom_call.1} parent=95 // pred_check
          %p699 = pneg %p258
        $region102: #{tpu_custom_call.1} parent=95 // pred_check_branch
          %701 = sbr.rel (%p699) target = $region104
        $region103: #{tpu_custom_call.1} parent=95 // pred_region
          %702 = dma.done %s695, 2048
        $region104: #{tpu_custom_call.1} parent=95 // pred_fallthru
          _
        %s703 = sand.u32 %s38, 1
        %s704 = scalar_lea.sflag [#allocation8], %s703
        %s705 = sand.u32 %s297, 1
        %s706 = smul.addr %s705, 128
        %s707 = scalar_lea.vmem [#allocation9], %s706
        // Predicated region
        $region105: #{tpu_custom_call.1} parent=95 // pred_check
          %p708 = pneg %p310
        $region106: #{tpu_custom_call.1} parent=95 // pred_check_branch
          %710 = sbr.rel (%p708) target = $region108
        $region107: #{tpu_custom_call.1} parent=95 // pred_region
          %711 = dma.done %s704, 2048
        $region108: #{tpu_custom_call.1} parent=95 // pred_fallthru
          _
        %s712 = sand.u32 %s38, 1
        %s713 = scalar_lea.sflag [#allocation11], %s712
        %s714 = sand.u32 %s349, 1
        %s715 = smul.addr %s714, 128
        %s716 = scalar_lea.vmem [#allocation10], %s715
        // Predicated region
        $region109: #{tpu_custom_call.1} parent=95 // pred_check
          %p717 = pneg %p362
        $region110: #{tpu_custom_call.1} parent=95 // pred_check_branch
          %719 = sbr.rel (%p717) target = $region112
        $region111: #{tpu_custom_call.1} parent=95 // pred_region
          %720 = dma.done %s713, 2048
        $region112: #{tpu_custom_call.1} parent=95 // pred_fallthru
          _
        %s721 = sand.u32 %s38, 1
        %s722 = scalar_lea.sflag [#allocation11], %s721
        %s723 = sand.u32 %s401, 1
        %s724 = smul.addr %s723, 128
        %s725 = scalar_lea.vmem [#allocation12], %s724
        // Predicated region
        $region113: #{tpu_custom_call.1} parent=95 // pred_check
          %p726 = pneg %p414
        $region114: #{tpu_custom_call.1} parent=95 // pred_check_branch
          %728 = sbr.rel (%p726) target = $region116
        $region115: #{tpu_custom_call.1} parent=95 // pred_region
          %729 = dma.done %s722, 2048
        $region116: #{tpu_custom_call.1} parent=95 // pred_fallthru
          _
        %p730 = pneg %p54
        %p731 = pneg %p51
        %p732 = pneg %p75
        %p733 = pneg %p72
        %p734 = pneg %p96
        %p735 = pneg %p93
        %p736 = pneg %p117
        %p737 = pneg %p114
        %p738 = pneg %p138
        %p739 = pneg %p135
        %p740 = pneg %p159
        %p741 = pneg %p156
        %p742 = pneg %p180
        %p743 = pneg %p177
        %p744 = scmp.lt.s32.totalorder %s38, 2
        %s745 = scalar_select %p744, %s38, 2
        %s746 = smul.addr %s745, 16
        %s747 = smul.addr %s746, 4
        %s748 = scalar_lea.vmem %s7, %s747
        %p749 = pneg %p206
        %p750 = pneg %p203
        %p751 = scmp.lt.s32.totalorder %s38, 2
        %s752 = scalar_select %p751, %s38, 2
        %s753 = scalar_lea.vmem %s8, %s752
        %p754 = pneg %p232
        %p755 = pneg %p229
        %s756 = sand.u32 %s38, 1
        %s757 = scalar_lea.sflag [#allocation8], %s756
        %s758 = sand.u32 %s245, 1
        %s759 = smul.addr %s758, 128
        %s760 = scalar_lea.vmem [#allocation7], %s759
        %p761 = pneg %p258
        %p762 = pneg %p255
        %p763 = scmp.lt.s32.totalorder %s38, 2
        %s764 = scalar_select %p763, %s38, 2
        %s765 = smul.addr %s764, 2
        %s766 = scalar_lea.vmem %s10, %s765
        %p767 = pneg %p284
        %p768 = pneg %p281
        %s769 = sand.u32 %s38, 1
        %s770 = scalar_lea.sflag [#allocation8], %s769
        %s771 = sand.u32 %s297, 1
        %s772 = smul.addr %s771, 128
        %s773 = scalar_lea.vmem [#allocation9], %s772
        %p774 = pneg %p310
        %p775 = pneg %p307
        %p776 = scmp.lt.s32.totalorder %s38, 2
        %s777 = scalar_select %p776, %s38, 2
        %s778 = scalar_lea.vmem %s12, %s777
        %p779 = pneg %p336
        %p780 = pneg %p333
        %s781 = sand.u32 %s38, 1
        %s782 = scalar_lea.sflag [#allocation11], %s781
        %s783 = sand.u32 %s349, 1
        %s784 = smul.addr %s783, 128
        %s785 = scalar_lea.vmem [#allocation10], %s784
        %p786 = pneg %p362
        %p787 = pneg %p359
        %p788 = scmp.lt.s32.totalorder %s38, 2
        %s789 = scalar_select %p788, %s38, 2
        %s790 = smul.addr %s789, 2
        %s791 = scalar_lea.vmem %s14, %s790
        %p792 = pneg %p388
        %p793 = pneg %p385
        %s794 = sand.u32 %s38, 1
        %s795 = scalar_lea.sflag [#allocation11], %s794
        %s796 = sand.u32 %s401, 1
        %s797 = smul.addr %s796, 128
        %s798 = scalar_lea.vmem [#allocation12], %s797
        %p799 = pneg %p414
        %p800 = pneg %p411
        %p801 = scmp.lt.s32.totalorder %s38, 2
        %s802 = scalar_select %p801, %s38, 2
        %s803 = scalar_lea.vmem %s16, %s802
        %p804 = pneg %p440
        %p805 = pneg %p437
        %p806 = pneg %p461
        %p807 = pneg %p458
        %p808 = pneg %p482
        %p809 = pneg %p479
        %p810 = pneg %p503
        %p811 = pneg %p500
        %p812 = scmp.lt.s32.totalorder %s38, 2
        %s813 = scalar_select %p812, %s38, 2
        %s814 = smul.addr %s813, 16
        %s815 = smul.addr %s814, 4
        %s816 = scalar_lea.vmem %s7, %s815
        %p817 = scmp.lt.s32.totalorder %s38, 2
        %s818 = scalar_select %p817, %s38, 2
        %s819 = scalar_lea.vmem %s8, %s818
        %p820 = scmp.lt.s32.totalorder %s38, 2
        %s821 = scalar_select %p820, %s38, 2
        %s822 = smul.addr %s821, 2
        %s823 = scalar_lea.vmem %s10, %s822
        %p824 = scmp.lt.s32.totalorder %s38, 2
        %s825 = scalar_select %p824, %s38, 2
        %s826 = scalar_lea.vmem %s12, %s825
        %p827 = scmp.lt.s32.totalorder %s38, 2
        %s828 = scalar_select %p827, %s38, 2
        %s829 = smul.addr %s828, 2
        %s830 = scalar_lea.vmem %s14, %s829
        %p831 = scmp.lt.s32.totalorder %s38, 2
        %s832 = scalar_select %p831, %s38, 2
        %s833 = scalar_lea.vmem %s16, %s832
        %p835 = scmp.eq.s32.totalorder %s38, 0
        // Predicated region
        $region117: #{tpu_custom_call.1} parent=95 // pred_check
          %p836 = pneg %p835
        $region118: #{tpu_custom_call.1} parent=95 // pred_check_branch
          %838 = sbr.rel (%p836) target = $region120
        $region119: #{tpu_custom_call.1} parent=95 // pred_region
          %v839 = vld [vmem:[#allocation4] sm:$0xff]
          %v840 = vld [vmem:[#allocation4 + $0x8] sm:$0xff]
          %v841 = vld [vmem:[#allocation4 + $0x10] sm:$0xff]
          %v842 = vld [vmem:[#allocation4 + $0x18] sm:$0xff]
          %v843 = vld [vmem:[#allocation4 + $0x20] sm:$0xff]
          %v844 = vld [vmem:[#allocation4 + $0x28] sm:$0xff]
          %v845 = vld [vmem:[#allocation4 + $0x30] sm:$0xff]
          %v846 = vld [vmem:[#allocation4 + $0x38] sm:$0xff]
          %v847 = vld [vmem:[#allocation4 + $0x40] sm:$0xff]
          %v848 = vld [vmem:[#allocation4 + $0x48] sm:$0xff]
          %v849 = vld [vmem:[#allocation4 + $0x50] sm:$0xff]
          %v850 = vld [vmem:[#allocation4 + $0x58] sm:$0xff]
          %v851 = vld [vmem:[#allocation4 + $0x60] sm:$0xff]
          %v852 = vld [vmem:[#allocation4 + $0x68] sm:$0xff]
          %v853 = vld [vmem:[#allocation4 + $0x70] sm:$0xff]
          %v854 = vld [vmem:[#allocation4 + $0x78] sm:$0xff]
          %855 = vst [vmem:[#allocation2] sm:$0xff] %v839
          %856 = vst [vmem:[#allocation2 + $0x8] sm:$0xff] %v840
          %857 = vst [vmem:[#allocation2 + $0x10] sm:$0xff] %v841
          %858 = vst [vmem:[#allocation2 + $0x18] sm:$0xff] %v842
          %859 = vst [vmem:[#allocation2 + $0x20] sm:$0xff] %v843
          %860 = vst [vmem:[#allocation2 + $0x28] sm:$0xff] %v844
          %861 = vst [vmem:[#allocation2 + $0x30] sm:$0xff] %v845
          %862 = vst [vmem:[#allocation2 + $0x38] sm:$0xff] %v846
          %863 = vst [vmem:[#allocation2 + $0x40] sm:$0xff] %v847
          %864 = vst [vmem:[#allocation2 + $0x48] sm:$0xff] %v848
          %865 = vst [vmem:[#allocation2 + $0x50] sm:$0xff] %v849
          %866 = vst [vmem:[#allocation2 + $0x58] sm:$0xff] %v850
          %867 = vst [vmem:[#allocation2 + $0x60] sm:$0xff] %v851
          %868 = vst [vmem:[#allocation2 + $0x68] sm:$0xff] %v852
          %869 = vst [vmem:[#allocation2 + $0x70] sm:$0xff] %v853
          %870 = vst [vmem:[#allocation2 + $0x78] sm:$0xff] %v854
          %v871 = vld [vmem:[%s6] sm:$0xff]
          %872 = vst [vmem:[#allocation3] sm:$0xff] %v871
        $region120: #{tpu_custom_call.1} parent=95 // pred_fallthru
          _
        %v873 = vld [vmem:[#allocation2] sm:$0xff]
        %v874 = vld [vmem:[#allocation2 + $0x8] sm:$0xff]
        %v875 = vld [vmem:[#allocation2 + $0x10] sm:$0xff]
        %v876 = vld [vmem:[#allocation2 + $0x18] sm:$0xff]
        %v877 = vld [vmem:[#allocation2 + $0x20] sm:$0xff]
        %v878 = vld [vmem:[#allocation2 + $0x28] sm:$0xff]
        %v879 = vld [vmem:[#allocation2 + $0x30] sm:$0xff]
        %v880 = vld [vmem:[#allocation2 + $0x38] sm:$0xff]
        %v881 = vld [vmem:[#allocation2 + $0x40] sm:$0xff]
        %v882 = vld [vmem:[#allocation2 + $0x48] sm:$0xff]
        %v883 = vld [vmem:[#allocation2 + $0x50] sm:$0xff]
        %v884 = vld [vmem:[#allocation2 + $0x58] sm:$0xff]
        %v885 = vld [vmem:[#allocation2 + $0x60] sm:$0xff]
        %v886 = vld [vmem:[#allocation2 + $0x68] sm:$0xff]
        %v887 = vld [vmem:[#allocation2 + $0x70] sm:$0xff]
        %v888 = vld [vmem:[#allocation2 + $0x78] sm:$0xff]
        %v889 = vld [vmem:[#allocation3] sm:$0xff]
        %v890 = vld [vmem:[%s3] sm:$0xff]
        %v891 = vld [vmem:[%s3 + $0x8] sm:$0xff]
        %v892 = vld [vmem:[%s3 + $0x10] sm:$0xff]
        %v893 = vld [vmem:[%s3 + $0x18] sm:$0xff]
        %v894 = vld [vmem:[%s3 + $0x20] sm:$0xff]
        %v895 = vld [vmem:[%s3 + $0x28] sm:$0xff]
        %v896 = vld [vmem:[%s3 + $0x30] sm:$0xff]
        %v897 = vld [vmem:[%s3 + $0x38] sm:$0xff]
        %v898 = vld [vmem:[%s3 + $0x40] sm:$0xff]
        %v899 = vld [vmem:[%s3 + $0x48] sm:$0xff]
        %v900 = vld [vmem:[%s3 + $0x50] sm:$0xff]
        %v901 = vld [vmem:[%s3 + $0x58] sm:$0xff]
        %v902 = vld [vmem:[%s3 + $0x60] sm:$0xff]
        %v903 = vld [vmem:[%s3 + $0x68] sm:$0xff]
        %v904 = vld [vmem:[%s3 + $0x70] sm:$0xff]
        %v905 = vld [vmem:[%s3 + $0x78] sm:$0xff]
        %v906 = vld [vmem:[%s4] sm:$0x1]
        %v907 = vld [vmem:[%s1] sm:$0xff]
        %v908 = vld [vmem:[%s1 + $0x8] sm:$0xff]
        %v909 = vld [vmem:[%s1 + $0x10] sm:$0xff]
        %v910 = vld [vmem:[%s1 + $0x18] sm:$0xff]
        %v911 = vld [vmem:[%s1 + $0x20] sm:$0xff]
        %v912 = vld [vmem:[%s1 + $0x28] sm:$0xff]
        %v913 = vld [vmem:[%s1 + $0x30] sm:$0xff]
        %v914 = vld [vmem:[%s1 + $0x38] sm:$0xff]
        %v915 = vld [vmem:[%s1 + $0x40] sm:$0xff]
        %v916 = vld [vmem:[%s1 + $0x48] sm:$0xff]
        %v917 = vld [vmem:[%s1 + $0x50] sm:$0xff]
        %v918 = vld [vmem:[%s1 + $0x58] sm:$0xff]
        %v919 = vld [vmem:[%s1 + $0x60] sm:$0xff]
        %v920 = vld [vmem:[%s1 + $0x68] sm:$0xff]
        %v921 = vld [vmem:[%s1 + $0x70] sm:$0xff]
        %v922 = vld [vmem:[%s1 + $0x78] sm:$0xff]
        %v923 = vld [vmem:[%s2] sm:$0x1]
        %v924 = vlaneseq
        %v925 = vand.u32 %v924, 127
        %926 = vset.pattern.permute.xlu0 0
        %927 = vperm.xlu0 %926, %v907
        %v928 = vpop.permute.xlu0 %927
        %929 = vset.pattern.permute.xlu0 0
        %930 = vperm.xlu0 %929, %v908
        %v931 = vpop.permute.xlu0 %930
        %932 = vset.pattern.permute.xlu0 0
        %933 = vperm.xlu0 %932, %v909
        %v934 = vpop.permute.xlu0 %933
        %935 = vset.pattern.permute.xlu0 0
        %936 = vperm.xlu0 %935, %v910
        %v937 = vpop.permute.xlu0 %936
        %938 = vset.pattern.permute.xlu0 0
        %939 = vperm.xlu0 %938, %v911
        %v940 = vpop.permute.xlu0 %939
        %941 = vset.pattern.permute.xlu0 0
        %942 = vperm.xlu0 %941, %v912
        %v943 = vpop.permute.xlu0 %942
        %944 = vset.pattern.permute.xlu0 0
        %945 = vperm.xlu0 %944, %v913
        %v946 = vpop.permute.xlu0 %945
        %947 = vset.pattern.permute.xlu0 0
        %948 = vperm.xlu0 %947, %v914
        %v949 = vpop.permute.xlu0 %948
        %950 = vset.pattern.permute.xlu0 0
        %951 = vperm.xlu0 %950, %v915
        %v952 = vpop.permute.xlu0 %951
        %953 = vset.pattern.permute.xlu0 0
        %954 = vperm.xlu0 %953, %v916
        %v955 = vpop.permute.xlu0 %954
        %956 = vset.pattern.permute.xlu0 0
        %957 = vperm.xlu0 %956, %v917
        %v958 = vpop.permute.xlu0 %957
        %959 = vset.pattern.permute.xlu0 0
        %960 = vperm.xlu0 %959, %v918
        %v961 = vpop.permute.xlu0 %960
        %962 = vset.pattern.permute.xlu0 0
        %963 = vperm.xlu0 %962, %v919
        %v964 = vpop.permute.xlu0 %963
        %965 = vset.pattern.permute.xlu0 0
        %966 = vperm.xlu0 %965, %v920
        %v967 = vpop.permute.xlu0 %966
        %968 = vset.pattern.permute.xlu0 0
        %969 = vperm.xlu0 %968, %v921
        %v970 = vpop.permute.xlu0 %969
        %971 = vset.pattern.permute.xlu0 0
        %972 = vperm.xlu0 %971, %v922
        %v973 = vpop.permute.xlu0 %972
        %vm974 = vcmp.eq.s32.totalorder %v925, %v928
        %vm975 = vcmp.eq.s32.totalorder %v925, %v931
        %vm976 = vcmp.eq.s32.totalorder %v925, %v934
        %vm977 = vcmp.eq.s32.totalorder %v925, %v937
        %vm978 = vcmp.eq.s32.totalorder %v925, %v940
        %vm979 = vcmp.eq.s32.totalorder %v925, %v943
        %vm980 = vcmp.eq.s32.totalorder %v925, %v946
        %vm981 = vcmp.eq.s32.totalorder %v925, %v949
        %vm982 = vcmp.eq.s32.totalorder %v925, %v952
        %vm983 = vcmp.eq.s32.totalorder %v925, %v955
        %vm984 = vcmp.eq.s32.totalorder %v925, %v958
        %vm985 = vcmp.eq.s32.totalorder %v925, %v961
        %vm986 = vcmp.eq.s32.totalorder %v925, %v964
        %vm987 = vcmp.eq.s32.totalorder %v925, %v967
        %vm988 = vcmp.eq.s32.totalorder %v925, %v970
        %vm989 = vcmp.eq.s32.totalorder %v925, %v973
        %v990 = vsel %vm974, 1.0, 0.0
        %v991 = vsel %vm975, 1.0, 0.0
        %v992 = vsel %vm976, 1.0, 0.0
        %v993 = vsel %vm977, 1.0, 0.0
        %v994 = vsel %vm978, 1.0, 0.0
        %v995 = vsel %vm979, 1.0, 0.0
        %v996 = vsel %vm980, 1.0, 0.0
        %v997 = vsel %vm981, 1.0, 0.0
        %v998 = vsel %vm982, 1.0, 0.0
        %v999 = vsel %vm983, 1.0, 0.0
        %v1000 = vsel %vm984, 1.0, 0.0
        %v1001 = vsel %vm985, 1.0, 0.0
        %v1002 = vsel %vm986, 1.0, 0.0
        %v1003 = vsel %vm987, 1.0, 0.0
        %v1004 = vsel %vm988, 1.0, 0.0
        %v1005 = vsel %vm989, 1.0, 0.0
        %v1006 = vpack.c.bf16 %v991, %v990
        %v1007 = vpack.c.bf16 %v993, %v992
        %v1008 = vpack.c.bf16 %v995, %v994
        %v1009 = vpack.c.bf16 %v997, %v996
        %v1010 = vpack.c.bf16 %v999, %v998
        %v1011 = vpack.c.bf16 %v1001, %v1000
        %v1012 = vpack.c.bf16 %v1003, %v1002
        %v1013 = vpack.c.bf16 %v1005, %v1004
        %v1014 = vlaneseq
        %v1015 = vshrl.u32 %v1014, 7
        %v1016 = vadd.s32 %v1015, 8
        %v1017 = vadd.s32 %v1015, 16
        %v1018 = vadd.s32 %v1015, 24
        %v1019 = vadd.s32 %v1015, 32
        %v1020 = vadd.s32 %v1015, 40
        %v1021 = vadd.s32 %v1015, 48
        %v1022 = vadd.s32 %v1015, 56
        %v1023 = vadd.s32 %v1015, 64
        %v1024 = vadd.s32 %v1015, 72
        %v1025 = vadd.s32 %v1015, 80
        %v1026 = vadd.s32 %v1015, 88
        %v1027 = vadd.s32 %v1015, 96
        %v1028 = vadd.s32 %v1015, 104
        %v1029 = vadd.s32 %v1015, 112
        %v1030 = vadd.s32 %v1015, 120
        %v1031 = vlaneseq
        %v1032 = vshrl.u32 %v1031, 7
        %v1033 = vsub.s32 0, %v1032
        %v1034 = vrot.slane %v923, %v1033
        %vm1035 = vcmp.eq.s32.totalorder %v1015, %v1034
        %vm1036 = vcmp.eq.s32.totalorder %v1016, %v1034
        %vm1037 = vcmp.eq.s32.totalorder %v1017, %v1034
        %vm1038 = vcmp.eq.s32.totalorder %v1018, %v1034
        %vm1039 = vcmp.eq.s32.totalorder %v1019, %v1034
        %vm1040 = vcmp.eq.s32.totalorder %v1020, %v1034
        %vm1041 = vcmp.eq.s32.totalorder %v1021, %v1034
        %vm1042 = vcmp.eq.s32.totalorder %v1022, %v1034
        %vm1043 = vcmp.eq.s32.totalorder %v1023, %v1034
        %vm1044 = vcmp.eq.s32.totalorder %v1024, %v1034
        %vm1045 = vcmp.eq.s32.totalorder %v1025, %v1034
        %vm1046 = vcmp.eq.s32.totalorder %v1026, %v1034
        %vm1047 = vcmp.eq.s32.totalorder %v1027, %v1034
        %vm1048 = vcmp.eq.s32.totalorder %v1028, %v1034
        %vm1049 = vcmp.eq.s32.totalorder %v1029, %v1034
        %vm1050 = vcmp.eq.s32.totalorder %v1030, %v1034
        %v1051 = vsel %vm1035, 1.0, 0.0
        %v1052 = vsel %vm1036, 1.0, 0.0
        %v1053 = vsel %vm1037, 1.0, 0.0
        %v1054 = vsel %vm1038, 1.0, 0.0
        %v1055 = vsel %vm1039, 1.0, 0.0
        %v1056 = vsel %vm1040, 1.0, 0.0
        %v1057 = vsel %vm1041, 1.0, 0.0
        %v1058 = vsel %vm1042, 1.0, 0.0
        %v1059 = vsel %vm1043, 1.0, 0.0
        %v1060 = vsel %vm1044, 1.0, 0.0
        %v1061 = vsel %vm1045, 1.0, 0.0
        %v1062 = vsel %vm1046, 1.0, 0.0
        %v1063 = vsel %vm1047, 1.0, 0.0
        %v1064 = vsel %vm1048, 1.0, 0.0
        %v1065 = vsel %vm1049, 1.0, 0.0
        %v1066 = vsel %vm1050, 1.0, 0.0
        %v1067 = vpack.c.bf16 %v1052, %v1051
        %v1068 = vpack.c.bf16 %v1054, %v1053
        %v1069 = vpack.c.bf16 %v1056, %v1055
        %v1070 = vpack.c.bf16 %v1058, %v1057
        %v1071 = vpack.c.bf16 %v1060, %v1059
        %v1072 = vpack.c.bf16 %v1062, %v1061
        %v1073 = vpack.c.bf16 %v1064, %v1063
        %v1074 = vpack.c.bf16 %v1066, %v1065
        %v1075 = vlaneseq
        %v1076 = vshrl.u32 %v1075, 7
        %v1077 = vsub.s32 0, %v1076
        %v1078 = vrot.slane %v906, %v1077
        %vm1079 = vcmp.eq.s32.totalorder %v1015, %v1078
        %v1080 = vsel %vm1079, 1.0, 0.0
        %v1081 = vpack.c.bf16 %v1080, %v1080
        %vm1082 = vcmp.eq.s32.totalorder %v890, 0
        %vm1083 = vcmp.eq.s32.totalorder %v891, 0
        %vm1084 = vcmp.eq.s32.totalorder %v892, 0
        %vm1085 = vcmp.eq.s32.totalorder %v893, 0
        %vm1086 = vcmp.eq.s32.totalorder %v894, 0
        %vm1087 = vcmp.eq.s32.totalorder %v895, 0
        %vm1088 = vcmp.eq.s32.totalorder %v896, 0
        %vm1089 = vcmp.eq.s32.totalorder %v897, 0
        %vm1090 = vcmp.eq.s32.totalorder %v898, 0
        %vm1091 = vcmp.eq.s32.totalorder %v899, 0
        %vm1092 = vcmp.eq.s32.totalorder %v900, 0
        %vm1093 = vcmp.eq.s32.totalorder %v901, 0
        %vm1094 = vcmp.eq.s32.totalorder %v902, 0
        %vm1095 = vcmp.eq.s32.totalorder %v903, 0
        %vm1096 = vcmp.eq.s32.totalorder %v904, 0
        %vm1097 = vcmp.eq.s32.totalorder %v905, 0
        %v1098 = vsel %vm1082, 1, 0
        %v1099 = vsel %vm1083, 1, 0
        %v1100 = vsel %vm1084, 1, 0
        %v1101 = vsel %vm1085, 1, 0
        %v1102 = vsel %vm1086, 1, 0
        %v1103 = vsel %vm1087, 1, 0
        %v1104 = vsel %vm1088, 1, 0
        %v1105 = vsel %vm1089, 1, 0
        %v1106 = vsel %vm1090, 1, 0
        %v1107 = vsel %vm1091, 1, 0
        %v1108 = vsel %vm1092, 1, 0
        %v1109 = vsel %vm1093, 1, 0
        %v1110 = vsel %vm1094, 1, 0
        %v1111 = vsel %vm1095, 1, 0
        %v1112 = vsel %vm1096, 1, 0
        %v1113 = vsel %vm1097, 1, 0
        %1114 = vset.pattern.permute.xlu0 0
        %1115 = vperm.xlu0 %1114, %v1098
        %v1116 = vpop.permute.xlu0 %1115
        %1117 = vset.pattern.permute.xlu0 0
        %1118 = vperm.xlu0 %1117, %v1099
        %v1119 = vpop.permute.xlu0 %1118
        %1120 = vset.pattern.permute.xlu0 0
        %1121 = vperm.xlu0 %1120, %v1100
        %v1122 = vpop.permute.xlu0 %1121
        %1123 = vset.pattern.permute.xlu0 0
        %1124 = vperm.xlu0 %1123, %v1101
        %v1125 = vpop.permute.xlu0 %1124
        %1126 = vset.pattern.permute.xlu0 0
        %1127 = vperm.xlu0 %1126, %v1102
        %v1128 = vpop.permute.xlu0 %1127
        %1129 = vset.pattern.permute.xlu0 0
        %1130 = vperm.xlu0 %1129, %v1103
        %v1131 = vpop.permute.xlu0 %1130
        %1132 = vset.pattern.permute.xlu0 0
        %1133 = vperm.xlu0 %1132, %v1104
        %v1134 = vpop.permute.xlu0 %1133
        %1135 = vset.pattern.permute.xlu0 0
        %1136 = vperm.xlu0 %1135, %v1105
        %v1137 = vpop.permute.xlu0 %1136
        %1138 = vset.pattern.permute.xlu0 0
        %1139 = vperm.xlu0 %1138, %v1106
        %v1140 = vpop.permute.xlu0 %1139
        %1141 = vset.pattern.permute.xlu0 0
        %1142 = vperm.xlu0 %1141, %v1107
        %v1143 = vpop.permute.xlu0 %1142
        %1144 = vset.pattern.permute.xlu0 0
        %1145 = vperm.xlu0 %1144, %v1108
        %v1146 = vpop.permute.xlu0 %1145
        %1147 = vset.pattern.permute.xlu0 0
        %1148 = vperm.xlu0 %1147, %v1109
        %v1149 = vpop.permute.xlu0 %1148
        %1150 = vset.pattern.permute.xlu0 0
        %1151 = vperm.xlu0 %1150, %v1110
        %v1152 = vpop.permute.xlu0 %1151
        %1153 = vset.pattern.permute.xlu0 0
        %1154 = vperm.xlu0 %1153, %v1111
        %v1155 = vpop.permute.xlu0 %1154
        %1156 = vset.pattern.permute.xlu0 0
        %1157 = vperm.xlu0 %1156, %v1112
        %v1158 = vpop.permute.xlu0 %1157
        %1159 = vset.pattern.permute.xlu0 0
        %1160 = vperm.xlu0 %1159, %v1113
        %v1161 = vpop.permute.xlu0 %1160
        %vm1162 = vcmp.eq.s32.totalorder %v1116, 1
        %vm1163 = vcmp.eq.s32.totalorder %v1119, 1
        %vm1164 = vcmp.eq.s32.totalorder %v1122, 1
        %vm1165 = vcmp.eq.s32.totalorder %v1125, 1
        %vm1166 = vcmp.eq.s32.totalorder %v1128, 1
        %vm1167 = vcmp.eq.s32.totalorder %v1131, 1
        %vm1168 = vcmp.eq.s32.totalorder %v1134, 1
        %vm1169 = vcmp.eq.s32.totalorder %v1137, 1
        %vm1170 = vcmp.eq.s32.totalorder %v1140, 1
        %vm1171 = vcmp.eq.s32.totalorder %v1143, 1
        %vm1172 = vcmp.eq.s32.totalorder %v1146, 1
        %vm1173 = vcmp.eq.s32.totalorder %v1149, 1
        %vm1174 = vcmp.eq.s32.totalorder %v1152, 1
        %vm1175 = vcmp.eq.s32.totalorder %v1155, 1
        %vm1176 = vcmp.eq.s32.totalorder %v1158, 1
        %vm1177 = vcmp.eq.s32.totalorder %v1161, 1
        %v1178 = vlaneseq
        %v1179 = vshrl.u32 %v1178, 7
        %v1180 = vsub.s32 0, %v1179
        %v1181 = vrot.slane %v889, %v1180
        %v1182 = vsel %vm1162, %v1181, 0.0
        %v1183 = vsel %vm1163, %v1181, 0.0
        %v1184 = vsel %vm1164, %v1181, 0.0
        %v1185 = vsel %vm1165, %v1181, 0.0
        %v1186 = vsel %vm1166, %v1181, 0.0
        %v1187 = vsel %vm1167, %v1181, 0.0
        %v1188 = vsel %vm1168, %v1181, 0.0
        %v1189 = vsel %vm1169, %v1181, 0.0
        %v1190 = vsel %vm1170, %v1181, 0.0
        %v1191 = vsel %vm1171, %v1181, 0.0
        %v1192 = vsel %vm1172, %v1181, 0.0
        %v1193 = vsel %vm1173, %v1181, 0.0
        %v1194 = vsel %vm1174, %v1181, 0.0
        %v1195 = vsel %vm1175, %v1181, 0.0
        %v1196 = vsel %vm1176, %v1181, 0.0
        %v1197 = vsel %vm1177, %v1181, 0.0
        %vm1198 = vcmp.eq.s32.totalorder %v890, 1
        %vm1199 = vcmp.eq.s32.totalorder %v891, 1
        %vm1200 = vcmp.eq.s32.totalorder %v892, 1
        %vm1201 = vcmp.eq.s32.totalorder %v893, 1
        %vm1202 = vcmp.eq.s32.totalorder %v894, 1
        %vm1203 = vcmp.eq.s32.totalorder %v895, 1
        %vm1204 = vcmp.eq.s32.totalorder %v896, 1
        %vm1205 = vcmp.eq.s32.totalorder %v897, 1
        %vm1206 = vcmp.eq.s32.totalorder %v898, 1
        %vm1207 = vcmp.eq.s32.totalorder %v899, 1
        %vm1208 = vcmp.eq.s32.totalorder %v900, 1
        %vm1209 = vcmp.eq.s32.totalorder %v901, 1
        %vm1210 = vcmp.eq.s32.totalorder %v902, 1
        %vm1211 = vcmp.eq.s32.totalorder %v903, 1
        %vm1212 = vcmp.eq.s32.totalorder %v904, 1
        %vm1213 = vcmp.eq.s32.totalorder %v905, 1
        %v1214 = vsel %vm1198, 1, 0
        %v1215 = vsel %vm1199, 1, 0
        %v1216 = vsel %vm1200, 1, 0
        %v1217 = vsel %vm1201, 1, 0
        %v1218 = vsel %vm1202, 1, 0
        %v1219 = vsel %vm1203, 1, 0
        %v1220 = vsel %vm1204, 1, 0
        %v1221 = vsel %vm1205, 1, 0
        %v1222 = vsel %vm1206, 1, 0
        %v1223 = vsel %vm1207, 1, 0
        %v1224 = vsel %vm1208, 1, 0
        %v1225 = vsel %vm1209, 1, 0
        %v1226 = vsel %vm1210, 1, 0
        %v1227 = vsel %vm1211, 1, 0
        %v1228 = vsel %vm1212, 1, 0
        %v1229 = vsel %vm1213, 1, 0
        %1230 = vset.pattern.permute.xlu0 0
        %1231 = vperm.xlu0 %1230, %v1214
        %v1232 = vpop.permute.xlu0 %1231
        %1233 = vset.pattern.permute.xlu0 0
        %1234 = vperm.xlu0 %1233, %v1215
        %v1235 = vpop.permute.xlu0 %1234
        %1236 = vset.pattern.permute.xlu0 0
        %1237 = vperm.xlu0 %1236, %v1216
        %v1238 = vpop.permute.xlu0 %1237
        %1239 = vset.pattern.permute.xlu0 0
        %1240 = vperm.xlu0 %1239, %v1217
        %v1241 = vpop.permute.xlu0 %1240
        %1242 = vset.pattern.permute.xlu0 0
        %1243 = vperm.xlu0 %1242, %v1218
        %v1244 = vpop.permute.xlu0 %1243
        %1245 = vset.pattern.permute.xlu0 0
        %1246 = vperm.xlu0 %1245, %v1219
        %v1247 = vpop.permute.xlu0 %1246
        %1248 = vset.pattern.permute.xlu0 0
        %1249 = vperm.xlu0 %1248, %v1220
        %v1250 = vpop.permute.xlu0 %1249
        %1251 = vset.pattern.permute.xlu0 0
        %1252 = vperm.xlu0 %1251, %v1221
        %v1253 = vpop.permute.xlu0 %1252
        %1254 = vset.pattern.permute.xlu0 0
        %1255 = vperm.xlu0 %1254, %v1222
        %v1256 = vpop.permute.xlu0 %1255
        %1257 = vset.pattern.permute.xlu0 0
        %1258 = vperm.xlu0 %1257, %v1223
        %v1259 = vpop.permute.xlu0 %1258
        %1260 = vset.pattern.permute.xlu0 0
        %1261 = vperm.xlu0 %1260, %v1224
        %v1262 = vpop.permute.xlu0 %1261
        %1263 = vset.pattern.permute.xlu0 0
        %1264 = vperm.xlu0 %1263, %v1225
        %v1265 = vpop.permute.xlu0 %1264
        %1266 = vset.pattern.permute.xlu0 0
        %1267 = vperm.xlu0 %1266, %v1226
        %v1268 = vpop.permute.xlu0 %1267
        %1269 = vset.pattern.permute.xlu0 0
        %1270 = vperm.xlu0 %1269, %v1227
        %v1271 = vpop.permute.xlu0 %1270
        %1272 = vset.pattern.permute.xlu0 0
        %1273 = vperm.xlu0 %1272, %v1228
        %v1274 = vpop.permute.xlu0 %1273
        %1275 = vset.pattern.permute.xlu0 0
        %1276 = vperm.xlu0 %1275, %v1229
        %v1277 = vpop.permute.xlu0 %1276
        %vm1278 = vcmp.eq.s32.totalorder %v1232, 1
        %vm1279 = vcmp.eq.s32.totalorder %v1235, 1
        %vm1280 = vcmp.eq.s32.totalorder %v1238, 1
        %vm1281 = vcmp.eq.s32.totalorder %v1241, 1
        %vm1282 = vcmp.eq.s32.totalorder %v1244, 1
        %vm1283 = vcmp.eq.s32.totalorder %v1247, 1
        %vm1284 = vcmp.eq.s32.totalorder %v1250, 1
        %vm1285 = vcmp.eq.s32.totalorder %v1253, 1
        %vm1286 = vcmp.eq.s32.totalorder %v1256, 1
        %vm1287 = vcmp.eq.s32.totalorder %v1259, 1
        %vm1288 = vcmp.eq.s32.totalorder %v1262, 1
        %vm1289 = vcmp.eq.s32.totalorder %v1265, 1
        %vm1290 = vcmp.eq.s32.totalorder %v1268, 1
        %vm1291 = vcmp.eq.s32.totalorder %v1271, 1
        %vm1292 = vcmp.eq.s32.totalorder %v1274, 1
        %vm1293 = vcmp.eq.s32.totalorder %v1277, 1
        %v1294 = vlaneseq
        %v1295 = vshrl.u32 %v1294, 7
        %v1296 = vsub.s32 1, %v1295
        %v1297 = vrot.slane %v889, %v1296
        %v1298 = vsel %vm1278, %v1297, %v1182
        %v1299 = vsel %vm1279, %v1297, %v1183
        %v1300 = vsel %vm1280, %v1297, %v1184
        %v1301 = vsel %vm1281, %v1297, %v1185
        %v1302 = vsel %vm1282, %v1297, %v1186
        %v1303 = vsel %vm1283, %v1297, %v1187
        %v1304 = vsel %vm1284, %v1297, %v1188
        %v1305 = vsel %vm1285, %v1297, %v1189
        %v1306 = vsel %vm1286, %v1297, %v1190
        %v1307 = vsel %vm1287, %v1297, %v1191
        %v1308 = vsel %vm1288, %v1297, %v1192
        %v1309 = vsel %vm1289, %v1297, %v1193
        %v1310 = vsel %vm1290, %v1297, %v1194
        %v1311 = vsel %vm1291, %v1297, %v1195
        %v1312 = vsel %vm1292, %v1297, %v1196
        %v1313 = vsel %vm1293, %v1297, %v1197
        %vm1314 = vcmp.eq.s32.totalorder %v890, 2
        %vm1315 = vcmp.eq.s32.totalorder %v891, 2
        %vm1316 = vcmp.eq.s32.totalorder %v892, 2
        %vm1317 = vcmp.eq.s32.totalorder %v893, 2
        %vm1318 = vcmp.eq.s32.totalorder %v894, 2
        %vm1319 = vcmp.eq.s32.totalorder %v895, 2
        %vm1320 = vcmp.eq.s32.totalorder %v896, 2
        %vm1321 = vcmp.eq.s32.totalorder %v897, 2
        %vm1322 = vcmp.eq.s32.totalorder %v898, 2
        %vm1323 = vcmp.eq.s32.totalorder %v899, 2
        %vm1324 = vcmp.eq.s32.totalorder %v900, 2
        %vm1325 = vcmp.eq.s32.totalorder %v901, 2
        %vm1326 = vcmp.eq.s32.totalorder %v902, 2
        %vm1327 = vcmp.eq.s32.totalorder %v903, 2
        %vm1328 = vcmp.eq.s32.totalorder %v904, 2
        %vm1329 = vcmp.eq.s32.totalorder %v905, 2
        %v1330 = vsel %vm1314, 1, 0
        %v1331 = vsel %vm1315, 1, 0
        %v1332 = vsel %vm1316, 1, 0
        %v1333 = vsel %vm1317, 1, 0
        %v1334 = vsel %vm1318, 1, 0
        %v1335 = vsel %vm1319, 1, 0
        %v1336 = vsel %vm1320, 1, 0
        %v1337 = vsel %vm1321, 1, 0
        %v1338 = vsel %vm1322, 1, 0
        %v1339 = vsel %vm1323, 1, 0
        %v1340 = vsel %vm1324, 1, 0
        %v1341 = vsel %vm1325, 1, 0
        %v1342 = vsel %vm1326, 1, 0
        %v1343 = vsel %vm1327, 1, 0
        %v1344 = vsel %vm1328, 1, 0
        %v1345 = vsel %vm1329, 1, 0
        %1346 = vset.pattern.permute.xlu0 0
        %1347 = vperm.xlu0 %1346, %v1330
        %v1348 = vpop.permute.xlu0 %1347
        %1349 = vset.pattern.permute.xlu0 0
        %1350 = vperm.xlu0 %1349, %v1331
        %v1351 = vpop.permute.xlu0 %1350
        %1352 = vset.pattern.permute.xlu0 0
        %1353 = vperm.xlu0 %1352, %v1332
        %v1354 = vpop.permute.xlu0 %1353
        %1355 = vset.pattern.permute.xlu0 0
        %1356 = vperm.xlu0 %1355, %v1333
        %v1357 = vpop.permute.xlu0 %1356
        %1358 = vset.pattern.permute.xlu0 0
        %1359 = vperm.xlu0 %1358, %v1334
        %v1360 = vpop.permute.xlu0 %1359
        %1361 = vset.pattern.permute.xlu0 0
        %1362 = vperm.xlu0 %1361, %v1335
        %v1363 = vpop.permute.xlu0 %1362
        %1364 = vset.pattern.permute.xlu0 0
        %1365 = vperm.xlu0 %1364, %v1336
        %v1366 = vpop.permute.xlu0 %1365
        %1367 = vset.pattern.permute.xlu0 0
        %1368 = vperm.xlu0 %1367, %v1337
        %v1369 = vpop.permute.xlu0 %1368
        %1370 = vset.pattern.permute.xlu0 0
        %1371 = vperm.xlu0 %1370, %v1338
        %v1372 = vpop.permute.xlu0 %1371
        %1373 = vset.pattern.permute.xlu0 0
        %1374 = vperm.xlu0 %1373, %v1339
        %v1375 = vpop.permute.xlu0 %1374
        %1376 = vset.pattern.permute.xlu0 0
        %1377 = vperm.xlu0 %1376, %v1340
        %v1378 = vpop.permute.xlu0 %1377
        %1379 = vset.pattern.permute.xlu0 0
        %1380 = vperm.xlu0 %1379, %v1341
        %v1381 = vpop.permute.xlu0 %1380
        %1382 = vset.pattern.permute.xlu0 0
        %1383 = vperm.xlu0 %1382, %v1342
        %v1384 = vpop.permute.xlu0 %1383
        %1385 = vset.pattern.permute.xlu0 0
        %1386 = vperm.xlu0 %1385, %v1343
        %v1387 = vpop.permute.xlu0 %1386
        %1388 = vset.pattern.permute.xlu0 0
        %1389 = vperm.xlu0 %1388, %v1344
        %v1390 = vpop.permute.xlu0 %1389
        %1391 = vset.pattern.permute.xlu0 0
        %1392 = vperm.xlu0 %1391, %v1345
        %v1393 = vpop.permute.xlu0 %1392
        %vm1394 = vcmp.eq.s32.totalorder %v1348, 1
        %vm1395 = vcmp.eq.s32.totalorder %v1351, 1
        %vm1396 = vcmp.eq.s32.totalorder %v1354, 1
        %vm1397 = vcmp.eq.s32.totalorder %v1357, 1
        %vm1398 = vcmp.eq.s32.totalorder %v1360, 1
        %vm1399 = vcmp.eq.s32.totalorder %v1363, 1
        %vm1400 = vcmp.eq.s32.totalorder %v1366, 1
        %vm1401 = vcmp.eq.s32.totalorder %v1369, 1
        %vm1402 = vcmp.eq.s32.totalorder %v1372, 1
        %vm1403 = vcmp.eq.s32.totalorder %v1375, 1
        %vm1404 = vcmp.eq.s32.totalorder %v1378, 1
        %vm1405 = vcmp.eq.s32.totalorder %v1381, 1
        %vm1406 = vcmp.eq.s32.totalorder %v1384, 1
        %vm1407 = vcmp.eq.s32.totalorder %v1387, 1
        %vm1408 = vcmp.eq.s32.totalorder %v1390, 1
        %vm1409 = vcmp.eq.s32.totalorder %v1393, 1
        %v1410 = vlaneseq
        %v1411 = vshrl.u32 %v1410, 7
        %v1412 = vsub.s32 2, %v1411
        %v1413 = vrot.slane %v889, %v1412
        %v1414 = vsel %vm1394, %v1413, %v1298
        %v1415 = vsel %vm1395, %v1413, %v1299
        %v1416 = vsel %vm1396, %v1413, %v1300
        %v1417 = vsel %vm1397, %v1413, %v1301
        %v1418 = vsel %vm1398, %v1413, %v1302
        %v1419 = vsel %vm1399, %v1413, %v1303
        %v1420 = vsel %vm1400, %v1413, %v1304
        %v1421 = vsel %vm1401, %v1413, %v1305
        %v1422 = vsel %vm1402, %v1413, %v1306
        %v1423 = vsel %vm1403, %v1413, %v1307
        %v1424 = vsel %vm1404, %v1413, %v1308
        %v1425 = vsel %vm1405, %v1413, %v1309
        %v1426 = vsel %vm1406, %v1413, %v1310
        %v1427 = vsel %vm1407, %v1413, %v1311
        %v1428 = vsel %vm1408, %v1413, %v1312
        %v1429 = vsel %vm1409, %v1413, %v1313
        %vm1430 = vcmp.eq.s32.totalorder %v890, 3
        %vm1431 = vcmp.eq.s32.totalorder %v891, 3
        %vm1432 = vcmp.eq.s32.totalorder %v892, 3
        %vm1433 = vcmp.eq.s32.totalorder %v893, 3
        %vm1434 = vcmp.eq.s32.totalorder %v894, 3
        %vm1435 = vcmp.eq.s32.totalorder %v895, 3
        %vm1436 = vcmp.eq.s32.totalorder %v896, 3
        %vm1437 = vcmp.eq.s32.totalorder %v897, 3
        %vm1438 = vcmp.eq.s32.totalorder %v898, 3
        %vm1439 = vcmp.eq.s32.totalorder %v899, 3
        %vm1440 = vcmp.eq.s32.totalorder %v900, 3
        %vm1441 = vcmp.eq.s32.totalorder %v901, 3
        %vm1442 = vcmp.eq.s32.totalorder %v902, 3
        %vm1443 = vcmp.eq.s32.totalorder %v903, 3
        %vm1444 = vcmp.eq.s32.totalorder %v904, 3
        %vm1445 = vcmp.eq.s32.totalorder %v905, 3
        %v1446 = vsel %vm1430, 1, 0
        %v1447 = vsel %vm1431, 1, 0
        %v1448 = vsel %vm1432, 1, 0
        %v1449 = vsel %vm1433, 1, 0
        %v1450 = vsel %vm1434, 1, 0
        %v1451 = vsel %vm1435, 1, 0
        %v1452 = vsel %vm1436, 1, 0
        %v1453 = vsel %vm1437, 1, 0
        %v1454 = vsel %vm1438, 1, 0
        %v1455 = vsel %vm1439, 1, 0
        %v1456 = vsel %vm1440, 1, 0
        %v1457 = vsel %vm1441, 1, 0
        %v1458 = vsel %vm1442, 1, 0
        %v1459 = vsel %vm1443, 1, 0
        %v1460 = vsel %vm1444, 1, 0
        %v1461 = vsel %vm1445, 1, 0
        %1462 = vset.pattern.permute.xlu0 0
        %1463 = vperm.xlu0 %1462, %v1446
        %v1464 = vpop.permute.xlu0 %1463
        %1465 = vset.pattern.permute.xlu0 0
        %1466 = vperm.xlu0 %1465, %v1447
        %v1467 = vpop.permute.xlu0 %1466
        %1468 = vset.pattern.permute.xlu0 0
        %1469 = vperm.xlu0 %1468, %v1448
        %v1470 = vpop.permute.xlu0 %1469
        %1471 = vset.pattern.permute.xlu0 0
        %1472 = vperm.xlu0 %1471, %v1449
        %v1473 = vpop.permute.xlu0 %1472
        %1474 = vset.pattern.permute.xlu0 0
        %1475 = vperm.xlu0 %1474, %v1450
        %v1476 = vpop.permute.xlu0 %1475
        %1477 = vset.pattern.permute.xlu0 0
        %1478 = vperm.xlu0 %1477, %v1451
        %v1479 = vpop.permute.xlu0 %1478
        %1480 = vset.pattern.permute.xlu0 0
        %1481 = vperm.xlu0 %1480, %v1452
        %v1482 = vpop.permute.xlu0 %1481
        %1483 = vset.pattern.permute.xlu0 0
        %1484 = vperm.xlu0 %1483, %v1453
        %v1485 = vpop.permute.xlu0 %1484
        %1486 = vset.pattern.permute.xlu0 0
        %1487 = vperm.xlu0 %1486, %v1454
        %v1488 = vpop.permute.xlu0 %1487
        %1489 = vset.pattern.permute.xlu0 0
        %1490 = vperm.xlu0 %1489, %v1455
        %v1491 = vpop.permute.xlu0 %1490
        %1492 = vset.pattern.permute.xlu0 0
        %1493 = vperm.xlu0 %1492, %v1456
        %v1494 = vpop.permute.xlu0 %1493
        %1495 = vset.pattern.permute.xlu0 0
        %1496 = vperm.xlu0 %1495, %v1457
        %v1497 = vpop.permute.xlu0 %1496
        %1498 = vset.pattern.permute.xlu0 0
        %1499 = vperm.xlu0 %1498, %v1458
        %v1500 = vpop.permute.xlu0 %1499
        %1501 = vset.pattern.permute.xlu0 0
        %1502 = vperm.xlu0 %1501, %v1459
        %v1503 = vpop.permute.xlu0 %1502
        %1504 = vset.pattern.permute.xlu0 0
        %1505 = vperm.xlu0 %1504, %v1460
        %v1506 = vpop.permute.xlu0 %1505
        %1507 = vset.pattern.permute.xlu0 0
        %1508 = vperm.xlu0 %1507, %v1461
        %v1509 = vpop.permute.xlu0 %1508
        %vm1510 = vcmp.eq.s32.totalorder %v1464, 1
        %vm1511 = vcmp.eq.s32.totalorder %v1467, 1
        %vm1512 = vcmp.eq.s32.totalorder %v1470, 1
        %vm1513 = vcmp.eq.s32.totalorder %v1473, 1
        %vm1514 = vcmp.eq.s32.totalorder %v1476, 1
        %vm1515 = vcmp.eq.s32.totalorder %v1479, 1
        %vm1516 = vcmp.eq.s32.totalorder %v1482, 1
        %vm1517 = vcmp.eq.s32.totalorder %v1485, 1
        %vm1518 = vcmp.eq.s32.totalorder %v1488, 1
        %vm1519 = vcmp.eq.s32.totalorder %v1491, 1
        %vm1520 = vcmp.eq.s32.totalorder %v1494, 1
        %vm1521 = vcmp.eq.s32.totalorder %v1497, 1
        %vm1522 = vcmp.eq.s32.totalorder %v1500, 1
        %vm1523 = vcmp.eq.s32.totalorder %v1503, 1
        %vm1524 = vcmp.eq.s32.totalorder %v1506, 1
        %vm1525 = vcmp.eq.s32.totalorder %v1509, 1
        %v1526 = vlaneseq
        %v1527 = vshrl.u32 %v1526, 7
        %v1528 = vsub.s32 3, %v1527
        %v1529 = vrot.slane %v889, %v1528
        %v1530 = vsel %vm1510, %v1529, %v1414
        %v1531 = vsel %vm1511, %v1529, %v1415
        %v1532 = vsel %vm1512, %v1529, %v1416
        %v1533 = vsel %vm1513, %v1529, %v1417
        %v1534 = vsel %vm1514, %v1529, %v1418
        %v1535 = vsel %vm1515, %v1529, %v1419
        %v1536 = vsel %vm1516, %v1529, %v1420
        %v1537 = vsel %vm1517, %v1529, %v1421
        %v1538 = vsel %vm1518, %v1529, %v1422
        %v1539 = vsel %vm1519, %v1529, %v1423
        %v1540 = vsel %vm1520, %v1529, %v1424
        %v1541 = vsel %vm1521, %v1529, %v1425
        %v1542 = vsel %vm1522, %v1529, %v1426
        %v1543 = vsel %vm1523, %v1529, %v1427
        %v1544 = vsel %vm1524, %v1529, %v1428
        %v1545 = vsel %vm1525, %v1529, %v1429
        %vm1546 = vcmp.eq.s32.totalorder %v890, 4
        %vm1547 = vcmp.eq.s32.totalorder %v891, 4
        %vm1548 = vcmp.eq.s32.totalorder %v892, 4
        %vm1549 = vcmp.eq.s32.totalorder %v893, 4
        %vm1550 = vcmp.eq.s32.totalorder %v894, 4
        %vm1551 = vcmp.eq.s32.totalorder %v895, 4
        %vm1552 = vcmp.eq.s32.totalorder %v896, 4
        %vm1553 = vcmp.eq.s32.totalorder %v897, 4
        %vm1554 = vcmp.eq.s32.totalorder %v898, 4
        %vm1555 = vcmp.eq.s32.totalorder %v899, 4
        %vm1556 = vcmp.eq.s32.totalorder %v900, 4
        %vm1557 = vcmp.eq.s32.totalorder %v901, 4
        %vm1558 = vcmp.eq.s32.totalorder %v902, 4
        %vm1559 = vcmp.eq.s32.totalorder %v903, 4
        %vm1560 = vcmp.eq.s32.totalorder %v904, 4
        %vm1561 = vcmp.eq.s32.totalorder %v905, 4
        %v1562 = vsel %vm1546, 1, 0
        %v1563 = vsel %vm1547, 1, 0
        %v1564 = vsel %vm1548, 1, 0
        %v1565 = vsel %vm1549, 1, 0
        %v1566 = vsel %vm1550, 1, 0
        %v1567 = vsel %vm1551, 1, 0
        %v1568 = vsel %vm1552, 1, 0
        %v1569 = vsel %vm1553, 1, 0
        %v1570 = vsel %vm1554, 1, 0
        %v1571 = vsel %vm1555, 1, 0
        %v1572 = vsel %vm1556, 1, 0
        %v1573 = vsel %vm1557, 1, 0
        %v1574 = vsel %vm1558, 1, 0
        %v1575 = vsel %vm1559, 1, 0
        %v1576 = vsel %vm1560, 1, 0
        %v1577 = vsel %vm1561, 1, 0
        %1578 = vset.pattern.permute.xlu0 0
        %1579 = vperm.xlu0 %1578, %v1562
        %v1580 = vpop.permute.xlu0 %1579
        %1581 = vset.pattern.permute.xlu0 0
        %1582 = vperm.xlu0 %1581, %v1563
        %v1583 = vpop.permute.xlu0 %1582
        %1584 = vset.pattern.permute.xlu0 0
        %1585 = vperm.xlu0 %1584, %v1564
        %v1586 = vpop.permute.xlu0 %1585
        %1587 = vset.pattern.permute.xlu0 0
        %1588 = vperm.xlu0 %1587, %v1565
        %v1589 = vpop.permute.xlu0 %1588
        %1590 = vset.pattern.permute.xlu0 0
        %1591 = vperm.xlu0 %1590, %v1566
        %v1592 = vpop.permute.xlu0 %1591
        %1593 = vset.pattern.permute.xlu0 0
        %1594 = vperm.xlu0 %1593, %v1567
        %v1595 = vpop.permute.xlu0 %1594
        %1596 = vset.pattern.permute.xlu0 0
        %1597 = vperm.xlu0 %1596, %v1568
        %v1598 = vpop.permute.xlu0 %1597
        %1599 = vset.pattern.permute.xlu0 0
        %1600 = vperm.xlu0 %1599, %v1569
        %v1601 = vpop.permute.xlu0 %1600
        %1602 = vset.pattern.permute.xlu0 0
        %1603 = vperm.xlu0 %1602, %v1570
        %v1604 = vpop.permute.xlu0 %1603
        %1605 = vset.pattern.permute.xlu0 0
        %1606 = vperm.xlu0 %1605, %v1571
        %v1607 = vpop.permute.xlu0 %1606
        %1608 = vset.pattern.permute.xlu0 0
        %1609 = vperm.xlu0 %1608, %v1572
        %v1610 = vpop.permute.xlu0 %1609
        %1611 = vset.pattern.permute.xlu0 0
        %1612 = vperm.xlu0 %1611, %v1573
        %v1613 = vpop.permute.xlu0 %1612
        %1614 = vset.pattern.permute.xlu0 0
        %1615 = vperm.xlu0 %1614, %v1574
        %v1616 = vpop.permute.xlu0 %1615
        %1617 = vset.pattern.permute.xlu0 0
        %1618 = vperm.xlu0 %1617, %v1575
        %v1619 = vpop.permute.xlu0 %1618
        %1620 = vset.pattern.permute.xlu0 0
        %1621 = vperm.xlu0 %1620, %v1576
        %v1622 = vpop.permute.xlu0 %1621
        %1623 = vset.pattern.permute.xlu0 0
        %1624 = vperm.xlu0 %1623, %v1577
        %v1625 = vpop.permute.xlu0 %1624
        %vm1626 = vcmp.eq.s32.totalorder %v1580, 1
        %vm1627 = vcmp.eq.s32.totalorder %v1583, 1
        %vm1628 = vcmp.eq.s32.totalorder %v1586, 1
        %vm1629 = vcmp.eq.s32.totalorder %v1589, 1
        %vm1630 = vcmp.eq.s32.totalorder %v1592, 1
        %vm1631 = vcmp.eq.s32.totalorder %v1595, 1
        %vm1632 = vcmp.eq.s32.totalorder %v1598, 1
        %vm1633 = vcmp.eq.s32.totalorder %v1601, 1
        %vm1634 = vcmp.eq.s32.totalorder %v1604, 1
        %vm1635 = vcmp.eq.s32.totalorder %v1607, 1
        %vm1636 = vcmp.eq.s32.totalorder %v1610, 1
        %vm1637 = vcmp.eq.s32.totalorder %v1613, 1
        %vm1638 = vcmp.eq.s32.totalorder %v1616, 1
        %vm1639 = vcmp.eq.s32.totalorder %v1619, 1
        %vm1640 = vcmp.eq.s32.totalorder %v1622, 1
        %vm1641 = vcmp.eq.s32.totalorder %v1625, 1
        %v1642 = vlaneseq
        %v1643 = vshrl.u32 %v1642, 7
        %v1644 = vsub.s32 4, %v1643
        %v1645 = vrot.slane %v889, %v1644
        %v1646 = vsel %vm1626, %v1645, %v1530
        %v1647 = vsel %vm1627, %v1645, %v1531
        %v1648 = vsel %vm1628, %v1645, %v1532
        %v1649 = vsel %vm1629, %v1645, %v1533
        %v1650 = vsel %vm1630, %v1645, %v1534
        %v1651 = vsel %vm1631, %v1645, %v1535
        %v1652 = vsel %vm1632, %v1645, %v1536
        %v1653 = vsel %vm1633, %v1645, %v1537
        %v1654 = vsel %vm1634, %v1645, %v1538
        %v1655 = vsel %vm1635, %v1645, %v1539
        %v1656 = vsel %vm1636, %v1645, %v1540
        %v1657 = vsel %vm1637, %v1645, %v1541
        %v1658 = vsel %vm1638, %v1645, %v1542
        %v1659 = vsel %vm1639, %v1645, %v1543
        %v1660 = vsel %vm1640, %v1645, %v1544
        %v1661 = vsel %vm1641, %v1645, %v1545
        %vm1662 = vcmp.eq.s32.totalorder %v890, 5
        %vm1663 = vcmp.eq.s32.totalorder %v891, 5
        %vm1664 = vcmp.eq.s32.totalorder %v892, 5
        %vm1665 = vcmp.eq.s32.totalorder %v893, 5
        %vm1666 = vcmp.eq.s32.totalorder %v894, 5
        %vm1667 = vcmp.eq.s32.totalorder %v895, 5
        %vm1668 = vcmp.eq.s32.totalorder %v896, 5
        %vm1669 = vcmp.eq.s32.totalorder %v897, 5
        %vm1670 = vcmp.eq.s32.totalorder %v898, 5
        %vm1671 = vcmp.eq.s32.totalorder %v899, 5
        %vm1672 = vcmp.eq.s32.totalorder %v900, 5
        %vm1673 = vcmp.eq.s32.totalorder %v901, 5
        %vm1674 = vcmp.eq.s32.totalorder %v902, 5
        %vm1675 = vcmp.eq.s32.totalorder %v903, 5
        %vm1676 = vcmp.eq.s32.totalorder %v904, 5
        %vm1677 = vcmp.eq.s32.totalorder %v905, 5
        %v1678 = vsel %vm1662, 1, 0
        %v1679 = vsel %vm1663, 1, 0
        %v1680 = vsel %vm1664, 1, 0
        %v1681 = vsel %vm1665, 1, 0
        %v1682 = vsel %vm1666, 1, 0
        %v1683 = vsel %vm1667, 1, 0
        %v1684 = vsel %vm1668, 1, 0
        %v1685 = vsel %vm1669, 1, 0
        %v1686 = vsel %vm1670, 1, 0
        %v1687 = vsel %vm1671, 1, 0
        %v1688 = vsel %vm1672, 1, 0
        %v1689 = vsel %vm1673, 1, 0
        %v1690 = vsel %vm1674, 1, 0
        %v1691 = vsel %vm1675, 1, 0
        %v1692 = vsel %vm1676, 1, 0
        %v1693 = vsel %vm1677, 1, 0
        %1694 = vset.pattern.permute.xlu0 0
        %1695 = vperm.xlu0 %1694, %v1678
        %v1696 = vpop.permute.xlu0 %1695
        %1697 = vset.pattern.permute.xlu0 0
        %1698 = vperm.xlu0 %1697, %v1679
        %v1699 = vpop.permute.xlu0 %1698
        %1700 = vset.pattern.permute.xlu0 0
        %1701 = vperm.xlu0 %1700, %v1680
        %v1702 = vpop.permute.xlu0 %1701
        %1703 = vset.pattern.permute.xlu0 0
        %1704 = vperm.xlu0 %1703, %v1681
        %v1705 = vpop.permute.xlu0 %1704
        %1706 = vset.pattern.permute.xlu0 0
        %1707 = vperm.xlu0 %1706, %v1682
        %v1708 = vpop.permute.xlu0 %1707
        %1709 = vset.pattern.permute.xlu0 0
        %1710 = vperm.xlu0 %1709, %v1683
        %v1711 = vpop.permute.xlu0 %1710
        %1712 = vset.pattern.permute.xlu0 0
        %1713 = vperm.xlu0 %1712, %v1684
        %v1714 = vpop.permute.xlu0 %1713
        %1715 = vset.pattern.permute.xlu0 0
        %1716 = vperm.xlu0 %1715, %v1685
        %v1717 = vpop.permute.xlu0 %1716
        %1718 = vset.pattern.permute.xlu0 0
        %1719 = vperm.xlu0 %1718, %v1686
        %v1720 = vpop.permute.xlu0 %1719
        %1721 = vset.pattern.permute.xlu0 0
        %1722 = vperm.xlu0 %1721, %v1687
        %v1723 = vpop.permute.xlu0 %1722
        %1724 = vset.pattern.permute.xlu0 0
        %1725 = vperm.xlu0 %1724, %v1688
        %v1726 = vpop.permute.xlu0 %1725
        %1727 = vset.pattern.permute.xlu0 0
        %1728 = vperm.xlu0 %1727, %v1689
        %v1729 = vpop.permute.xlu0 %1728
        %1730 = vset.pattern.permute.xlu0 0
        %1731 = vperm.xlu0 %1730, %v1690
        %v1732 = vpop.permute.xlu0 %1731
        %1733 = vset.pattern.permute.xlu0 0
        %1734 = vperm.xlu0 %1733, %v1691
        %v1735 = vpop.permute.xlu0 %1734
        %1736 = vset.pattern.permute.xlu0 0
        %1737 = vperm.xlu0 %1736, %v1692
        %v1738 = vpop.permute.xlu0 %1737
        %1739 = vset.pattern.permute.xlu0 0
        %1740 = vperm.xlu0 %1739, %v1693
        %v1741 = vpop.permute.xlu0 %1740
        %vm1742 = vcmp.eq.s32.totalorder %v1696, 1
        %vm1743 = vcmp.eq.s32.totalorder %v1699, 1
        %vm1744 = vcmp.eq.s32.totalorder %v1702, 1
        %vm1745 = vcmp.eq.s32.totalorder %v1705, 1
        %vm1746 = vcmp.eq.s32.totalorder %v1708, 1
        %vm1747 = vcmp.eq.s32.totalorder %v1711, 1
        %vm1748 = vcmp.eq.s32.totalorder %v1714, 1
        %vm1749 = vcmp.eq.s32.totalorder %v1717, 1
        %vm1750 = vcmp.eq.s32.totalorder %v1720, 1
        %vm1751 = vcmp.eq.s32.totalorder %v1723, 1
        %vm1752 = vcmp.eq.s32.totalorder %v1726, 1
        %vm1753 = vcmp.eq.s32.totalorder %v1729, 1
        %vm1754 = vcmp.eq.s32.totalorder %v1732, 1
        %vm1755 = vcmp.eq.s32.totalorder %v1735, 1
        %vm1756 = vcmp.eq.s32.totalorder %v1738, 1
        %vm1757 = vcmp.eq.s32.totalorder %v1741, 1
        %v1758 = vlaneseq
        %v1759 = vshrl.u32 %v1758, 7
        %v1760 = vsub.s32 5, %v1759
        %v1761 = vrot.slane %v889, %v1760
        %v1762 = vsel %vm1742, %v1761, %v1646
        %v1763 = vsel %vm1743, %v1761, %v1647
        %v1764 = vsel %vm1744, %v1761, %v1648
        %v1765 = vsel %vm1745, %v1761, %v1649
        %v1766 = vsel %vm1746, %v1761, %v1650
        %v1767 = vsel %vm1747, %v1761, %v1651
        %v1768 = vsel %vm1748, %v1761, %v1652
        %v1769 = vsel %vm1749, %v1761, %v1653
        %v1770 = vsel %vm1750, %v1761, %v1654
        %v1771 = vsel %vm1751, %v1761, %v1655
        %v1772 = vsel %vm1752, %v1761, %v1656
        %v1773 = vsel %vm1753, %v1761, %v1657
        %v1774 = vsel %vm1754, %v1761, %v1658
        %v1775 = vsel %vm1755, %v1761, %v1659
        %v1776 = vsel %vm1756, %v1761, %v1660
        %v1777 = vsel %vm1757, %v1761, %v1661
        %vm1778 = vcmp.eq.s32.totalorder %v890, 6
        %vm1779 = vcmp.eq.s32.totalorder %v891, 6
        %vm1780 = vcmp.eq.s32.totalorder %v892, 6
        %vm1781 = vcmp.eq.s32.totalorder %v893, 6
        %vm1782 = vcmp.eq.s32.totalorder %v894, 6
        %vm1783 = vcmp.eq.s32.totalorder %v895, 6
        %vm1784 = vcmp.eq.s32.totalorder %v896, 6
        %vm1785 = vcmp.eq.s32.totalorder %v897, 6
        %vm1786 = vcmp.eq.s32.totalorder %v898, 6
        %vm1787 = vcmp.eq.s32.totalorder %v899, 6
        %vm1788 = vcmp.eq.s32.totalorder %v900, 6
        %vm1789 = vcmp.eq.s32.totalorder %v901, 6
        %vm1790 = vcmp.eq.s32.totalorder %v902, 6
        %vm1791 = vcmp.eq.s32.totalorder %v903, 6
        %vm1792 = vcmp.eq.s32.totalorder %v904, 6
        %vm1793 = vcmp.eq.s32.totalorder %v905, 6
        %v1794 = vsel %vm1778, 1, 0
        %v1795 = vsel %vm1779, 1, 0
        %v1796 = vsel %vm1780, 1, 0
        %v1797 = vsel %vm1781, 1, 0
        %v1798 = vsel %vm1782, 1, 0
        %v1799 = vsel %vm1783, 1, 0
        %v1800 = vsel %vm1784, 1, 0
        %v1801 = vsel %vm1785, 1, 0
        %v1802 = vsel %vm1786, 1, 0
        %v1803 = vsel %vm1787, 1, 0
        %v1804 = vsel %vm1788, 1, 0
        %v1805 = vsel %vm1789, 1, 0
        %v1806 = vsel %vm1790, 1, 0
        %v1807 = vsel %vm1791, 1, 0
        %v1808 = vsel %vm1792, 1, 0
        %v1809 = vsel %vm1793, 1, 0
        %1810 = vset.pattern.permute.xlu0 0
        %1811 = vperm.xlu0 %1810, %v1794
        %v1812 = vpop.permute.xlu0 %1811
        %1813 = vset.pattern.permute.xlu0 0
        %1814 = vperm.xlu0 %1813, %v1795
        %v1815 = vpop.permute.xlu0 %1814
        %1816 = vset.pattern.permute.xlu0 0
        %1817 = vperm.xlu0 %1816, %v1796
        %v1818 = vpop.permute.xlu0 %1817
        %1819 = vset.pattern.permute.xlu0 0
        %1820 = vperm.xlu0 %1819, %v1797
        %v1821 = vpop.permute.xlu0 %1820
        %1822 = vset.pattern.permute.xlu0 0
        %1823 = vperm.xlu0 %1822, %v1798
        %v1824 = vpop.permute.xlu0 %1823
        %1825 = vset.pattern.permute.xlu0 0
        %1826 = vperm.xlu0 %1825, %v1799
        %v1827 = vpop.permute.xlu0 %1826
        %1828 = vset.pattern.permute.xlu0 0
        %1829 = vperm.xlu0 %1828, %v1800
        %v1830 = vpop.permute.xlu0 %1829
        %1831 = vset.pattern.permute.xlu0 0
        %1832 = vperm.xlu0 %1831, %v1801
        %v1833 = vpop.permute.xlu0 %1832
        %1834 = vset.pattern.permute.xlu0 0
        %1835 = vperm.xlu0 %1834, %v1802
        %v1836 = vpop.permute.xlu0 %1835
        %1837 = vset.pattern.permute.xlu0 0
        %1838 = vperm.xlu0 %1837, %v1803
        %v1839 = vpop.permute.xlu0 %1838
        %1840 = vset.pattern.permute.xlu0 0
        %1841 = vperm.xlu0 %1840, %v1804
        %v1842 = vpop.permute.xlu0 %1841
        %1843 = vset.pattern.permute.xlu0 0
        %1844 = vperm.xlu0 %1843, %v1805
        %v1845 = vpop.permute.xlu0 %1844
        %1846 = vset.pattern.permute.xlu0 0
        %1847 = vperm.xlu0 %1846, %v1806
        %v1848 = vpop.permute.xlu0 %1847
        %1849 = vset.pattern.permute.xlu0 0
        %1850 = vperm.xlu0 %1849, %v1807
        %v1851 = vpop.permute.xlu0 %1850
        %1852 = vset.pattern.permute.xlu0 0
        %1853 = vperm.xlu0 %1852, %v1808
        %v1854 = vpop.permute.xlu0 %1853
        %1855 = vset.pattern.permute.xlu0 0
        %1856 = vperm.xlu0 %1855, %v1809
        %v1857 = vpop.permute.xlu0 %1856
        %vm1858 = vcmp.eq.s32.totalorder %v1812, 1
        %vm1859 = vcmp.eq.s32.totalorder %v1815, 1
        %vm1860 = vcmp.eq.s32.totalorder %v1818, 1
        %vm1861 = vcmp.eq.s32.totalorder %v1821, 1
        %vm1862 = vcmp.eq.s32.totalorder %v1824, 1
        %vm1863 = vcmp.eq.s32.totalorder %v1827, 1
        %vm1864 = vcmp.eq.s32.totalorder %v1830, 1
        %vm1865 = vcmp.eq.s32.totalorder %v1833, 1
        %vm1866 = vcmp.eq.s32.totalorder %v1836, 1
        %vm1867 = vcmp.eq.s32.totalorder %v1839, 1
        %vm1868 = vcmp.eq.s32.totalorder %v1842, 1
        %vm1869 = vcmp.eq.s32.totalorder %v1845, 1
        %vm1870 = vcmp.eq.s32.totalorder %v1848, 1
        %vm1871 = vcmp.eq.s32.totalorder %v1851, 1
        %vm1872 = vcmp.eq.s32.totalorder %v1854, 1
        %vm1873 = vcmp.eq.s32.totalorder %v1857, 1
        %v1874 = vlaneseq
        %v1875 = vshrl.u32 %v1874, 7
        %v1876 = vsub.s32 6, %v1875
        %v1877 = vrot.slane %v889, %v1876
        %v1878 = vsel %vm1858, %v1877, %v1762
        %v1879 = vsel %vm1859, %v1877, %v1763
        %v1880 = vsel %vm1860, %v1877, %v1764
        %v1881 = vsel %vm1861, %v1877, %v1765
        %v1882 = vsel %vm1862, %v1877, %v1766
        %v1883 = vsel %vm1863, %v1877, %v1767
        %v1884 = vsel %vm1864, %v1877, %v1768
        %v1885 = vsel %vm1865, %v1877, %v1769
        %v1886 = vsel %vm1866, %v1877, %v1770
        %v1887 = vsel %vm1867, %v1877, %v1771
        %v1888 = vsel %vm1868, %v1877, %v1772
        %v1889 = vsel %vm1869, %v1877, %v1773
        %v1890 = vsel %vm1870, %v1877, %v1774
        %v1891 = vsel %vm1871, %v1877, %v1775
        %v1892 = vsel %vm1872, %v1877, %v1776
        %v1893 = vsel %vm1873, %v1877, %v1777
        %vm1894 = vcmp.eq.s32.totalorder %v890, 7
        %vm1895 = vcmp.eq.s32.totalorder %v891, 7
        %vm1896 = vcmp.eq.s32.totalorder %v892, 7
        %vm1897 = vcmp.eq.s32.totalorder %v893, 7
        %vm1898 = vcmp.eq.s32.totalorder %v894, 7
        %vm1899 = vcmp.eq.s32.totalorder %v895, 7
        %vm1900 = vcmp.eq.s32.totalorder %v896, 7
        %vm1901 = vcmp.eq.s32.totalorder %v897, 7
        %vm1902 = vcmp.eq.s32.totalorder %v898, 7
        %vm1903 = vcmp.eq.s32.totalorder %v899, 7
        %vm1904 = vcmp.eq.s32.totalorder %v900, 7
        %vm1905 = vcmp.eq.s32.totalorder %v901, 7
        %vm1906 = vcmp.eq.s32.totalorder %v902, 7
        %vm1907 = vcmp.eq.s32.totalorder %v903, 7
        %vm1908 = vcmp.eq.s32.totalorder %v904, 7
        %vm1909 = vcmp.eq.s32.totalorder %v905, 7
        %v1910 = vsel %vm1894, 1, 0
        %v1911 = vsel %vm1895, 1, 0
        %v1912 = vsel %vm1896, 1, 0
        %v1913 = vsel %vm1897, 1, 0
        %v1914 = vsel %vm1898, 1, 0
        %v1915 = vsel %vm1899, 1, 0
        %v1916 = vsel %vm1900, 1, 0
        %v1917 = vsel %vm1901, 1, 0
        %v1918 = vsel %vm1902, 1, 0
        %v1919 = vsel %vm1903, 1, 0
        %v1920 = vsel %vm1904, 1, 0
        %v1921 = vsel %vm1905, 1, 0
        %v1922 = vsel %vm1906, 1, 0
        %v1923 = vsel %vm1907, 1, 0
        %v1924 = vsel %vm1908, 1, 0
        %v1925 = vsel %vm1909, 1, 0
        %1926 = vset.pattern.permute.xlu0 0
        %1927 = vperm.xlu0 %1926, %v1910
        %v1928 = vpop.permute.xlu0 %1927
        %1929 = vset.pattern.permute.xlu0 0
        %1930 = vperm.xlu0 %1929, %v1911
        %v1931 = vpop.permute.xlu0 %1930
        %1932 = vset.pattern.permute.xlu0 0
        %1933 = vperm.xlu0 %1932, %v1912
        %v1934 = vpop.permute.xlu0 %1933
        %1935 = vset.pattern.permute.xlu0 0
        %1936 = vperm.xlu0 %1935, %v1913
        %v1937 = vpop.permute.xlu0 %1936
        %1938 = vset.pattern.permute.xlu0 0
        %1939 = vperm.xlu0 %1938, %v1914
        %v1940 = vpop.permute.xlu0 %1939
        %1941 = vset.pattern.permute.xlu0 0
        %1942 = vperm.xlu0 %1941, %v1915
        %v1943 = vpop.permute.xlu0 %1942
        %1944 = vset.pattern.permute.xlu0 0
        %1945 = vperm.xlu0 %1944, %v1916
        %v1946 = vpop.permute.xlu0 %1945
        %1947 = vset.pattern.permute.xlu0 0
        %1948 = vperm.xlu0 %1947, %v1917
        %v1949 = vpop.permute.xlu0 %1948
        %1950 = vset.pattern.permute.xlu0 0
        %1951 = vperm.xlu0 %1950, %v1918
        %v1952 = vpop.permute.xlu0 %1951
        %1953 = vset.pattern.permute.xlu0 0
        %1954 = vperm.xlu0 %1953, %v1919
        %v1955 = vpop.permute.xlu0 %1954
        %1956 = vset.pattern.permute.xlu0 0
        %1957 = vperm.xlu0 %1956, %v1920
        %v1958 = vpop.permute.xlu0 %1957
        %1959 = vset.pattern.permute.xlu0 0
        %1960 = vperm.xlu0 %1959, %v1921
        %v1961 = vpop.permute.xlu0 %1960
        %1962 = vset.pattern.permute.xlu0 0
        %1963 = vperm.xlu0 %1962, %v1922
        %v1964 = vpop.permute.xlu0 %1963
        %1965 = vset.pattern.permute.xlu0 0
        %1966 = vperm.xlu0 %1965, %v1923
        %v1967 = vpop.permute.xlu0 %1966
        %1968 = vset.pattern.permute.xlu0 0
        %1969 = vperm.xlu0 %1968, %v1924
        %v1970 = vpop.permute.xlu0 %1969
        %1971 = vset.pattern.permute.xlu0 0
        %1972 = vperm.xlu0 %1971, %v1925
        %v1973 = vpop.permute.xlu0 %1972
        %vm1974 = vcmp.eq.s32.totalorder %v1928, 1
        %vm1975 = vcmp.eq.s32.totalorder %v1931, 1
        %vm1976 = vcmp.eq.s32.totalorder %v1934, 1
        %vm1977 = vcmp.eq.s32.totalorder %v1937, 1
        %vm1978 = vcmp.eq.s32.totalorder %v1940, 1
        %vm1979 = vcmp.eq.s32.totalorder %v1943, 1
        %vm1980 = vcmp.eq.s32.totalorder %v1946, 1
        %vm1981 = vcmp.eq.s32.totalorder %v1949, 1
        %vm1982 = vcmp.eq.s32.totalorder %v1952, 1
        %vm1983 = vcmp.eq.s32.totalorder %v1955, 1
        %vm1984 = vcmp.eq.s32.totalorder %v1958, 1
        %vm1985 = vcmp.eq.s32.totalorder %v1961, 1
        %vm1986 = vcmp.eq.s32.totalorder %v1964, 1
        %vm1987 = vcmp.eq.s32.totalorder %v1967, 1
        %vm1988 = vcmp.eq.s32.totalorder %v1970, 1
        %vm1989 = vcmp.eq.s32.totalorder %v1973, 1
        %v1990 = vlaneseq
        %v1991 = vshrl.u32 %v1990, 7
        %v1992 = vsub.s32 7, %v1991
        %v1993 = vrot.slane %v889, %v1992
        %v1994 = vsel %vm1974, %v1993, %v1878
        %v1995 = vsel %vm1975, %v1993, %v1879
        %v1996 = vsel %vm1976, %v1993, %v1880
        %v1997 = vsel %vm1977, %v1993, %v1881
        %v1998 = vsel %vm1978, %v1993, %v1882
        %v1999 = vsel %vm1979, %v1993, %v1883
        %v2000 = vsel %vm1980, %v1993, %v1884
        %v2001 = vsel %vm1981, %v1993, %v1885
        %v2002 = vsel %vm1982, %v1993, %v1886
        %v2003 = vsel %vm1983, %v1993, %v1887
        %v2004 = vsel %vm1984, %v1993, %v1888
        %v2005 = vsel %vm1985, %v1993, %v1889
        %v2006 = vsel %vm1986, %v1993, %v1890
        %v2007 = vsel %vm1987, %v1993, %v1891
        %v2008 = vsel %vm1988, %v1993, %v1892
        %v2009 = vsel %vm1989, %v1993, %v1893
        %v2010 = vadd.f32 %v873, %v1994
        %v2011 = vadd.f32 %v874, %v1995
        %v2012 = vadd.f32 %v875, %v1996
        %v2013 = vadd.f32 %v876, %v1997
        %v2014 = vadd.f32 %v877, %v1998
        %v2015 = vadd.f32 %v878, %v1999
        %v2016 = vadd.f32 %v879, %v2000
        %v2017 = vadd.f32 %v880, %v2001
        %v2018 = vadd.f32 %v881, %v2002
        %v2019 = vadd.f32 %v882, %v2003
        %v2020 = vadd.f32 %v883, %v2004
        %v2021 = vadd.f32 %v884, %v2005
        %v2022 = vadd.f32 %v885, %v2006
        %v2023 = vadd.f32 %v886, %v2007
        %v2024 = vadd.f32 %v887, %v2008
        %v2025 = vadd.f32 %v888, %v2009
        %v2026 = vpack.c.bf16 %v2011, %v2010
        %v2027 = vpack.c.bf16 %v2013, %v2012
        %v2028 = vpack.c.bf16 %v2015, %v2014
        %v2029 = vpack.c.bf16 %v2017, %v2016
        %v2030 = vpack.c.bf16 %v2019, %v2018
        %v2031 = vpack.c.bf16 %v2021, %v2020
        %v2032 = vpack.c.bf16 %v2023, %v2022
        %v2033 = vpack.c.bf16 %v2025, %v2024
        %v2034 = vld [vmem:[%s816] sm:$0xf]
        %v2035 = vld [vmem:[%s816 + $0x4] sm:$0xf]
        %v2036 = vld [vmem:[%s816 + $0x8] sm:$0xf]
        %v2037 = vld [vmem:[%s816 + $0xc] sm:$0xf]
        %v2038 = vld [vmem:[%s816 + $0x10] sm:$0xf]
        %v2039 = vld [vmem:[%s816 + $0x14] sm:$0xf]
        %v2040 = vld [vmem:[%s816 + $0x18] sm:$0xf]
        %v2041 = vld [vmem:[%s816 + $0x1c] sm:$0xf]
        %v2042 = vld [vmem:[%s816 + $0x20] sm:$0xf]
        %v2043 = vld [vmem:[%s816 + $0x24] sm:$0xf]
        %v2044 = vld [vmem:[%s816 + $0x28] sm:$0xf]
        %v2045 = vld [vmem:[%s816 + $0x2c] sm:$0xf]
        %v2046 = vld [vmem:[%s816 + $0x30] sm:$0xf]
        %v2047 = vld [vmem:[%s816 + $0x34] sm:$0xf]
        %v2048 = vld [vmem:[%s816 + $0x38] sm:$0xf]
        %v2049 = vld [vmem:[%s816 + $0x3c] sm:$0xf]
        %v2050 = vunpack.c.l.bf16 %v2034
        %v2051 = vunpack.c.l.bf16 %v2035
        %v2052 = vunpack.c.l.bf16 %v2036
        %v2053 = vunpack.c.l.bf16 %v2037
        %v2054 = vunpack.c.l.bf16 %v2038
        %v2055 = vunpack.c.l.bf16 %v2039
        %v2056 = vunpack.c.l.bf16 %v2040
        %v2057 = vunpack.c.l.bf16 %v2041
        %v2058 = vunpack.c.l.bf16 %v2042
        %v2059 = vunpack.c.l.bf16 %v2043
        %v2060 = vunpack.c.l.bf16 %v2044
        %v2061 = vunpack.c.l.bf16 %v2045
        %v2062 = vunpack.c.l.bf16 %v2046
        %v2063 = vunpack.c.l.bf16 %v2047
        %v2064 = vunpack.c.l.bf16 %v2048
        %v2065 = vunpack.c.l.bf16 %v2049
        %2066 = vmatprep.subr.bf16.mxu0 0
        %2067 = vmatpush1.bf16.msra.mxu0 %v2026
        %2068 = vmatprep.subr.bf16.mxu0 0
        %2069 = vmatpush1.bf16.msra.mxu0 %v2027
        %2070 = vmatprep.subr.bf16.mxu0 0
        %2071 = vmatpush1.bf16.msra.mxu0 %v2028
        %2072 = vmatprep.subr.bf16.mxu0 0
        %2073 = vmatpush1.bf16.msra.mxu0 %v2029
        %2074 = vmatprep.subr.bf16.mxu0 0
        %2075 = vmatpush1.bf16.msra.mxu0 %v2030
        %2076 = vmatprep.subr.bf16.mxu0 0
        %2077 = vmatpush1.bf16.msra.mxu0 %v2031
        %2078 = vmatprep.subr.bf16.mxu0 0
        %2079 = vmatpush1.bf16.msra.mxu0 %v2032
        %2080 = vmatprep.subr.bf16.mxu0 0
        %2081 = vmatpush1.bf16.msra.mxu0 %v2033
        %2082 = vmatprep.subr.bf16.mxu0 0
        %2083 = vmatpush1.bf16.msra.mxu0 0
        %2084 = vmatprep.subr.bf16.mxu0 0
        %2085 = vmatpush1.bf16.msra.mxu0 0
        %2086 = vmatprep.subr.bf16.mxu0 0
        %2087 = vmatpush1.bf16.msra.mxu0 0
        %2088 = vmatprep.subr.bf16.mxu0 0
        %2089 = vmatpush1.bf16.msra.mxu0 0
        %2090 = vmatprep.subr.bf16.mxu0 0
        %2091 = vmatpush1.bf16.msra.mxu0 0
        %2092 = vmatprep.subr.bf16.mxu0 0
        %2093 = vmatpush1.bf16.msra.mxu0 0
        %2094 = vmatprep.subr.bf16.mxu0 0
        %2095 = vmatpush1.bf16.msra.mxu0 0
        %2096 = vmatprep.subr.bf16.mxu0 0
        %2097 = vmatpush1.bf16.msra.mxu0 0
        %2098 = vmatprep.mubr.bf16.mxu0 0
        %2099 = vmatmul.mubr.bf16.gmra.mrb[0].mxu0 %v1006
        %v2100 = vpop.f32.mrb[0].mxu0
        %v2101 = vadd.f32 %v2050, %v2100
        %v2102 = vpop.f32.mrb[0].mxu0
        %v2103 = vpop.f32.mrb[0].mxu0
        %v2104 = vadd.f32 %v2051, %v2103
        %v2105 = vpop.f32.mrb[0].mxu0
        %2106 = vmatprep.mubr.bf16.mxu0 0
        %2107 = vmatmul.mubr.bf16.gmra.mrb[0].mxu0 %v1007
        %v2108 = vpop.f32.mrb[0].mxu0
        %v2109 = vadd.f32 %v2052, %v2108
        %v2110 = vpop.f32.mrb[0].mxu0
        %v2111 = vpop.f32.mrb[0].mxu0
        %v2112 = vadd.f32 %v2053, %v2111
        %v2113 = vpop.f32.mrb[0].mxu0
        %2114 = vmatprep.mubr.bf16.mxu0 0
        %2115 = vmatmul.mubr.bf16.gmra.mrb[0].mxu0 %v1008
        %v2116 = vpop.f32.mrb[0].mxu0
        %v2117 = vadd.f32 %v2054, %v2116
        %v2118 = vpop.f32.mrb[0].mxu0
        %v2119 = vpop.f32.mrb[0].mxu0
        %v2120 = vadd.f32 %v2055, %v2119
        %v2121 = vpop.f32.mrb[0].mxu0
        %2122 = vmatprep.mubr.bf16.mxu0 0
        %2123 = vmatmul.mubr.bf16.gmra.mrb[0].mxu0 %v1009
        %v2124 = vpop.f32.mrb[0].mxu0
        %v2125 = vadd.f32 %v2056, %v2124
        %v2126 = vpop.f32.mrb[0].mxu0
        %v2127 = vpop.f32.mrb[0].mxu0
        %v2128 = vadd.f32 %v2057, %v2127
        %v2129 = vpop.f32.mrb[0].mxu0
        %2130 = vmatprep.mubr.bf16.mxu0 0
        %2131 = vmatmul.mubr.bf16.gmra.mrb[0].mxu0 %v1010
        %v2132 = vpop.f32.mrb[0].mxu0
        %v2133 = vadd.f32 %v2058, %v2132
        %v2134 = vpop.f32.mrb[0].mxu0
        %v2135 = vpop.f32.mrb[0].mxu0
        %v2136 = vadd.f32 %v2059, %v2135
        %v2137 = vpop.f32.mrb[0].mxu0
        %2138 = vmatprep.mubr.bf16.mxu0 0
        %2139 = vmatmul.mubr.bf16.gmra.mrb[0].mxu0 %v1011
        %v2140 = vpop.f32.mrb[0].mxu0
        %v2141 = vadd.f32 %v2060, %v2140
        %v2142 = vpop.f32.mrb[0].mxu0
        %v2143 = vpop.f32.mrb[0].mxu0
        %v2144 = vadd.f32 %v2061, %v2143
        %v2145 = vpop.f32.mrb[0].mxu0
        %2146 = vmatprep.mubr.bf16.mxu0 0
        %2147 = vmatmul.mubr.bf16.gmra.mrb[0].mxu0 %v1012
        %v2148 = vpop.f32.mrb[0].mxu0
        %v2149 = vadd.f32 %v2062, %v2148
        %v2150 = vpop.f32.mrb[0].mxu0
        %v2151 = vpop.f32.mrb[0].mxu0
        %v2152 = vadd.f32 %v2063, %v2151
        %v2153 = vpop.f32.mrb[0].mxu0
        %2154 = vmatprep.mubr.bf16.mxu0 0
        %2155 = vmatmul.mubr.bf16.gmra.mrb[0].mxu0 %v1013
        %v2156 = vpop.f32.mrb[0].mxu0
        %v2157 = vadd.f32 %v2064, %v2156
        %v2158 = vpop.f32.mrb[0].mxu0
        %v2159 = vpop.f32.mrb[0].mxu0
        %v2160 = vadd.f32 %v2065, %v2159
        %v2161 = vpop.f32.mrb[0].mxu0
        %2162 = vdwg.mxu0
        %v2163 = vpack.c.bf16 %v2104, %v2101
        %v2164 = vpack.c.bf16 %v2112, %v2109
        %v2165 = vpack.c.bf16 %v2120, %v2117
        %v2166 = vpack.c.bf16 %v2128, %v2125
        %v2167 = vpack.c.bf16 %v2136, %v2133
        %v2168 = vpack.c.bf16 %v2144, %v2141
        %v2169 = vpack.c.bf16 %v2152, %v2149
        %v2170 = vpack.c.bf16 %v2160, %v2157
        %v2171 = vmax.bf16 %v2163, 0
        %v2172 = vmax.bf16 %v2164, 0
        %v2173 = vmax.bf16 %v2165, 0
        %v2174 = vmax.bf16 %v2166, 0
        %v2175 = vmax.bf16 %v2167, 0
        %v2176 = vmax.bf16 %v2168, 0
        %v2177 = vmax.bf16 %v2169, 0
        %v2178 = vmax.bf16 %v2170, 0
        %2179 = vmatprep.subr.bf16.mxu0 0
        %2180 = vmatpush1.bf16.msra.mxu0 %v2171
        %2181 = vmatprep.subr.bf16.mxu0 0
        %2182 = vmatpush1.bf16.msra.mxu0 %v2172
        %2183 = vmatprep.subr.bf16.mxu0 0
        %2184 = vmatpush1.bf16.msra.mxu0 %v2173
        %2185 = vmatprep.subr.bf16.mxu0 0
        %2186 = vmatpush1.bf16.msra.mxu0 %v2174
        %2187 = vmatprep.subr.bf16.mxu0 0
        %2188 = vmatpush1.bf16.msra.mxu0 %v2175
        %2189 = vmatprep.subr.bf16.mxu0 0
        %2190 = vmatpush1.bf16.msra.mxu0 %v2176
        %2191 = vmatprep.subr.bf16.mxu0 0
        %2192 = vmatpush1.bf16.msra.mxu0 %v2177
        %2193 = vmatprep.subr.bf16.mxu0 0
        %2194 = vmatpush1.bf16.msra.mxu0 %v2178
        %2195 = vmatprep.subr.bf16.mxu0 0
        %2196 = vmatpush1.bf16.msra.mxu0 0
        %2197 = vmatprep.subr.bf16.mxu0 0
        %2198 = vmatpush1.bf16.msra.mxu0 0
        %2199 = vmatprep.subr.bf16.mxu0 0
        %2200 = vmatpush1.bf16.msra.mxu0 0
        %2201 = vmatprep.subr.bf16.mxu0 0
        %2202 = vmatpush1.bf16.msra.mxu0 0
        %2203 = vmatprep.subr.bf16.mxu0 0
        %2204 = vmatpush1.bf16.msra.mxu0 0
        %2205 = vmatprep.subr.bf16.mxu0 0
        %2206 = vmatpush1.bf16.msra.mxu0 0
        %2207 = vmatprep.subr.bf16.mxu0 0
        %2208 = vmatpush1.bf16.msra.mxu0 0
        %2209 = vmatprep.subr.bf16.mxu0 0
        %2210 = vmatpush1.bf16.msra.mxu0 0
        %2211 = vmatprep.mubr.bf16.mxu0 0
        %2212 = vmatmul.mubr.bf16.gmra.mrb[0].mxu0 %v1067
        %v2213 = vpop.f32.mrb[0].mxu0
        %v2214 = vadd.f32 0.0, %v2213
        %v2215 = vpop.f32.mrb[0].mxu0
        %v2216 = vpop.f32.mrb[0].mxu0
        %v2217 = vadd.f32 0.0, %v2216
        %v2218 = vpop.f32.mrb[0].mxu0
        %2219 = vmatprep.mubr.bf16.mxu0 0
        %2220 = vmatmul.mubr.bf16.gmra.mrb[0].mxu0 %v1068
        %v2221 = vpop.f32.mrb[0].mxu0
        %v2222 = vadd.f32 0.0, %v2221
        %v2223 = vpop.f32.mrb[0].mxu0
        %v2224 = vpop.f32.mrb[0].mxu0
        %v2225 = vadd.f32 0.0, %v2224
        %v2226 = vpop.f32.mrb[0].mxu0
        %2227 = vmatprep.mubr.bf16.mxu0 0
        %2228 = vmatmul.mubr.bf16.gmra.mrb[0].mxu0 %v1069
        %v2229 = vpop.f32.mrb[0].mxu0
        %v2230 = vadd.f32 0.0, %v2229
        %v2231 = vpop.f32.mrb[0].mxu0
        %v2232 = vpop.f32.mrb[0].mxu0
        %v2233 = vadd.f32 0.0, %v2232
        %v2234 = vpop.f32.mrb[0].mxu0
        %2235 = vmatprep.mubr.bf16.mxu0 0
        %2236 = vmatmul.mubr.bf16.gmra.mrb[0].mxu0 %v1070
        %v2237 = vpop.f32.mrb[0].mxu0
        %v2238 = vadd.f32 0.0, %v2237
        %v2239 = vpop.f32.mrb[0].mxu0
        %v2240 = vpop.f32.mrb[0].mxu0
        %v2241 = vadd.f32 0.0, %v2240
        %v2242 = vpop.f32.mrb[0].mxu0
        %2243 = vmatprep.mubr.bf16.mxu0 0
        %2244 = vmatmul.mubr.bf16.gmra.mrb[0].mxu0 %v1071
        %v2245 = vpop.f32.mrb[0].mxu0
        %v2246 = vadd.f32 0.0, %v2245
        %v2247 = vpop.f32.mrb[0].mxu0
        %v2248 = vpop.f32.mrb[0].mxu0
        %v2249 = vadd.f32 0.0, %v2248
        %v2250 = vpop.f32.mrb[0].mxu0
        %2251 = vmatprep.mubr.bf16.mxu0 0
        %2252 = vmatmul.mubr.bf16.gmra.mrb[0].mxu0 %v1072
        %v2253 = vpop.f32.mrb[0].mxu0
        %v2254 = vadd.f32 0.0, %v2253
        %v2255 = vpop.f32.mrb[0].mxu0
        %v2256 = vpop.f32.mrb[0].mxu0
        %v2257 = vadd.f32 0.0, %v2256
        %v2258 = vpop.f32.mrb[0].mxu0
        %2259 = vmatprep.mubr.bf16.mxu0 0
        %2260 = vmatmul.mubr.bf16.gmra.mrb[0].mxu0 %v1073
        %v2261 = vpop.f32.mrb[0].mxu0
        %v2262 = vadd.f32 0.0, %v2261
        %v2263 = vpop.f32.mrb[0].mxu0
        %v2264 = vpop.f32.mrb[0].mxu0
        %v2265 = vadd.f32 0.0, %v2264
        %v2266 = vpop.f32.mrb[0].mxu0
        %2267 = vmatprep.mubr.bf16.mxu0 0
        %2268 = vmatmul.mubr.bf16.gmra.mrb[0].mxu0 %v1074
        %v2269 = vpop.f32.mrb[0].mxu0
        %v2270 = vadd.f32 0.0, %v2269
        %v2271 = vpop.f32.mrb[0].mxu0
        %v2272 = vpop.f32.mrb[0].mxu0
        %v2273 = vadd.f32 0.0, %v2272
        %v2274 = vpop.f32.mrb[0].mxu0
        %2275 = vdwg.mxu0
        %v2276 = vld [vmem:[%s819] sm:$0x1]
        %v2277 = vadd.f32 %v2276, 1.0
        %v2279 = vlaneseq
        %v2280 = vshrl.u32 %v2279, 7
        %v2281 = vsub.s32 0, %v2280
        %v2282 = vrot.slane %v2277, %v2281
        %v2284 = vmul.f32 %v2282, %v2010
        %v2285 = vmul.f32 %v2282, %v2011
        %v2286 = vmul.f32 %v2282, %v2012
        %v2287 = vmul.f32 %v2282, %v2013
        %v2288 = vmul.f32 %v2282, %v2014
        %v2289 = vmul.f32 %v2282, %v2015
        %v2290 = vmul.f32 %v2282, %v2016
        %v2291 = vmul.f32 %v2282, %v2017
        %v2292 = vmul.f32 %v2282, %v2018
        %v2293 = vmul.f32 %v2282, %v2019
        %v2294 = vmul.f32 %v2282, %v2020
        %v2295 = vmul.f32 %v2282, %v2021
        %v2296 = vmul.f32 %v2282, %v2022
        %v2297 = vmul.f32 %v2282, %v2023
        %v2298 = vmul.f32 %v2282, %v2024
        %v2299 = vmul.f32 %v2282, %v2025
        %v2300 = vadd.f32 %v2284, %v2214
        %v2301 = vadd.f32 %v2285, %v2217
        %v2302 = vadd.f32 %v2286, %v2222
        %v2303 = vadd.f32 %v2287, %v2225
        %v2304 = vadd.f32 %v2288, %v2230
        %v2305 = vadd.f32 %v2289, %v2233
        %v2306 = vadd.f32 %v2290, %v2238
        %v2307 = vadd.f32 %v2291, %v2241
        %v2308 = vadd.f32 %v2292, %v2246
        %v2309 = vadd.f32 %v2293, %v2249
        %v2310 = vadd.f32 %v2294, %v2254
        %v2311 = vadd.f32 %v2295, %v2257
        %v2312 = vadd.f32 %v2296, %v2262
        %v2313 = vadd.f32 %v2297, %v2265
        %v2314 = vadd.f32 %v2298, %v2270
        %v2315 = vadd.f32 %v2299, %v2273
        %v2316 = vpack.c.bf16 %v2301, %v2300
        %v2317 = vpack.c.bf16 %v2303, %v2302
        %v2318 = vpack.c.bf16 %v2305, %v2304
        %v2319 = vpack.c.bf16 %v2307, %v2306
        %v2320 = vpack.c.bf16 %v2309, %v2308
        %v2321 = vpack.c.bf16 %v2311, %v2310
        %v2322 = vpack.c.bf16 %v2313, %v2312
        %v2323 = vpack.c.bf16 %v2315, %v2314
        %v2324 = vld [vmem:[%s698] sm:$0xff]
        %v2325 = vld [vmem:[%s698 + $0x8] sm:$0xff]
        %v2326 = vld [vmem:[%s698 + $0x10] sm:$0xff]
        %v2327 = vld [vmem:[%s698 + $0x18] sm:$0xff]
        %v2328 = vld [vmem:[%s698 + $0x20] sm:$0xff]
        %v2329 = vld [vmem:[%s698 + $0x28] sm:$0xff]
        %v2330 = vld [vmem:[%s698 + $0x30] sm:$0xff]
        %v2331 = vld [vmem:[%s698 + $0x38] sm:$0xff]
        %v2332 = vld [vmem:[%s698 + $0x40] sm:$0xff]
        %v2333 = vld [vmem:[%s698 + $0x48] sm:$0xff]
        %v2334 = vld [vmem:[%s698 + $0x50] sm:$0xff]
        %v2335 = vld [vmem:[%s698 + $0x58] sm:$0xff]
        %v2336 = vld [vmem:[%s698 + $0x60] sm:$0xff]
        %v2337 = vld [vmem:[%s698 + $0x68] sm:$0xff]
        %v2338 = vld [vmem:[%s698 + $0x70] sm:$0xff]
        %v2339 = vld [vmem:[%s698 + $0x78] sm:$0xff]
        %v2340 = vld [vmem:[%s823] sm:$0x3]
        %v2342 = vlaneseq
        %v2343 = vshrl.u32 %v2342, 7
        %v2344 = vsub.s32 0, %v2343
        %v2345 = vrot.slane %v2340, %v2344
        %v2346 = vlaneseq
        %v2347 = vshrl.u32 %v2346, 7
        %v2348 = vsub.s32 1, %v2347
        %v2349 = vrot.slane %v2340, %v2348
        %v2368 = vunpack.c.l.b16 %v2324
        %v2369 = vunpack.c.h.b16 %v2324
        %v2370 = vunpack.c.l.b16 %v2325
        %v2371 = vunpack.c.h.b16 %v2325
        %v2372 = vunpack.c.l.b16 %v2326
        %v2373 = vunpack.c.h.b16 %v2326
        %v2374 = vunpack.c.l.b16 %v2327
        %v2375 = vunpack.c.h.b16 %v2327
        %v2376 = vunpack.c.l.b16 %v2328
        %v2377 = vunpack.c.h.b16 %v2328
        %v2378 = vunpack.c.l.b16 %v2329
        %v2379 = vunpack.c.h.b16 %v2329
        %v2380 = vunpack.c.l.b16 %v2330
        %v2381 = vunpack.c.h.b16 %v2330
        %v2382 = vunpack.c.l.b16 %v2331
        %v2383 = vunpack.c.h.b16 %v2331
        %v2384 = vunpack.c.l.b16 %v2332
        %v2385 = vunpack.c.h.b16 %v2332
        %v2386 = vunpack.c.l.b16 %v2333
        %v2387 = vunpack.c.h.b16 %v2333
        %v2388 = vunpack.c.l.b16 %v2334
        %v2389 = vunpack.c.h.b16 %v2334
        %v2390 = vunpack.c.l.b16 %v2335
        %v2391 = vunpack.c.h.b16 %v2335
        %v2392 = vunpack.c.l.b16 %v2336
        %v2393 = vunpack.c.h.b16 %v2336
        %v2394 = vunpack.c.l.b16 %v2337
        %v2395 = vunpack.c.h.b16 %v2337
        %v2396 = vunpack.c.l.b16 %v2338
        %v2397 = vunpack.c.h.b16 %v2338
        %v2398 = vunpack.c.l.b16 %v2339
        %v2399 = vunpack.c.h.b16 %v2339
        %v2400 = vpack.c.b16 %v2370, %v2368
        %v2401 = vpack.c.b16 %v2371, %v2369
        %v2402 = vpack.c.b16 %v2374, %v2372
        %v2403 = vpack.c.b16 %v2375, %v2373
        %v2404 = vpack.c.b16 %v2378, %v2376
        %v2405 = vpack.c.b16 %v2379, %v2377
        %v2406 = vpack.c.b16 %v2382, %v2380
        %v2407 = vpack.c.b16 %v2383, %v2381
        %v2408 = vpack.c.b16 %v2386, %v2384
        %v2409 = vpack.c.b16 %v2387, %v2385
        %v2410 = vpack.c.b16 %v2390, %v2388
        %v2411 = vpack.c.b16 %v2391, %v2389
        %v2412 = vpack.c.b16 %v2394, %v2392
        %v2413 = vpack.c.b16 %v2395, %v2393
        %v2414 = vpack.c.b16 %v2398, %v2396
        %v2415 = vpack.c.b16 %v2399, %v2397
        %2432 = vmatprep.subr.bf16.mxu0 %v2401
        %2433 = vmatpush1.bf16.msra.mxu0 %v2400
        %2434 = vmatprep.subr.bf16.mxu0 %v2403
        %2435 = vmatpush1.bf16.msra.mxu0 %v2402
        %2436 = vmatprep.subr.bf16.mxu0 %v2405
        %2437 = vmatpush1.bf16.msra.mxu0 %v2404
        %2438 = vmatprep.subr.bf16.mxu0 %v2407
        %2439 = vmatpush1.bf16.msra.mxu0 %v2406
        %2440 = vmatprep.subr.bf16.mxu0 %v2409
        %2441 = vmatpush1.bf16.msra.mxu0 %v2408
        %2442 = vmatprep.subr.bf16.mxu0 %v2411
        %2443 = vmatpush1.bf16.msra.mxu0 %v2410
        %2444 = vmatprep.subr.bf16.mxu0 %v2413
        %2445 = vmatpush1.bf16.msra.mxu0 %v2412
        %2446 = vmatprep.subr.bf16.mxu0 %v2415
        %2447 = vmatpush1.bf16.msra.mxu0 %v2414
        %2448 = vmatprep.subr.bf16.mxu0 0
        %2449 = vmatpush1.bf16.msra.mxu0 0
        %2450 = vmatprep.subr.bf16.mxu0 0
        %2451 = vmatpush1.bf16.msra.mxu0 0
        %2452 = vmatprep.subr.bf16.mxu0 0
        %2453 = vmatpush1.bf16.msra.mxu0 0
        %2454 = vmatprep.subr.bf16.mxu0 0
        %2455 = vmatpush1.bf16.msra.mxu0 0
        %2456 = vmatprep.subr.bf16.mxu0 0
        %2457 = vmatpush1.bf16.msra.mxu0 0
        %2458 = vmatprep.subr.bf16.mxu0 0
        %2459 = vmatpush1.bf16.msra.mxu0 0
        %2460 = vmatprep.subr.bf16.mxu0 0
        %2461 = vmatpush1.bf16.msra.mxu0 0
        %2462 = vmatprep.subr.bf16.mxu0 0
        %2463 = vmatpush1.bf16.msra.mxu0 0
        %2464 = vmatprep.mubr.bf16.mxu0 0
        %2465 = vmatmul.mubr.bf16.gmra.mrb[0].mxu0 %v2316
        %v2466 = vpop.f32.mrb[0].mxu0
        %v2467 = vadd.f32 %v2345, %v2466
        %v2468 = vpop.f32.mrb[0].mxu0
        %v2469 = vadd.f32 %v2349, %v2468
        %v2470 = vpop.f32.mrb[0].mxu0
        %v2471 = vadd.f32 %v2345, %v2470
        %v2472 = vpop.f32.mrb[0].mxu0
        %v2473 = vadd.f32 %v2349, %v2472
        %2474 = vmatprep.mubr.bf16.mxu0 0
        %2475 = vmatmul.mubr.bf16.gmra.mrb[0].mxu0 %v2317
        %v2476 = vpop.f32.mrb[0].mxu0
        %v2477 = vadd.f32 %v2345, %v2476
        %v2478 = vpop.f32.mrb[0].mxu0
        %v2479 = vadd.f32 %v2349, %v2478
        %v2480 = vpop.f32.mrb[0].mxu0
        %v2481 = vadd.f32 %v2345, %v2480
        %v2482 = vpop.f32.mrb[0].mxu0
        %v2483 = vadd.f32 %v2349, %v2482
        %2484 = vmatprep.mubr.bf16.mxu0 0
        %2485 = vmatmul.mubr.bf16.gmra.mrb[0].mxu0 %v2318
        %v2486 = vpop.f32.mrb[0].mxu0
        %v2487 = vadd.f32 %v2345, %v2486
        %v2488 = vpop.f32.mrb[0].mxu0
        %v2489 = vadd.f32 %v2349, %v2488
        %v2490 = vpop.f32.mrb[0].mxu0
        %v2491 = vadd.f32 %v2345, %v2490
        %v2492 = vpop.f32.mrb[0].mxu0
        %v2493 = vadd.f32 %v2349, %v2492
        %2494 = vmatprep.mubr.bf16.mxu0 0
        %2495 = vmatmul.mubr.bf16.gmra.mrb[0].mxu0 %v2319
        %v2496 = vpop.f32.mrb[0].mxu0
        %v2497 = vadd.f32 %v2345, %v2496
        %v2498 = vpop.f32.mrb[0].mxu0
        %v2499 = vadd.f32 %v2349, %v2498
        %v2500 = vpop.f32.mrb[0].mxu0
        %v2501 = vadd.f32 %v2345, %v2500
        %v2502 = vpop.f32.mrb[0].mxu0
        %v2503 = vadd.f32 %v2349, %v2502
        %2504 = vmatprep.mubr.bf16.mxu0 0
        %2505 = vmatmul.mubr.bf16.gmra.mrb[0].mxu0 %v2320
        %v2506 = vpop.f32.mrb[0].mxu0
        %v2507 = vadd.f32 %v2345, %v2506
        %v2508 = vpop.f32.mrb[0].mxu0
        %v2509 = vadd.f32 %v2349, %v2508
        %v2510 = vpop.f32.mrb[0].mxu0
        %v2511 = vadd.f32 %v2345, %v2510
        %v2512 = vpop.f32.mrb[0].mxu0
        %v2513 = vadd.f32 %v2349, %v2512
        %2514 = vmatprep.mubr.bf16.mxu0 0
        %2515 = vmatmul.mubr.bf16.gmra.mrb[0].mxu0 %v2321
        %v2516 = vpop.f32.mrb[0].mxu0
        %v2517 = vadd.f32 %v2345, %v2516
        %v2518 = vpop.f32.mrb[0].mxu0
        %v2519 = vadd.f32 %v2349, %v2518
        %v2520 = vpop.f32.mrb[0].mxu0
        %v2521 = vadd.f32 %v2345, %v2520
        %v2522 = vpop.f32.mrb[0].mxu0
        %v2523 = vadd.f32 %v2349, %v2522
        %2524 = vmatprep.mubr.bf16.mxu0 0
        %2525 = vmatmul.mubr.bf16.gmra.mrb[0].mxu0 %v2322
        %v2526 = vpop.f32.mrb[0].mxu0
        %v2527 = vadd.f32 %v2345, %v2526
        %v2528 = vpop.f32.mrb[0].mxu0
        %v2529 = vadd.f32 %v2349, %v2528
        %v2530 = vpop.f32.mrb[0].mxu0
        %v2531 = vadd.f32 %v2345, %v2530
        %v2532 = vpop.f32.mrb[0].mxu0
        %v2533 = vadd.f32 %v2349, %v2532
        %2534 = vmatprep.mubr.bf16.mxu0 0
        %2535 = vmatmul.mubr.bf16.gmra.mrb[0].mxu0 %v2323
        %v2536 = vpop.f32.mrb[0].mxu0
        %v2537 = vadd.f32 %v2345, %v2536
        %v2538 = vpop.f32.mrb[0].mxu0
        %v2539 = vadd.f32 %v2349, %v2538
        %v2540 = vpop.f32.mrb[0].mxu0
        %v2541 = vadd.f32 %v2345, %v2540
        %v2542 = vpop.f32.mrb[0].mxu0
        %v2543 = vadd.f32 %v2349, %v2542
        %2544 = vdwg.mxu0
        %v2545 = vmax.f32 %v2467, 0.0
        %v2546 = vmax.f32 %v2469, 0.0
        %v2547 = vmax.f32 %v2471, 0.0
        %v2548 = vmax.f32 %v2473, 0.0
        %v2549 = vmax.f32 %v2477, 0.0
        %v2550 = vmax.f32 %v2479, 0.0
        %v2551 = vmax.f32 %v2481, 0.0
        %v2552 = vmax.f32 %v2483, 0.0
        %v2553 = vmax.f32 %v2487, 0.0
        %v2554 = vmax.f32 %v2489, 0.0
        %v2555 = vmax.f32 %v2491, 0.0
        %v2556 = vmax.f32 %v2493, 0.0
        %v2557 = vmax.f32 %v2497, 0.0
        %v2558 = vmax.f32 %v2499, 0.0
        %v2559 = vmax.f32 %v2501, 0.0
        %v2560 = vmax.f32 %v2503, 0.0
        %v2561 = vmax.f32 %v2507, 0.0
        %v2562 = vmax.f32 %v2509, 0.0
        %v2563 = vmax.f32 %v2511, 0.0
        %v2564 = vmax.f32 %v2513, 0.0
        %v2565 = vmax.f32 %v2517, 0.0
        %v2566 = vmax.f32 %v2519, 0.0
        %v2567 = vmax.f32 %v2521, 0.0
        %v2568 = vmax.f32 %v2523, 0.0
        %v2569 = vmax.f32 %v2527, 0.0
        %v2570 = vmax.f32 %v2529, 0.0
        %v2571 = vmax.f32 %v2531, 0.0
        %v2572 = vmax.f32 %v2533, 0.0
        %v2573 = vmax.f32 %v2537, 0.0
        %v2574 = vmax.f32 %v2539, 0.0
        %v2575 = vmax.f32 %v2541, 0.0
        %v2576 = vmax.f32 %v2543, 0.0
        %v2577 = vpack.c.bf16 %v2547, %v2545
        %v2578 = vpack.c.bf16 %v2548, %v2546
        %v2579 = vpack.c.bf16 %v2551, %v2549
        %v2580 = vpack.c.bf16 %v2552, %v2550
        %v2581 = vpack.c.bf16 %v2555, %v2553
        %v2582 = vpack.c.bf16 %v2556, %v2554
        %v2583 = vpack.c.bf16 %v2559, %v2557
        %v2584 = vpack.c.bf16 %v2560, %v2558
        %v2585 = vpack.c.bf16 %v2563, %v2561
        %v2586 = vpack.c.bf16 %v2564, %v2562
        %v2587 = vpack.c.bf16 %v2567, %v2565
        %v2588 = vpack.c.bf16 %v2568, %v2566
        %v2589 = vpack.c.bf16 %v2571, %v2569
        %v2590 = vpack.c.bf16 %v2572, %v2570
        %v2591 = vpack.c.bf16 %v2575, %v2573
        %v2592 = vpack.c.bf16 %v2576, %v2574
        %v2593 = vld [vmem:[%s707] sm:$0xf]
        %v2594 = vld [vmem:[%s707 + $0x4] sm:$0xf]
        %v2595 = vld [vmem:[%s707 + $0x8] sm:$0xf]
        %v2596 = vld [vmem:[%s707 + $0xc] sm:$0xf]
        %v2597 = vld [vmem:[%s707 + $0x10] sm:$0xf]
        %v2598 = vld [vmem:[%s707 + $0x14] sm:$0xf]
        %v2599 = vld [vmem:[%s707 + $0x18] sm:$0xf]
        %v2600 = vld [vmem:[%s707 + $0x1c] sm:$0xf]
        %v2601 = vld [vmem:[%s707 + $0x20] sm:$0xf]
        %v2602 = vld [vmem:[%s707 + $0x24] sm:$0xf]
        %v2603 = vld [vmem:[%s707 + $0x28] sm:$0xf]
        %v2604 = vld [vmem:[%s707 + $0x2c] sm:$0xf]
        %v2605 = vld [vmem:[%s707 + $0x30] sm:$0xf]
        %v2606 = vld [vmem:[%s707 + $0x34] sm:$0xf]
        %v2607 = vld [vmem:[%s707 + $0x38] sm:$0xf]
        %v2608 = vld [vmem:[%s707 + $0x3c] sm:$0xf]
        %v2609 = vld [vmem:[%s707 + $0x40] sm:$0xf]
        %v2610 = vld [vmem:[%s707 + $0x44] sm:$0xf]
        %v2611 = vld [vmem:[%s707 + $0x48] sm:$0xf]
        %v2612 = vld [vmem:[%s707 + $0x4c] sm:$0xf]
        %v2613 = vld [vmem:[%s707 + $0x50] sm:$0xf]
        %v2614 = vld [vmem:[%s707 + $0x54] sm:$0xf]
        %v2615 = vld [vmem:[%s707 + $0x58] sm:$0xf]
        %v2616 = vld [vmem:[%s707 + $0x5c] sm:$0xf]
        %v2617 = vld [vmem:[%s707 + $0x60] sm:$0xf]
        %v2618 = vld [vmem:[%s707 + $0x64] sm:$0xf]
        %v2619 = vld [vmem:[%s707 + $0x68] sm:$0xf]
        %v2620 = vld [vmem:[%s707 + $0x6c] sm:$0xf]
        %v2621 = vld [vmem:[%s707 + $0x70] sm:$0xf]
        %v2622 = vld [vmem:[%s707 + $0x74] sm:$0xf]
        %v2623 = vld [vmem:[%s707 + $0x78] sm:$0xf]
        %v2624 = vld [vmem:[%s707 + $0x7c] sm:$0xf]
        %v2625 = vld [vmem:[%s826] sm:$0x1]
        %v2627 = vlaneseq
        %v2628 = vshrl.u32 %v2627, 7
        %v2629 = vsub.s32 0, %v2628
        %v2630 = vrot.slane %v2625, %v2629
        %v2664 = vunpack.c.l.b16 %v2593
        %v2665 = vunpack.c.l.b16 %v2594
        %v2666 = vunpack.c.l.b16 %v2595
        %v2667 = vunpack.c.l.b16 %v2596
        %v2668 = vunpack.c.l.b16 %v2597
        %v2669 = vunpack.c.l.b16 %v2598
        %v2670 = vunpack.c.l.b16 %v2599
        %v2671 = vunpack.c.l.b16 %v2600
        %v2672 = vunpack.c.l.b16 %v2601
        %v2673 = vunpack.c.l.b16 %v2602
        %v2674 = vunpack.c.l.b16 %v2603
        %v2675 = vunpack.c.l.b16 %v2604
        %v2676 = vunpack.c.l.b16 %v2605
        %v2677 = vunpack.c.l.b16 %v2606
        %v2678 = vunpack.c.l.b16 %v2607
        %v2679 = vunpack.c.l.b16 %v2608
        %v2680 = vunpack.c.l.b16 %v2609
        %v2681 = vunpack.c.l.b16 %v2610
        %v2682 = vunpack.c.l.b16 %v2611
        %v2683 = vunpack.c.l.b16 %v2612
        %v2684 = vunpack.c.l.b16 %v2613
        %v2685 = vunpack.c.l.b16 %v2614
        %v2686 = vunpack.c.l.b16 %v2615
        %v2687 = vunpack.c.l.b16 %v2616
        %v2688 = vunpack.c.l.b16 %v2617
        %v2689 = vunpack.c.l.b16 %v2618
        %v2690 = vunpack.c.l.b16 %v2619
        %v2691 = vunpack.c.l.b16 %v2620
        %v2692 = vunpack.c.l.b16 %v2621
        %v2693 = vunpack.c.l.b16 %v2622
        %v2694 = vunpack.c.l.b16 %v2623
        %v2695 = vunpack.c.l.b16 %v2624
        %v2696 = vpack.c.b16 %v2665, %v2664
        %v2697 = vpack.c.b16 %v2667, %v2666
        %v2698 = vpack.c.b16 %v2669, %v2668
        %v2699 = vpack.c.b16 %v2671, %v2670
        %v2700 = vpack.c.b16 %v2673, %v2672
        %v2701 = vpack.c.b16 %v2675, %v2674
        %v2702 = vpack.c.b16 %v2677, %v2676
        %v2703 = vpack.c.b16 %v2679, %v2678
        %v2704 = vpack.c.b16 %v2681, %v2680
        %v2705 = vpack.c.b16 %v2683, %v2682
        %v2706 = vpack.c.b16 %v2685, %v2684
        %v2707 = vpack.c.b16 %v2687, %v2686
        %v2708 = vpack.c.b16 %v2689, %v2688
        %v2709 = vpack.c.b16 %v2691, %v2690
        %v2710 = vpack.c.b16 %v2693, %v2692
        %v2711 = vpack.c.b16 %v2695, %v2694
        %2728 = vmatprep.subr.bf16.mxu0 0
        %2729 = vmatpush1.bf16.msra.mxu0 %v2696
        %2730 = vmatprep.subr.bf16.mxu0 0
        %2731 = vmatpush1.bf16.msra.mxu0 %v2697
        %2732 = vmatprep.subr.bf16.mxu0 0
        %2733 = vmatpush1.bf16.msra.mxu0 %v2698
        %2734 = vmatprep.subr.bf16.mxu0 0
        %2735 = vmatpush1.bf16.msra.mxu0 %v2699
        %2736 = vmatprep.subr.bf16.mxu0 0
        %2737 = vmatpush1.bf16.msra.mxu0 %v2700
        %2738 = vmatprep.subr.bf16.mxu0 0
        %2739 = vmatpush1.bf16.msra.mxu0 %v2701
        %2740 = vmatprep.subr.bf16.mxu0 0
        %2741 = vmatpush1.bf16.msra.mxu0 %v2702
        %2742 = vmatprep.subr.bf16.mxu0 0
        %2743 = vmatpush1.bf16.msra.mxu0 %v2703
        %2744 = vmatprep.subr.bf16.mxu0 0
        %2745 = vmatpush1.bf16.msra.mxu0 %v2704
        %2746 = vmatprep.subr.bf16.mxu0 0
        %2747 = vmatpush1.bf16.msra.mxu0 %v2705
        %2748 = vmatprep.subr.bf16.mxu0 0
        %2749 = vmatpush1.bf16.msra.mxu0 %v2706
        %2750 = vmatprep.subr.bf16.mxu0 0
        %2751 = vmatpush1.bf16.msra.mxu0 %v2707
        %2752 = vmatprep.subr.bf16.mxu0 0
        %2753 = vmatpush1.bf16.msra.mxu0 %v2708
        %2754 = vmatprep.subr.bf16.mxu0 0
        %2755 = vmatpush1.bf16.msra.mxu0 %v2709
        %2756 = vmatprep.subr.bf16.mxu0 0
        %2757 = vmatpush1.bf16.msra.mxu0 %v2710
        %2758 = vmatprep.subr.bf16.mxu0 0
        %2759 = vmatpush1.bf16.msra.mxu0 %v2711
        %2760 = vmatprep.mubr.bf16.mxu0 %v2578
        %2761 = vmatmul.mubr.bf16.gmra.mrb[0].mxu0 %v2577
        %v2762 = vpop.f32.mrb[0].mxu0
        %v2763 = vadd.f32 %v2630, %v2762
        %v2764 = vpop.f32.mrb[0].mxu0
        %v2765 = vpop.f32.mrb[0].mxu0
        %v2766 = vadd.f32 %v2630, %v2765
        %v2767 = vpop.f32.mrb[0].mxu0
        %2768 = vmatprep.mubr.bf16.mxu0 %v2580
        %2769 = vmatmul.mubr.bf16.gmra.mrb[0].mxu0 %v2579
        %v2770 = vpop.f32.mrb[0].mxu0
        %v2771 = vadd.f32 %v2630, %v2770
        %v2772 = vpop.f32.mrb[0].mxu0
        %v2773 = vpop.f32.mrb[0].mxu0
        %v2774 = vadd.f32 %v2630, %v2773
        %v2775 = vpop.f32.mrb[0].mxu0
        %2776 = vmatprep.mubr.bf16.mxu0 %v2582
        %2777 = vmatmul.mubr.bf16.gmra.mrb[0].mxu0 %v2581
        %v2778 = vpop.f32.mrb[0].mxu0
        %v2779 = vadd.f32 %v2630, %v2778
        %v2780 = vpop.f32.mrb[0].mxu0
        %v2781 = vpop.f32.mrb[0].mxu0
        %v2782 = vadd.f32 %v2630, %v2781
        %v2783 = vpop.f32.mrb[0].mxu0
        %2784 = vmatprep.mubr.bf16.mxu0 %v2584
        %2785 = vmatmul.mubr.bf16.gmra.mrb[0].mxu0 %v2583
        %v2786 = vpop.f32.mrb[0].mxu0
        %v2787 = vadd.f32 %v2630, %v2786
        %v2788 = vpop.f32.mrb[0].mxu0
        %v2789 = vpop.f32.mrb[0].mxu0
        %v2790 = vadd.f32 %v2630, %v2789
        %v2791 = vpop.f32.mrb[0].mxu0
        %2792 = vmatprep.mubr.bf16.mxu0 %v2586
        %2793 = vmatmul.mubr.bf16.gmra.mrb[0].mxu0 %v2585
        %v2794 = vpop.f32.mrb[0].mxu0
        %v2795 = vadd.f32 %v2630, %v2794
        %v2796 = vpop.f32.mrb[0].mxu0
        %v2797 = vpop.f32.mrb[0].mxu0
        %v2798 = vadd.f32 %v2630, %v2797
        %v2799 = vpop.f32.mrb[0].mxu0
        %2800 = vmatprep.mubr.bf16.mxu0 %v2588
        %2801 = vmatmul.mubr.bf16.gmra.mrb[0].mxu0 %v2587
        %v2802 = vpop.f32.mrb[0].mxu0
        %v2803 = vadd.f32 %v2630, %v2802
        %v2804 = vpop.f32.mrb[0].mxu0
        %v2805 = vpop.f32.mrb[0].mxu0
        %v2806 = vadd.f32 %v2630, %v2805
        %v2807 = vpop.f32.mrb[0].mxu0
        %2808 = vmatprep.mubr.bf16.mxu0 %v2590
        %2809 = vmatmul.mubr.bf16.gmra.mrb[0].mxu0 %v2589
        %v2810 = vpop.f32.mrb[0].mxu0
        %v2811 = vadd.f32 %v2630, %v2810
        %v2812 = vpop.f32.mrb[0].mxu0
        %v2813 = vpop.f32.mrb[0].mxu0
        %v2814 = vadd.f32 %v2630, %v2813
        %v2815 = vpop.f32.mrb[0].mxu0
        %2816 = vmatprep.mubr.bf16.mxu0 %v2592
        %2817 = vmatmul.mubr.bf16.gmra.mrb[0].mxu0 %v2591
        %v2818 = vpop.f32.mrb[0].mxu0
        %v2819 = vadd.f32 %v2630, %v2818
        %v2820 = vpop.f32.mrb[0].mxu0
        %v2821 = vpop.f32.mrb[0].mxu0
        %v2822 = vadd.f32 %v2630, %v2821
        %v2823 = vpop.f32.mrb[0].mxu0
        %2824 = vdwg.mxu0
        %v2825 = vmax.f32 %v2763, 0.0
        %v2826 = vmax.f32 %v2766, 0.0
        %v2827 = vmax.f32 %v2771, 0.0
        %v2828 = vmax.f32 %v2774, 0.0
        %v2829 = vmax.f32 %v2779, 0.0
        %v2830 = vmax.f32 %v2782, 0.0
        %v2831 = vmax.f32 %v2787, 0.0
        %v2832 = vmax.f32 %v2790, 0.0
        %v2833 = vmax.f32 %v2795, 0.0
        %v2834 = vmax.f32 %v2798, 0.0
        %v2835 = vmax.f32 %v2803, 0.0
        %v2836 = vmax.f32 %v2806, 0.0
        %v2837 = vmax.f32 %v2811, 0.0
        %v2838 = vmax.f32 %v2814, 0.0
        %v2839 = vmax.f32 %v2819, 0.0
        %v2840 = vmax.f32 %v2822, 0.0
        %2841 = vst [vmem:[#allocation2] sm:$0xff] %v2825
        %2842 = vst [vmem:[#allocation2 + $0x8] sm:$0xff] %v2826
        %2843 = vst [vmem:[#allocation2 + $0x10] sm:$0xff] %v2827
        %2844 = vst [vmem:[#allocation2 + $0x18] sm:$0xff] %v2828
        %2845 = vst [vmem:[#allocation2 + $0x20] sm:$0xff] %v2829
        %2846 = vst [vmem:[#allocation2 + $0x28] sm:$0xff] %v2830
        %2847 = vst [vmem:[#allocation2 + $0x30] sm:$0xff] %v2831
        %2848 = vst [vmem:[#allocation2 + $0x38] sm:$0xff] %v2832
        %2849 = vst [vmem:[#allocation2 + $0x40] sm:$0xff] %v2833
        %2850 = vst [vmem:[#allocation2 + $0x48] sm:$0xff] %v2834
        %2851 = vst [vmem:[#allocation2 + $0x50] sm:$0xff] %v2835
        %2852 = vst [vmem:[#allocation2 + $0x58] sm:$0xff] %v2836
        %2853 = vst [vmem:[#allocation2 + $0x60] sm:$0xff] %v2837
        %2854 = vst [vmem:[#allocation2 + $0x68] sm:$0xff] %v2838
        %2855 = vst [vmem:[#allocation2 + $0x70] sm:$0xff] %v2839
        %2856 = vst [vmem:[#allocation2 + $0x78] sm:$0xff] %v2840
        %p2857 = scmp.ne.s32.totalorder %s38, 2
        // Predicated region
        $region121: #{tpu_custom_call.1} parent=95 // pred_check
          %p2858 = pneg %p2857
        $region122: #{tpu_custom_call.1} parent=95 // pred_check_branch
          %2860 = sbr.rel (%p2858) target = $region124
        $region123: #{tpu_custom_call.1} parent=95 // pred_region
          %2861 = vmatprep.subr.bf16.mxu0 0
          %2862 = vmatpush1.bf16.msra.mxu0 %v2026
          %2863 = vmatprep.subr.bf16.mxu0 0
          %2864 = vmatpush1.bf16.msra.mxu0 %v2027
          %2865 = vmatprep.subr.bf16.mxu0 0
          %2866 = vmatpush1.bf16.msra.mxu0 %v2028
          %2867 = vmatprep.subr.bf16.mxu0 0
          %2868 = vmatpush1.bf16.msra.mxu0 %v2029
          %2869 = vmatprep.subr.bf16.mxu0 0
          %2870 = vmatpush1.bf16.msra.mxu0 %v2030
          %2871 = vmatprep.subr.bf16.mxu0 0
          %2872 = vmatpush1.bf16.msra.mxu0 %v2031
          %2873 = vmatprep.subr.bf16.mxu0 0
          %2874 = vmatpush1.bf16.msra.mxu0 %v2032
          %2875 = vmatprep.subr.bf16.mxu0 0
          %2876 = vmatpush1.bf16.msra.mxu0 %v2033
          %2877 = vmatprep.subr.bf16.mxu0 0
          %2878 = vmatpush1.bf16.msra.mxu0 0
          %2879 = vmatprep.subr.bf16.mxu0 0
          %2880 = vmatpush1.bf16.msra.mxu0 0
          %2881 = vmatprep.subr.bf16.mxu0 0
          %2882 = vmatpush1.bf16.msra.mxu0 0
          %2883 = vmatprep.subr.bf16.mxu0 0
          %2884 = vmatpush1.bf16.msra.mxu0 0
          %2885 = vmatprep.subr.bf16.mxu0 0
          %2886 = vmatpush1.bf16.msra.mxu0 0
          %2887 = vmatprep.subr.bf16.mxu0 0
          %2888 = vmatpush1.bf16.msra.mxu0 0
          %2889 = vmatprep.subr.bf16.mxu0 0
          %2890 = vmatpush1.bf16.msra.mxu0 0
          %2891 = vmatprep.subr.bf16.mxu0 0
          %2892 = vmatpush1.bf16.msra.mxu0 0
          %2893 = vmatprep.mubr.bf16.mxu0 0
          %2894 = vmatmul.mubr.bf16.gmra.mrb[0].mxu0 %v1081
          %v2895 = vpop.f32.mrb[0].mxu0
          %v2896 = vadd.f32 %v889, %v2895
          %v2897 = vpop.f32.mrb[0].mxu0
          %v2898 = vpop.f32.mrb[0].mxu0
          %v2899 = vpop.f32.mrb[0].mxu0
          %2900 = vdwg.mxu0
          %v2901 = vpack.c.bf16 %v2896, %v2896
          %v2902 = vld [vmem:[%s716] sm:$0xff]
          %v2903 = vld [vmem:[%s716 + $0x8] sm:$0xff]
          %v2904 = vld [vmem:[%s716 + $0x10] sm:$0xff]
          %v2905 = vld [vmem:[%s716 + $0x18] sm:$0xff]
          %v2906 = vld [vmem:[%s716 + $0x20] sm:$0xff]
          %v2907 = vld [vmem:[%s716 + $0x28] sm:$0xff]
          %v2908 = vld [vmem:[%s716 + $0x30] sm:$0xff]
          %v2909 = vld [vmem:[%s716 + $0x38] sm:$0xff]
          %v2910 = vld [vmem:[%s716 + $0x40] sm:$0xff]
          %v2911 = vld [vmem:[%s716 + $0x48] sm:$0xff]
          %v2912 = vld [vmem:[%s716 + $0x50] sm:$0xff]
          %v2913 = vld [vmem:[%s716 + $0x58] sm:$0xff]
          %v2914 = vld [vmem:[%s716 + $0x60] sm:$0xff]
          %v2915 = vld [vmem:[%s716 + $0x68] sm:$0xff]
          %v2916 = vld [vmem:[%s716 + $0x70] sm:$0xff]
          %v2917 = vld [vmem:[%s716 + $0x78] sm:$0xff]
          %v2918 = vld [vmem:[%s830] sm:$0x3]
          %v2920 = vlaneseq
          %v2921 = vshrl.u32 %v2920, 7
          %v2922 = vsub.s32 0, %v2921
          %v2923 = vrot.slane %v2918, %v2922
          %v2924 = vlaneseq
          %v2925 = vshrl.u32 %v2924, 7
          %v2926 = vsub.s32 1, %v2925
          %v2927 = vrot.slane %v2918, %v2926
          %v2946 = vunpack.c.l.b16 %v2902
          %v2947 = vunpack.c.h.b16 %v2902
          %v2948 = vunpack.c.l.b16 %v2903
          %v2949 = vunpack.c.h.b16 %v2903
          %v2950 = vunpack.c.l.b16 %v2904
          %v2951 = vunpack.c.h.b16 %v2904
          %v2952 = vunpack.c.l.b16 %v2905
          %v2953 = vunpack.c.h.b16 %v2905
          %v2954 = vunpack.c.l.b16 %v2906
          %v2955 = vunpack.c.h.b16 %v2906
          %v2956 = vunpack.c.l.b16 %v2907
          %v2957 = vunpack.c.h.b16 %v2907
          %v2958 = vunpack.c.l.b16 %v2908
          %v2959 = vunpack.c.h.b16 %v2908
          %v2960 = vunpack.c.l.b16 %v2909
          %v2961 = vunpack.c.h.b16 %v2909
          %v2962 = vunpack.c.l.b16 %v2910
          %v2963 = vunpack.c.h.b16 %v2910
          %v2964 = vunpack.c.l.b16 %v2911
          %v2965 = vunpack.c.h.b16 %v2911
          %v2966 = vunpack.c.l.b16 %v2912
          %v2967 = vunpack.c.h.b16 %v2912
          %v2968 = vunpack.c.l.b16 %v2913
          %v2969 = vunpack.c.h.b16 %v2913
          %v2970 = vunpack.c.l.b16 %v2914
          %v2971 = vunpack.c.h.b16 %v2914
          %v2972 = vunpack.c.l.b16 %v2915
          %v2973 = vunpack.c.h.b16 %v2915
          %v2974 = vunpack.c.l.b16 %v2916
          %v2975 = vunpack.c.h.b16 %v2916
          %v2976 = vunpack.c.l.b16 %v2917
          %v2977 = vunpack.c.h.b16 %v2917
          %v2978 = vpack.c.b16 %v2948, %v2946
          %v2979 = vpack.c.b16 %v2949, %v2947
          %v2980 = vpack.c.b16 %v2952, %v2950
          %v2981 = vpack.c.b16 %v2953, %v2951
          %v2982 = vpack.c.b16 %v2956, %v2954
          %v2983 = vpack.c.b16 %v2957, %v2955
          %v2984 = vpack.c.b16 %v2960, %v2958
          %v2985 = vpack.c.b16 %v2961, %v2959
          %v2986 = vpack.c.b16 %v2964, %v2962
          %v2987 = vpack.c.b16 %v2965, %v2963
          %v2988 = vpack.c.b16 %v2968, %v2966
          %v2989 = vpack.c.b16 %v2969, %v2967
          %v2990 = vpack.c.b16 %v2972, %v2970
          %v2991 = vpack.c.b16 %v2973, %v2971
          %v2992 = vpack.c.b16 %v2976, %v2974
          %v2993 = vpack.c.b16 %v2977, %v2975
          %3010 = vmatprep.subr.bf16.mxu0 %v2979
          %3011 = vmatpush1.bf16.msra.mxu0 %v2978
          %3012 = vmatprep.subr.bf16.mxu0 %v2981
          %3013 = vmatpush1.bf16.msra.mxu0 %v2980
          %3014 = vmatprep.subr.bf16.mxu0 %v2983
          %3015 = vmatpush1.bf16.msra.mxu0 %v2982
          %3016 = vmatprep.subr.bf16.mxu0 %v2985
          %3017 = vmatpush1.bf16.msra.mxu0 %v2984
          %3018 = vmatprep.subr.bf16.mxu0 %v2987
          %3019 = vmatpush1.bf16.msra.mxu0 %v2986
          %3020 = vmatprep.subr.bf16.mxu0 %v2989
          %3021 = vmatpush1.bf16.msra.mxu0 %v2988
          %3022 = vmatprep.subr.bf16.mxu0 %v2991
          %3023 = vmatpush1.bf16.msra.mxu0 %v2990
          %3024 = vmatprep.subr.bf16.mxu0 %v2993
          %3025 = vmatpush1.bf16.msra.mxu0 %v2992
          %3026 = vmatprep.subr.bf16.mxu0 0
          %3027 = vmatpush1.bf16.msra.mxu0 0
          %3028 = vmatprep.subr.bf16.mxu0 0
          %3029 = vmatpush1.bf16.msra.mxu0 0
          %3030 = vmatprep.subr.bf16.mxu0 0
          %3031 = vmatpush1.bf16.msra.mxu0 0
          %3032 = vmatprep.subr.bf16.mxu0 0
          %3033 = vmatpush1.bf16.msra.mxu0 0
          %3034 = vmatprep.subr.bf16.mxu0 0
          %3035 = vmatpush1.bf16.msra.mxu0 0
          %3036 = vmatprep.subr.bf16.mxu0 0
          %3037 = vmatpush1.bf16.msra.mxu0 0
          %3038 = vmatprep.subr.bf16.mxu0 0
          %3039 = vmatpush1.bf16.msra.mxu0 0
          %3040 = vmatprep.subr.bf16.mxu0 0
          %3041 = vmatpush1.bf16.msra.mxu0 0
          %3042 = vmatprep.mubr.bf16.mxu0 0
          %3043 = vmatmul.mubr.bf16.gmra.mrb[0].mxu0 %v2901
          %v3044 = vpop.f32.mrb[0].mxu0
          %v3045 = vadd.f32 %v2923, %v3044
          %v3046 = vpop.f32.mrb[0].mxu0
          %v3047 = vadd.f32 %v2927, %v3046
          %v3048 = vpop.f32.mrb[0].mxu0
          %v3049 = vpop.f32.mrb[0].mxu0
          %3050 = vdwg.mxu0
          %v3051 = vmax.f32 %v3045, 0.0
          %v3052 = vmax.f32 %v3047, 0.0
          %v3053 = vpack.c.bf16 %v3051, %v3051
          %v3054 = vpack.c.bf16 %v3052, %v3052
          %v3055 = vld [vmem:[%s725] sm:$0xf]
          %v3056 = vld [vmem:[%s725 + $0x4] sm:$0xf]
          %v3057 = vld [vmem:[%s725 + $0x8] sm:$0xf]
          %v3058 = vld [vmem:[%s725 + $0xc] sm:$0xf]
          %v3059 = vld [vmem:[%s725 + $0x10] sm:$0xf]
          %v3060 = vld [vmem:[%s725 + $0x14] sm:$0xf]
          %v3061 = vld [vmem:[%s725 + $0x18] sm:$0xf]
          %v3062 = vld [vmem:[%s725 + $0x1c] sm:$0xf]
          %v3063 = vld [vmem:[%s725 + $0x20] sm:$0xf]
          %v3064 = vld [vmem:[%s725 + $0x24] sm:$0xf]
          %v3065 = vld [vmem:[%s725 + $0x28] sm:$0xf]
          %v3066 = vld [vmem:[%s725 + $0x2c] sm:$0xf]
          %v3067 = vld [vmem:[%s725 + $0x30] sm:$0xf]
          %v3068 = vld [vmem:[%s725 + $0x34] sm:$0xf]
          %v3069 = vld [vmem:[%s725 + $0x38] sm:$0xf]
          %v3070 = vld [vmem:[%s725 + $0x3c] sm:$0xf]
          %v3071 = vld [vmem:[%s725 + $0x40] sm:$0xf]
          %v3072 = vld [vmem:[%s725 + $0x44] sm:$0xf]
          %v3073 = vld [vmem:[%s725 + $0x48] sm:$0xf]
          %v3074 = vld [vmem:[%s725 + $0x4c] sm:$0xf]
          %v3075 = vld [vmem:[%s725 + $0x50] sm:$0xf]
          %v3076 = vld [vmem:[%s725 + $0x54] sm:$0xf]
          %v3077 = vld [vmem:[%s725 + $0x58] sm:$0xf]
          %v3078 = vld [vmem:[%s725 + $0x5c] sm:$0xf]
          %v3079 = vld [vmem:[%s725 + $0x60] sm:$0xf]
          %v3080 = vld [vmem:[%s725 + $0x64] sm:$0xf]
          %v3081 = vld [vmem:[%s725 + $0x68] sm:$0xf]
          %v3082 = vld [vmem:[%s725 + $0x6c] sm:$0xf]
          %v3083 = vld [vmem:[%s725 + $0x70] sm:$0xf]
          %v3084 = vld [vmem:[%s725 + $0x74] sm:$0xf]
          %v3085 = vld [vmem:[%s725 + $0x78] sm:$0xf]
          %v3086 = vld [vmem:[%s725 + $0x7c] sm:$0xf]
          %v3087 = vld [vmem:[%s833] sm:$0x1]
          %v3089 = vlaneseq
          %v3090 = vshrl.u32 %v3089, 7
          %v3091 = vsub.s32 0, %v3090
          %v3092 = vrot.slane %v3087, %v3091
          %v3126 = vunpack.c.l.b16 %v3055
          %v3127 = vunpack.c.l.b16 %v3056
          %v3128 = vunpack.c.l.b16 %v3057
          %v3129 = vunpack.c.l.b16 %v3058
          %v3130 = vunpack.c.l.b16 %v3059
          %v3131 = vunpack.c.l.b16 %v3060
          %v3132 = vunpack.c.l.b16 %v3061
          %v3133 = vunpack.c.l.b16 %v3062
          %v3134 = vunpack.c.l.b16 %v3063
          %v3135 = vunpack.c.l.b16 %v3064
          %v3136 = vunpack.c.l.b16 %v3065
          %v3137 = vunpack.c.l.b16 %v3066
          %v3138 = vunpack.c.l.b16 %v3067
          %v3139 = vunpack.c.l.b16 %v3068
          %v3140 = vunpack.c.l.b16 %v3069
          %v3141 = vunpack.c.l.b16 %v3070
          %v3142 = vunpack.c.l.b16 %v3071
          %v3143 = vunpack.c.l.b16 %v3072
          %v3144 = vunpack.c.l.b16 %v3073
          %v3145 = vunpack.c.l.b16 %v3074
          %v3146 = vunpack.c.l.b16 %v3075
          %v3147 = vunpack.c.l.b16 %v3076
          %v3148 = vunpack.c.l.b16 %v3077
          %v3149 = vunpack.c.l.b16 %v3078
          %v3150 = vunpack.c.l.b16 %v3079
          %v3151 = vunpack.c.l.b16 %v3080
          %v3152 = vunpack.c.l.b16 %v3081
          %v3153 = vunpack.c.l.b16 %v3082
          %v3154 = vunpack.c.l.b16 %v3083
          %v3155 = vunpack.c.l.b16 %v3084
          %v3156 = vunpack.c.l.b16 %v3085
          %v3157 = vunpack.c.l.b16 %v3086
          %v3158 = vpack.c.b16 %v3127, %v3126
          %v3159 = vpack.c.b16 %v3129, %v3128
          %v3160 = vpack.c.b16 %v3131, %v3130
          %v3161 = vpack.c.b16 %v3133, %v3132
          %v3162 = vpack.c.b16 %v3135, %v3134
          %v3163 = vpack.c.b16 %v3137, %v3136
          %v3164 = vpack.c.b16 %v3139, %v3138
          %v3165 = vpack.c.b16 %v3141, %v3140
          %v3166 = vpack.c.b16 %v3143, %v3142
          %v3167 = vpack.c.b16 %v3145, %v3144
          %v3168 = vpack.c.b16 %v3147, %v3146
          %v3169 = vpack.c.b16 %v3149, %v3148
          %v3170 = vpack.c.b16 %v3151, %v3150
          %v3171 = vpack.c.b16 %v3153, %v3152
          %v3172 = vpack.c.b16 %v3155, %v3154
          %v3173 = vpack.c.b16 %v3157, %v3156
          %3190 = vmatprep.subr.bf16.mxu0 0
          %3191 = vmatpush1.bf16.msra.mxu0 %v3158
          %3192 = vmatprep.subr.bf16.mxu0 0
          %3193 = vmatpush1.bf16.msra.mxu0 %v3159
          %3194 = vmatprep.subr.bf16.mxu0 0
          %3195 = vmatpush1.bf16.msra.mxu0 %v3160
          %3196 = vmatprep.subr.bf16.mxu0 0
          %3197 = vmatpush1.bf16.msra.mxu0 %v3161
          %3198 = vmatprep.subr.bf16.mxu0 0
          %3199 = vmatpush1.bf16.msra.mxu0 %v3162
          %3200 = vmatprep.subr.bf16.mxu0 0
          %3201 = vmatpush1.bf16.msra.mxu0 %v3163
          %3202 = vmatprep.subr.bf16.mxu0 0
          %3203 = vmatpush1.bf16.msra.mxu0 %v3164
          %3204 = vmatprep.subr.bf16.mxu0 0
          %3205 = vmatpush1.bf16.msra.mxu0 %v3165
          %3206 = vmatprep.subr.bf16.mxu0 0
          %3207 = vmatpush1.bf16.msra.mxu0 %v3166
          %3208 = vmatprep.subr.bf16.mxu0 0
          %3209 = vmatpush1.bf16.msra.mxu0 %v3167
          %3210 = vmatprep.subr.bf16.mxu0 0
          %3211 = vmatpush1.bf16.msra.mxu0 %v3168
          %3212 = vmatprep.subr.bf16.mxu0 0
          %3213 = vmatpush1.bf16.msra.mxu0 %v3169
          %3214 = vmatprep.subr.bf16.mxu0 0
          %3215 = vmatpush1.bf16.msra.mxu0 %v3170
          %3216 = vmatprep.subr.bf16.mxu0 0
          %3217 = vmatpush1.bf16.msra.mxu0 %v3171
          %3218 = vmatprep.subr.bf16.mxu0 0
          %3219 = vmatpush1.bf16.msra.mxu0 %v3172
          %3220 = vmatprep.subr.bf16.mxu0 0
          %3221 = vmatpush1.bf16.msra.mxu0 %v3173
          %3222 = vmatprep.mubr.bf16.mxu0 %v3054
          %3223 = vmatmul.mubr.bf16.gmra.mrb[0].mxu0 %v3053
          %v3224 = vpop.f32.mrb[0].mxu0
          %v3225 = vadd.f32 %v3092, %v3224
          %v3226 = vpop.f32.mrb[0].mxu0
          %v3227 = vpop.f32.mrb[0].mxu0
          %v3228 = vpop.f32.mrb[0].mxu0
          %3229 = vdwg.mxu0
          %v3230 = vmax.f32 %v3225, 0.0
          %3231 = vst [vmem:[#allocation3] sm:$0xff] %v3230
        $region124: #{tpu_custom_call.1} parent=95 // pred_fallthru
          _
        %p3232 = scmp.eq.s32.totalorder %s38, 2
        // Predicated region
        $region125: #{tpu_custom_call.1} parent=95 // pred_check
          %p3233 = pneg %p3232
        $region126: #{tpu_custom_call.1} parent=95 // pred_check_branch
          %3235 = sbr.rel (%p3233) target = $region128
        $region127: #{tpu_custom_call.1} parent=95 // pred_region
          %v3236 = vpack.c.bf16 %v2766, %v2763
          %v3237 = vpack.c.bf16 %v2774, %v2771
          %v3238 = vpack.c.bf16 %v2782, %v2779
          %v3239 = vpack.c.bf16 %v2790, %v2787
          %v3240 = vpack.c.bf16 %v2798, %v2795
          %v3241 = vpack.c.bf16 %v2806, %v2803
          %v3242 = vpack.c.bf16 %v2814, %v2811
          %v3243 = vpack.c.bf16 %v2822, %v2819
          %3244 = vmatprep.subr.bf16.mxu0 0
          %3245 = vmatpush1.bf16.msra.mxu0 %v3236
          %3246 = vmatprep.subr.bf16.mxu0 0
          %3247 = vmatpush1.bf16.msra.mxu0 %v3237
          %3248 = vmatprep.subr.bf16.mxu0 0
          %3249 = vmatpush1.bf16.msra.mxu0 %v3238
          %3250 = vmatprep.subr.bf16.mxu0 0
          %3251 = vmatpush1.bf16.msra.mxu0 %v3239
          %3252 = vmatprep.subr.bf16.mxu0 0
          %3253 = vmatpush1.bf16.msra.mxu0 %v3240
          %3254 = vmatprep.subr.bf16.mxu0 0
          %3255 = vmatpush1.bf16.msra.mxu0 %v3241
          %3256 = vmatprep.subr.bf16.mxu0 0
          %3257 = vmatpush1.bf16.msra.mxu0 %v3242
          %3258 = vmatprep.subr.bf16.mxu0 0
          %3259 = vmatpush1.bf16.msra.mxu0 %v3243
          %3260 = vmatprep.subr.bf16.mxu0 0
          %3261 = vmatpush1.bf16.msra.mxu0 0
          %3262 = vmatprep.subr.bf16.mxu0 0
          %3263 = vmatpush1.bf16.msra.mxu0 0
          %3264 = vmatprep.subr.bf16.mxu0 0
          %3265 = vmatpush1.bf16.msra.mxu0 0
          %3266 = vmatprep.subr.bf16.mxu0 0
          %3267 = vmatpush1.bf16.msra.mxu0 0
          %3268 = vmatprep.subr.bf16.mxu0 0
          %3269 = vmatpush1.bf16.msra.mxu0 0
          %3270 = vmatprep.subr.bf16.mxu0 0
          %3271 = vmatpush1.bf16.msra.mxu0 0
          %3272 = vmatprep.subr.bf16.mxu0 0
          %3273 = vmatpush1.bf16.msra.mxu0 0
          %3274 = vmatprep.subr.bf16.mxu0 0
          %3275 = vmatpush1.bf16.msra.mxu0 0
          %3276 = vmatprep.mubr.bf16.mxu0 0
          %3277 = vmatmul.mubr.bf16.gmra.mrb[0].mxu0 %v1081
          %v3278 = vpop.f32.mrb[0].mxu0
          %v3279 = vadd.f32 0.0, %v3278
          %v3280 = vpop.f32.mrb[0].mxu0
          %v3281 = vpop.f32.mrb[0].mxu0
          %v3282 = vpop.f32.mrb[0].mxu0
          %3283 = vdwg.mxu0
          %v3284 = vld [vmem:[%s5] sm:$0xff]
          %3286 = vset.pattern.permute.xlu0 0
          %3287 = vperm.xlu0 %3286, %v3284
          %v3288 = vpop.permute.xlu0 %3287
          %v3290 = vmul.f32 %v3279, %v3288
          %v3291 = vpack.c.bf16 %v3290, %v3290
          %v3292 = vld [vmem:[%s17] sm:$0xf]
          %v3293 = vld [vmem:[%s17 + $0x4] sm:$0xf]
          %v3294 = vld [vmem:[%s17 + $0x8] sm:$0xf]
          %v3295 = vld [vmem:[%s17 + $0xc] sm:$0xf]
          %v3296 = vld [vmem:[%s17 + $0x10] sm:$0xf]
          %v3297 = vld [vmem:[%s17 + $0x14] sm:$0xf]
          %v3298 = vld [vmem:[%s17 + $0x18] sm:$0xf]
          %v3299 = vld [vmem:[%s17 + $0x1c] sm:$0xf]
          %v3300 = vld [vmem:[%s17 + $0x20] sm:$0xf]
          %v3301 = vld [vmem:[%s17 + $0x24] sm:$0xf]
          %v3302 = vld [vmem:[%s17 + $0x28] sm:$0xf]
          %v3303 = vld [vmem:[%s17 + $0x2c] sm:$0xf]
          %v3304 = vld [vmem:[%s17 + $0x30] sm:$0xf]
          %v3305 = vld [vmem:[%s17 + $0x34] sm:$0xf]
          %v3306 = vld [vmem:[%s17 + $0x38] sm:$0xf]
          %v3307 = vld [vmem:[%s17 + $0x3c] sm:$0xf]
          %v3308 = vld [vmem:[%s18] sm:$0x1]
          %v3310 = vlaneseq
          %v3311 = vshrl.u32 %v3310, 7
          %v3312 = vsub.s32 0, %v3311
          %v3313 = vrot.slane %v3308, %v3312
          %v3331 = vunpack.c.l.b16 %v3292
          %v3332 = vunpack.c.l.b16 %v3293
          %v3333 = vunpack.c.l.b16 %v3294
          %v3334 = vunpack.c.l.b16 %v3295
          %v3335 = vunpack.c.l.b16 %v3296
          %v3336 = vunpack.c.l.b16 %v3297
          %v3337 = vunpack.c.l.b16 %v3298
          %v3338 = vunpack.c.l.b16 %v3299
          %v3339 = vunpack.c.l.b16 %v3300
          %v3340 = vunpack.c.l.b16 %v3301
          %v3341 = vunpack.c.l.b16 %v3302
          %v3342 = vunpack.c.l.b16 %v3303
          %v3343 = vunpack.c.l.b16 %v3304
          %v3344 = vunpack.c.l.b16 %v3305
          %v3345 = vunpack.c.l.b16 %v3306
          %v3346 = vunpack.c.l.b16 %v3307
          %v3347 = vpack.c.b16 %v3332, %v3331
          %v3348 = vpack.c.b16 %v3334, %v3333
          %v3349 = vpack.c.b16 %v3336, %v3335
          %v3350 = vpack.c.b16 %v3338, %v3337
          %v3351 = vpack.c.b16 %v3340, %v3339
          %v3352 = vpack.c.b16 %v3342, %v3341
          %v3353 = vpack.c.b16 %v3344, %v3343
          %v3354 = vpack.c.b16 %v3346, %v3345
          %3363 = vmatprep.subr.bf16.mxu0 0
          %3364 = vmatpush1.bf16.msra.mxu0 %v3347
          %3365 = vmatprep.subr.bf16.mxu0 0
          %3366 = vmatpush1.bf16.msra.mxu0 %v3348
          %3367 = vmatprep.subr.bf16.mxu0 0
          %3368 = vmatpush1.bf16.msra.mxu0 %v3349
          %3369 = vmatprep.subr.bf16.mxu0 0
          %3370 = vmatpush1.bf16.msra.mxu0 %v3350
          %3371 = vmatprep.subr.bf16.mxu0 0
          %3372 = vmatpush1.bf16.msra.mxu0 %v3351
          %3373 = vmatprep.subr.bf16.mxu0 0
          %3374 = vmatpush1.bf16.msra.mxu0 %v3352
          %3375 = vmatprep.subr.bf16.mxu0 0
          %3376 = vmatpush1.bf16.msra.mxu0 %v3353
          %3377 = vmatprep.subr.bf16.mxu0 0
          %3378 = vmatpush1.bf16.msra.mxu0 %v3354
          %3379 = vmatprep.subr.bf16.mxu0 0
          %3380 = vmatpush1.bf16.msra.mxu0 0
          %3381 = vmatprep.subr.bf16.mxu0 0
          %3382 = vmatpush1.bf16.msra.mxu0 0
          %3383 = vmatprep.subr.bf16.mxu0 0
          %3384 = vmatpush1.bf16.msra.mxu0 0
          %3385 = vmatprep.subr.bf16.mxu0 0
          %3386 = vmatpush1.bf16.msra.mxu0 0
          %3387 = vmatprep.subr.bf16.mxu0 0
          %3388 = vmatpush1.bf16.msra.mxu0 0
          %3389 = vmatprep.subr.bf16.mxu0 0
          %3390 = vmatpush1.bf16.msra.mxu0 0
          %3391 = vmatprep.subr.bf16.mxu0 0
          %3392 = vmatpush1.bf16.msra.mxu0 0
          %3393 = vmatprep.subr.bf16.mxu0 0
          %3394 = vmatpush1.bf16.msra.mxu0 0
          %3395 = vmatprep.mubr.bf16.mxu0 0
          %3396 = vmatmul.mubr.bf16.gmra.mrb[0].mxu0 %v3291
          %v3397 = vpop.f32.mrb[0].mxu0
          %v3398 = vadd.f32 %v3313, %v3397
          %v3399 = vpop.f32.mrb[0].mxu0
          %v3400 = vpop.f32.mrb[0].mxu0
          %v3401 = vpop.f32.mrb[0].mxu0
          %3402 = vdwg.mxu0
          %3403 = vst [vmem:[#allocation13] sm:$0xff] %v3398
        $region128: #{tpu_custom_call.1} parent=95 // pred_fallthru
          _
        // Predicated region
        $region129: #{tpu_custom_call.1} parent=95 // pred_check
          %p3404 = pneg %p500
        $region130: #{tpu_custom_call.1} parent=95 // pred_check_branch
          %3406 = sbr.rel (%p3404) target = $region132
        $region131: #{tpu_custom_call.1} parent=95 // pred_region
          %s3408 = ssub.s32 128, 128
          %3409 = vsyncadd [#allocation6], %s3408
          %s3411 = sshll.u32 [#allocation13], 4
          %s3412 = int_to_ptr.vmem [resolvable:$true] %s3411
          %3414 = dma.vmem_to_hbm [thread:$0]  %s3412, 128, %s19, [#allocation6]
        $region132: #{tpu_custom_call.1} parent=95 // pred_fallthru
          _
        // Predicated region
        $region133: #{tpu_custom_call.1} parent=95 // pred_check
          %p3415 = pneg %p500
        $region134: #{tpu_custom_call.1} parent=95 // pred_check_branch
          %3417 = sbr.rel (%p3415) target = $region136
        $region135: #{tpu_custom_call.1} parent=95 // pred_region
          %3418 = dma.done [#allocation6], 128
        $region136: #{tpu_custom_call.1} parent=95 // pred_fallthru
          _
      $region96: #{tpu_custom_call.1} parent=5 // pred_fallthru
        _
      %p3419 = scmp.le.s32.totalorder 2, %s33
      // Predicated region
      $region137: #{tpu_custom_call.1} parent=5 // pred_check
        %p3420 = pneg %p3419
      $region138: #{tpu_custom_call.1} parent=5 // pred_check_branch
        %3422 = sbr.rel (%p3420) target = $region140
      $region139: #{tpu_custom_call.1} parent=5 // pred_region
        %s3423 = ssub.s32 %s33, 2
      $region140: #{tpu_custom_call.1} parent=5 // pred_fallthru
        _
    $region6: #{tpu_custom_call.1} parent=1 // loop_footer
      %s37 = sadd.s32 1, %s33
    $region7: #{tpu_custom_call.1} parent=1 // loop_footer_branch
      %32 = sbr.rel target = $region3
    $region8: #{tpu_custom_call.1} parent=1 // loop_exit
      _
    %3424 = vsyncpa [#allocation5], 1
    %s3425 = scalar_lea.sflag [#allocation5], 1
    %3426 = vsyncpa %s3425, 1
    %3427 = vsyncpa [#allocation8], 1
    %s3428 = scalar_lea.sflag [#allocation8], 1
    %3429 = vsyncpa %s3428, 1
    %3430 = vsyncpa [#allocation11], 1
    %s3431 = scalar_lea.sflag [#allocation11], 1
    %3432 = vsyncpa %s3431, 1
    %3433 = vsyncpa [#allocation6], 1
    %s3434 = scalar_lea.sflag [#allocation6], 1
    %3435 = vsyncpa %s3434, 1

</llo_original>
